<compile_context>
chip_gen: v6e
topology: v6e:2x2x1
jax: 0.10.0
libtpu: 0.0.40
codegen_flags: <defaults>
</compile_context>

<pallas_src>
import functools

import jax
import jax.numpy as jnp
from jax import lax
from jax.experimental import pallas as pl
from jax.experimental.pallas import tpu as pltpu


def _pad_hw1(x):
    """Zero-pad a (H, W, C) value by 1 on H and W, entirely in registers/VMEM."""
    H, W, C = x.shape
    zr = jnp.zeros((1, W, C), x.dtype)
    x = jnp.concatenate([zr, x, zr], axis=0)        # (H+2, W, C)
    zc = jnp.zeros((H + 2, 1, C), x.dtype)
    return jnp.concatenate([zc, x, zc], axis=1)     # (H+2, W+2, C)


def _im2col_3x3(xp):
    """(H+2, W+2, C) padded value -> (H*W, 9*C) patches, tap order (kh, kw, ci)."""
    Hp, Wp, C = xp.shape
    H, W = Hp - 2, Wp - 2
    taps = [xp[kh:kh + H, kw:kw + W, :] for kh in range(3) for kw in range(3)]
    patches = jnp.concatenate(taps, axis=-1)        # (H, W, 9*C)
    return patches.reshape(H * W, 9 * C)            # last (lane) dim preserved


def basic_block_kernel(x_ref, w1_ref, w2_ref, s1_ref, b1_ref, s2_ref, b2_ref,
                       out_ref, *, mxu_dtype):
    # x_ref   : (1, H, W, C)   unpadded input for this batch element (mxu_dtype)
    # w*_ref  : (9*C, C)       conv weights, im2col layout (kh, kw, ci) x co
    # s*/b*   : (1, C)         folded inference-mode BN scale / bias (f32)
    # out_ref : (1, H, W, C)   f32 output
    _, H, W, C = out_ref.shape
    x = x_ref[0]                                    # (H, W, C)

    # ---- conv1: single im2col matmul on the MXU, K = 9*C ----
    p1 = _im2col_3x3(_pad_hw1(x))                   # (H*W, 9C)
    a1 = jnp.dot(p1, w1_ref[...], preferred_element_type=jnp.float32)

    # ---- bn1 + relu (f32 elementwise) ----
    y1 = jnp.maximum(a1 * s1_ref[...] + b1_ref[...], 0.0)

    # ---- conv2: same structure, staged purely in registers/VMEM ----
    p2 = _im2col_3x3(_pad_hw1(y1.reshape(H, W, C).astype(mxu_dtype)))
    a2 = jnp.dot(p2, w2_ref[...], preferred_element_type=jnp.float32)

    # ---- bn2 + residual add + relu ----
    identity = x.reshape(H * W, C).astype(jnp.float32)
    out = jnp.maximum(a2 * s2_ref[...] + b2_ref[...] + identity, 0.0)
    out_ref[...] = out.reshape(1, H, W, C).astype(out_ref.dtype)


def basic_block_forward_nhwc(x_nhwc, params, *, mxu_dtype=jnp.float32):
    """Core NHWC entry point (no layout transposes). Returns f32 NHWC."""
    B, H, W, C = x_nhwc.shape

    # HWIO (3,3,Cin,Cout) -> (9*Cin, Cout); row order (kh, kw, ci) matches im2col.
    w1 = params["w1"].reshape(9 * C, C).astype(mxu_dtype)
    w2 = params["w2"].reshape(9 * C, C).astype(mxu_dtype)

    eps = 1e-5
    s1 = (params["bn1_gamma"] / jnp.sqrt(params["bn1_var"] + eps)).reshape(1, C)
    b1 = (params["bn1_beta"] - params["bn1_mean"] * s1[0]).reshape(1, C)
    s2 = (params["bn2_gamma"] / jnp.sqrt(params["bn2_var"] + eps)).reshape(1, C)
    b2 = (params["bn2_beta"] - params["bn2_mean"] * s2[0]).reshape(1, C)

    x_in = x_nhwc.astype(mxu_dtype)

    kernel = functools.partial(basic_block_kernel, mxu_dtype=mxu_dtype)
    return pl.pallas_call(
        kernel,
        out_shape=jax.ShapeDtypeStruct((B, H, W, C), jnp.float32),
        grid_spec=pltpu.PrefetchScalarGridSpec(
            num_scalar_prefetch=0,
            grid=(B,),
            in_specs=[
                pl.BlockSpec((1, H, W, C), lambda b: (b, 0, 0, 0)),
                pl.BlockSpec((9 * C, C), lambda b: (0, 0)),
                pl.BlockSpec((9 * C, C), lambda b: (0, 0)),
                pl.BlockSpec((1, C), lambda b: (0, 0)),
                pl.BlockSpec((1, C), lambda b: (0, 0)),
                pl.BlockSpec((1, C), lambda b: (0, 0)),
                pl.BlockSpec((1, C), lambda b: (0, 0)),
            ],
            out_specs=pl.BlockSpec((1, H, W, C), lambda b: (b, 0, 0, 0)),
        ),
        compiler_params=pltpu.CompilerParams(
            dimension_semantics=("parallel",),      # B=2 -> both v7x TCs busy
            vmem_limit_bytes=48 * 1024 * 1024,      # explicit budget (v7x: 64 MiB phys)
        ),
    )(x_in, w1, w2, s1, b1, s2, b2)


def basic_block_forward(x_nchw, params, *, mxu_dtype=jnp.float32):
    """NCHW adapter matching the PyTorch spec. In an NHWC end-to-end model call
    basic_block_forward_nhwc directly and these two HBM-bound transposes vanish."""
    x = jnp.transpose(x_nchw, (0, 2, 3, 1))
    out = basic_block_forward_nhwc(x, params, mxu_dtype=mxu_dtype)
    return jnp.transpose(out, (0, 3, 1, 2))


def reference_forward(x_nchw, params):
    """Pure-JAX reference (inference-mode BN), for correctness check."""
    x = jnp.transpose(x_nchw, (0, 2, 3, 1))  # NHWC
    eps = 1e-5

    def conv(inp, w):
        return lax.conv_general_dilated(
            inp, w, window_strides=(1, 1), padding="SAME",
            dimension_numbers=("NHWC", "HWIO", "NHWC"))

    def bn(inp, g, b, m, v):
        return (inp - m) / jnp.sqrt(v + eps) * g + b

    y = conv(x, params["w1"])
    y = bn(y, params["bn1_gamma"], params["bn1_beta"],
           params["bn1_mean"], params["bn1_var"])
    y = jnp.maximum(y, 0.0)
    y = conv(y, params["w2"])
    y = bn(y, params["bn2_gamma"], params["bn2_beta"],
           params["bn2_mean"], params["bn2_var"])
    y = jnp.maximum(y + x, 0.0)
    return jnp.transpose(y, (0, 3, 1, 2))


def init_params(key, channels):
    ks = jax.random.split(key, 8)
    C = channels
    return {
        "w1": jax.random.normal(ks[0], (3, 3, C, C), jnp.float32) * 0.1,
        "w2": jax.random.normal(ks[1], (3, 3, C, C), jnp.float32) * 0.1,
        "bn1_gamma": 1.0 + 0.1 * jax.random.normal(ks[2], (C,), jnp.float32),
        "bn1_beta": 0.1 * jax.random.normal(ks[3], (C,), jnp.float32),
        "bn1_mean": 0.05 * jax.random.normal(ks[4], (C,), jnp.float32),
        "bn1_var": 1.0 + 0.1 * jax.random.uniform(ks[5], (C,), jnp.float32),
        "bn2_gamma": 1.0 + 0.1 * jax.random.normal(ks[6], (C,), jnp.float32),
        "bn2_beta": 0.1 * jax.random.normal(ks[7], (C,), jnp.float32),
        "bn2_mean": jnp.zeros((C,), jnp.float32),
        "bn2_var": jnp.ones((C,), jnp.float32),
    }


if __name__ == "__main__":
    key = jax.random.PRNGKey(0)
    k_x, k_p = jax.random.split(key)

    B, C, H, W = 2, 4, 16, 16          # in_channels == out_channels, stride=1, dilation=1
    x = jax.random.normal(k_x, (B, C, H, W), jnp.float32)
    params = init_params(k_p, C)

    # f32 MXU path: exact-parity check against the pure-JAX reference.
    out = jax.block_until_ready(basic_block_forward(x, params))
    ref = jax.block_until_ready(reference_forward(x, params))
    assert out.shape == (B, C, H, W)
    assert jnp.allclose(out, ref, atol=1e-4, rtol=1e-4), \
        f"f32 max abs diff {jnp.max(jnp.abs(out - ref))}"

    # bf16 MXU path (v6e/v7x recommendation: halves DMA/VMEM bytes, doubles MXU
    # throughput; f32 accumulate + f32 BN/ReLU). Checked at bf16 tolerance.
    out_bf16 = jax.block_until_ready(
        basic_block_forward(x, params, mxu_dtype=jnp.bfloat16))
    assert jnp.allclose(out_bf16, ref, atol=1e-1, rtol=1e-1), \
        f"bf16 max abs diff {jnp.max(jnp.abs(out_bf16 - ref))}"

    print("KERNEL_OK")
</pallas_src>

<mosaic_0001>
module attributes {stable_mosaic.version = 11 : i64} {
  func.func @basic_block_kernel(%arg0: i32, %arg1: memref<1x16x16x4xf32, #tpu.memory_space<vmem>>, %arg2: memref<36x4xf32, #tpu.memory_space<vmem>>, %arg3: memref<36x4xf32, #tpu.memory_space<vmem>>, %arg4: memref<1x4xf32, #tpu.memory_space<vmem>>, %arg5: memref<1x4xf32, #tpu.memory_space<vmem>>, %arg6: memref<1x4xf32, #tpu.memory_space<vmem>>, %arg7: memref<1x4xf32, #tpu.memory_space<vmem>>, %arg8: memref<1x16x16x4xf32, #tpu.memory_space<vmem>>) attributes {dimension_semantics = [#tpu.dimension_semantics<parallel>], iteration_bounds = array<i64: 2>, scalar_prefetch = 0 : i64, scratch_operands = 0 : i64, tpu.core_type = #tpu.core_type<tc>, window_params = [{transform_indices = @transform_0, window_bounds = array<i64: 1, 16, 16, 4>}, {pipeline_mode = #tpu.pipeline_mode<synchronous>, transform_indices = @transform_1, window_bounds = array<i64: 36, 4>}, {pipeline_mode = #tpu.pipeline_mode<synchronous>, transform_indices = @transform_2, window_bounds = array<i64: 36, 4>}, {pipeline_mode = #tpu.pipeline_mode<synchronous>, transform_indices = @transform_3, window_bounds = array<i64: 1, 4>}, {pipeline_mode = #tpu.pipeline_mode<synchronous>, transform_indices = @transform_4, window_bounds = array<i64: 1, 4>}, {pipeline_mode = #tpu.pipeline_mode<synchronous>, transform_indices = @transform_5, window_bounds = array<i64: 1, 4>}, {pipeline_mode = #tpu.pipeline_mode<synchronous>, transform_indices = @transform_6, window_bounds = array<i64: 1, 4>}, {transform_indices = @transform_7, window_bounds = array<i64: 1, 16, 16, 4>}]} {
    %c0 = arith.constant 0 : index
    %c0_0 = arith.constant 0 : index
    %c0_1 = arith.constant 0 : index
    %c0_2 = arith.constant 0 : index
    %0 = vector.load %arg1[%c0, %c0_0, %c0_1, %c0_2] : memref<1x16x16x4xf32, #tpu.memory_space<vmem>>, vector<1x16x16x4xf32>
    %1 = vector.shape_cast %0 : vector<1x16x16x4xf32> to vector<16x16x4xf32>
    %cst = arith.constant 0.000000e+00 : f32
    %2 = vector.broadcast %cst : f32 to vector<1x16x4xf32>
    %3 = tpu.concatenate %2, %1, %2 in 0 : vector<1x16x4xf32>, vector<16x16x4xf32>, vector<1x16x4xf32> -> vector<18x16x4xf32>
    %cst_3 = arith.constant 0.000000e+00 : f32
    %4 = vector.broadcast %cst_3 : f32 to vector<18x1x4xf32>
    %5 = tpu.concatenate %4, %3, %4 in 1 : vector<18x1x4xf32>, vector<18x16x4xf32>, vector<18x1x4xf32> -> vector<18x18x4xf32>
    %6 = vector.extract_strided_slice %5 {offsets = [0, 0, 0], sizes = [16, 16, 4], strides = [1, 1, 1]} : vector<18x18x4xf32> to vector<16x16x4xf32>
    %7 = vector.extract_strided_slice %5 {offsets = [0, 1, 0], sizes = [16, 16, 4], strides = [1, 1, 1]} : vector<18x18x4xf32> to vector<16x16x4xf32>
    %8 = vector.extract_strided_slice %5 {offsets = [0, 2, 0], sizes = [16, 16, 4], strides = [1, 1, 1]} : vector<18x18x4xf32> to vector<16x16x4xf32>
    %9 = vector.extract_strided_slice %5 {offsets = [1, 0, 0], sizes = [16, 16, 4], strides = [1, 1, 1]} : vector<18x18x4xf32> to vector<16x16x4xf32>
    %10 = vector.extract_strided_slice %5 {offsets = [1, 1, 0], sizes = [16, 16, 4], strides = [1, 1, 1]} : vector<18x18x4xf32> to vector<16x16x4xf32>
    %11 = vector.extract_strided_slice %5 {offsets = [1, 2, 0], sizes = [16, 16, 4], strides = [1, 1, 1]} : vector<18x18x4xf32> to vector<16x16x4xf32>
    %12 = vector.extract_strided_slice %5 {offsets = [2, 0, 0], sizes = [16, 16, 4], strides = [1, 1, 1]} : vector<18x18x4xf32> to vector<16x16x4xf32>
    %13 = vector.extract_strided_slice %5 {offsets = [2, 1, 0], sizes = [16, 16, 4], strides = [1, 1, 1]} : vector<18x18x4xf32> to vector<16x16x4xf32>
    %14 = vector.extract_strided_slice %5 {offsets = [2, 2, 0], sizes = [16, 16, 4], strides = [1, 1, 1]} : vector<18x18x4xf32> to vector<16x16x4xf32>
    %15 = tpu.concatenate %6, %7, %8, %9, %10, %11, %12, %13, %14 in 2 : vector<16x16x4xf32>, vector<16x16x4xf32>, vector<16x16x4xf32>, vector<16x16x4xf32>, vector<16x16x4xf32>, vector<16x16x4xf32>, vector<16x16x4xf32>, vector<16x16x4xf32>, vector<16x16x4xf32> -> vector<16x16x36xf32>
    %16 = vector.shape_cast %15 : vector<16x16x36xf32> to vector<256x36xf32>
    %c0_4 = arith.constant 0 : index
    %c0_5 = arith.constant 0 : index
    %17 = vector.load %arg2[%c0_4, %c0_5] : memref<36x4xf32, #tpu.memory_space<vmem>>, vector<36x4xf32>
    %cst_6 = arith.constant dense<0.000000e+00> : vector<256x4xf32>
    %18 = tpu.matmul %16, %17, %cst_6 {dimension_numbers = #tpu.dot_dimension_numbers<[1], [0], [0], [1], [0, 0, 1, 1], [], []>} : vector<256x36xf32>, vector<36x4xf32>, vector<256x4xf32> -> vector<256x4xf32>
    %c0_7 = arith.constant 0 : index
    %c0_8 = arith.constant 0 : index
    %19 = vector.load %arg4[%c0_7, %c0_8] : memref<1x4xf32, #tpu.memory_space<vmem>>, vector<1x4xf32>
    %20 = vector.broadcast %19 : vector<1x4xf32> to vector<256x4xf32>
    %21 = arith.mulf %18, %20 : vector<256x4xf32>
    %c0_9 = arith.constant 0 : index
    %c0_10 = arith.constant 0 : index
    %22 = vector.load %arg5[%c0_9, %c0_10] : memref<1x4xf32, #tpu.memory_space<vmem>>, vector<1x4xf32>
    %23 = vector.broadcast %22 : vector<1x4xf32> to vector<256x4xf32>
    %24 = arith.addf %21, %23 : vector<256x4xf32>
    %cst_11 = arith.constant 0.000000e+00 : f32
    %25 = vector.broadcast %cst_11 : f32 to vector<256x4xf32>
    %26 = arith.maximumf %24, %25 : vector<256x4xf32>
    %27 = vector.shape_cast %26 : vector<256x4xf32> to vector<16x16x4xf32>
    %cst_12 = arith.constant 0.000000e+00 : f32
    %28 = vector.broadcast %cst_12 : f32 to vector<1x16x4xf32>
    %29 = tpu.concatenate %28, %27, %28 in 0 : vector<1x16x4xf32>, vector<16x16x4xf32>, vector<1x16x4xf32> -> vector<18x16x4xf32>
    %cst_13 = arith.constant 0.000000e+00 : f32
    %30 = vector.broadcast %cst_13 : f32 to vector<18x1x4xf32>
    %31 = tpu.concatenate %30, %29, %30 in 1 : vector<18x1x4xf32>, vector<18x16x4xf32>, vector<18x1x4xf32> -> vector<18x18x4xf32>
    %32 = vector.extract_strided_slice %31 {offsets = [0, 0, 0], sizes = [16, 16, 4], strides = [1, 1, 1]} : vector<18x18x4xf32> to vector<16x16x4xf32>
    %33 = vector.extract_strided_slice %31 {offsets = [0, 1, 0], sizes = [16, 16, 4], strides = [1, 1, 1]} : vector<18x18x4xf32> to vector<16x16x4xf32>
    %34 = vector.extract_strided_slice %31 {offsets = [0, 2, 0], sizes = [16, 16, 4], strides = [1, 1, 1]} : vector<18x18x4xf32> to vector<16x16x4xf32>
    %35 = vector.extract_strided_slice %31 {offsets = [1, 0, 0], sizes = [16, 16, 4], strides = [1, 1, 1]} : vector<18x18x4xf32> to vector<16x16x4xf32>
    %36 = vector.extract_strided_slice %31 {offsets = [1, 1, 0], sizes = [16, 16, 4], strides = [1, 1, 1]} : vector<18x18x4xf32> to vector<16x16x4xf32>
    %37 = vector.extract_strided_slice %31 {offsets = [1, 2, 0], sizes = [16, 16, 4], strides = [1, 1, 1]} : vector<18x18x4xf32> to vector<16x16x4xf32>
    %38 = vector.extract_strided_slice %31 {offsets = [2, 0, 0], sizes = [16, 16, 4], strides = [1, 1, 1]} : vector<18x18x4xf32> to vector<16x16x4xf32>
    %39 = vector.extract_strided_slice %31 {offsets = [2, 1, 0], sizes = [16, 16, 4], strides = [1, 1, 1]} : vector<18x18x4xf32> to vector<16x16x4xf32>
    %40 = vector.extract_strided_slice %31 {offsets = [2, 2, 0], sizes = [16, 16, 4], strides = [1, 1, 1]} : vector<18x18x4xf32> to vector<16x16x4xf32>
    %41 = tpu.concatenate %32, %33, %34, %35, %36, %37, %38, %39, %40 in 2 : vector<16x16x4xf32>, vector<16x16x4xf32>, vector<16x16x4xf32>, vector<16x16x4xf32>, vector<16x16x4xf32>, vector<16x16x4xf32>, vector<16x16x4xf32>, vector<16x16x4xf32>, vector<16x16x4xf32> -> vector<16x16x36xf32>
    %42 = vector.shape_cast %41 : vector<16x16x36xf32> to vector<256x36xf32>
    %c0_14 = arith.constant 0 : index
    %c0_15 = arith.constant 0 : index
    %43 = vector.load %arg3[%c0_14, %c0_15] : memref<36x4xf32, #tpu.memory_space<vmem>>, vector<36x4xf32>
    %cst_16 = arith.constant dense<0.000000e+00> : vector<256x4xf32>
    %44 = tpu.matmul %42, %43, %cst_16 {dimension_numbers = #tpu.dot_dimension_numbers<[1], [0], [0], [1], [0, 0, 1, 1], [], []>} : vector<256x36xf32>, vector<36x4xf32>, vector<256x4xf32> -> vector<256x4xf32>
    %45 = vector.shape_cast %1 : vector<16x16x4xf32> to vector<256x4xf32>
    %c0_17 = arith.constant 0 : index
    %c0_18 = arith.constant 0 : index
    %46 = vector.load %arg6[%c0_17, %c0_18] : memref<1x4xf32, #tpu.memory_space<vmem>>, vector<1x4xf32>
    %47 = vector.broadcast %46 : vector<1x4xf32> to vector<256x4xf32>
    %48 = arith.mulf %44, %47 : vector<256x4xf32>
    %c0_19 = arith.constant 0 : index
    %c0_20 = arith.constant 0 : index
    %49 = vector.load %arg7[%c0_19, %c0_20] : memref<1x4xf32, #tpu.memory_space<vmem>>, vector<1x4xf32>
    %50 = vector.broadcast %49 : vector<1x4xf32> to vector<256x4xf32>
    %51 = arith.addf %48, %50 : vector<256x4xf32>
    %52 = arith.addf %51, %45 : vector<256x4xf32>
    %cst_21 = arith.constant 0.000000e+00 : f32
    %53 = vector.broadcast %cst_21 : f32 to vector<256x4xf32>
    %54 = arith.maximumf %52, %53 : vector<256x4xf32>
    %55 = vector.shape_cast %54 : vector<256x4xf32> to vector<1x16x16x4xf32>
    %c0_22 = arith.constant 0 : index
    %c0_23 = arith.constant 0 : index
    %c0_24 = arith.constant 0 : index
    %c0_25 = arith.constant 0 : index
    %56 = vector.load %arg8[%c0_22, %c0_23, %c0_24, %c0_25] : memref<1x16x16x4xf32, #tpu.memory_space<vmem>>, vector<1x16x16x4xf32>
    tpu.vector_store %arg8[%c0_22, %c0_23, %c0_24, %c0_25], %55 {strides = array<i32>} : memref<1x16x16x4xf32, #tpu.memory_space<vmem>>, vector<1x16x16x4xf32>,
    return
  }
  func.func @transform_0(%arg0: i32) -> (i32, i32, i32, i32) {
    %c0_i32 = arith.constant 0 : i32
    %c0_i32_0 = arith.constant 0 : i32
    %c0_i32_1 = arith.constant 0 : i32
    %c0_i32_2 = arith.constant 0 : i32
    return %arg0, %c0_i32, %c0_i32_0, %c0_i32_1 : i32, i32, i32, i32
  }
  func.func @transform_1(%arg0: i32) -> (i32, i32) {
    %c0_i32 = arith.constant 0 : i32
    %c0_i32_0 = arith.constant 0 : i32
    %c0_i32_1 = arith.constant 0 : i32
    return %c0_i32, %c0_i32_0 : i32, i32
  }
  func.func @transform_2(%arg0: i32) -> (i32, i32) {
    %c0_i32 = arith.constant 0 : i32
    %c0_i32_0 = arith.constant 0 : i32
    %c0_i32_1 = arith.constant 0 : i32
    return %c0_i32, %c0_i32_0 : i32, i32
  }
  func.func @transform_3(%arg0: i32) -> (i32, i32) {
    %c0_i32 = arith.constant 0 : i32
    %c0_i32_0 = arith.constant 0 : i32
    %c0_i32_1 = arith.constant 0 : i32
    return %c0_i32, %c0_i32_0 : i32, i32
  }
  func.func @transform_4(%arg0: i32) -> (i32, i32) {
    %c0_i32 = arith.constant 0 : i32
    %c0_i32_0 = arith.constant 0 : i32
    %c0_i32_1 = arith.constant 0 : i32
    return %c0_i32, %c0_i32_0 : i32, i32
  }
  func.func @transform_5(%arg0: i32) -> (i32, i32) {
    %c0_i32 = arith.constant 0 : i32
    %c0_i32_0 = arith.constant 0 : i32
    %c0_i32_1 = arith.constant 0 : i32
    return %c0_i32, %c0_i32_0 : i32, i32
  }
  func.func @transform_6(%arg0: i32) -> (i32, i32) {
    %c0_i32 = arith.constant 0 : i32
    %c0_i32_0 = arith.constant 0 : i32
    %c0_i32_1 = arith.constant 0 : i32
    return %c0_i32, %c0_i32_0 : i32, i32
  }
  func.func @transform_7(%arg0: i32) -> (i32, i32, i32, i32) {
    %c0_i32 = arith.constant 0 : i32
    %c0_i32_0 = arith.constant 0 : i32
    %c0_i32_1 = arith.constant 0 : i32
    %c0_i32_2 = arith.constant 0 : i32
    return %arg0, %c0_i32, %c0_i32_0, %c0_i32_1 : i32, i32, i32, i32
  }
}

</mosaic_0001>

<llo_original>
// kernel: tpu_custom_call.1
$region0: #{tpu_custom_call.1}
  #allocation0 [shape = 'u32[]', space=smem, size = 0x4, offset = 0x4, fixed_abs, tag = 'smem constant byte address 0x4 - core index']
  #allocation1 [shape = 'u32[144,128]{1,0:T(1,128)}', space=vmem, size = 0x12000, scoped, tag = 'internal scratch']
  %s0 = inlined_call_operand.vmem [shape: f32[2,16,16,4], index: 0, kind: input, shape index: {}]
  %s1 = inlined_call_operand.vmem [shape: f32[36,4], index: 1, kind: input, shape index: {}]
  %s2 = inlined_call_operand.vmem [shape: f32[36,4], index: 2, kind: input, shape index: {}]
  %s3 = inlined_call_operand.vmem [shape: f32[1,4], index: 3, kind: input, shape index: {}]
  %s4 = inlined_call_operand.vmem [shape: f32[1,4], index: 4, kind: input, shape index: {}]
  %s5 = inlined_call_operand.vmem [shape: f32[1,4], index: 5, kind: input, shape index: {}]
  %s6 = inlined_call_operand.vmem [shape: f32[1,4], index: 6, kind: input, shape index: {}]
  %s7 = inlined_call_operand.vmem [shape: f32[2,16,16,4], index: 7, kind: output, shape index: {}]
  %s8 = sld [smem:[#allocation0]]
  $region61: #{tpu_custom_call.1} parent=0
    _
  %s10 = ssub.s32 1, %s8
  %s11 = scalar_select 0, %s10, %s8
  loop: start=0, step=1, limit=4
  $region2: #{tpu_custom_call.1} parent=0 // loop_pre_header
    _
  $region3: #{tpu_custom_call.1} parent=0 // loop_header
    %s13 = sphi 0, %s17
    %p14 = scmp.ge.s32.totalorder %s13, 4
    %s23 = sphi 0, %s25
    %s26 = sphi 0, %s23
    %s27 = sphi 0, %s26
    %s43 = sphi 0, %s27
    %s47 = sphi 0, %s47
    %s49 = sphi 0, %s47
    %s50 = sphi 0, %s49
    %s64 = sphi 0, %s50
    %s68 = sphi 0, %s68
    %s70 = sphi 0, %s68
    %s71 = sphi 0, %s70
    %s85 = sphi 0, %s71
    %s89 = sphi 0, %s89
    %s91 = sphi 0, %s89
    %s92 = sphi 0, %s91
    %s106 = sphi 0, %s92
    %s110 = sphi 0, %s110
    %s112 = sphi 0, %s110
    %s113 = sphi 0, %s112
    %s127 = sphi 0, %s113
    %s131 = sphi 0, %s131
    %s133 = sphi 0, %s131
    %s134 = sphi 0, %s133
    %s148 = sphi 0, %s134
    %s152 = sphi 0, %s152
    %s154 = sphi 0, %s152
    %s155 = sphi 0, %s154
    %s169 = sphi 0, %s155
    %s175 = sphi 0, %s177
    %s178 = sphi 0, %s175
    %s179 = sphi 0, %s178
    %s195 = sphi 0, %s179
  $region4: #{tpu_custom_call.1} parent=0 // loop_header_branch
    %16 = sbr.rel (%p14) target = $region8
  $region5: #{tpu_custom_call.1} parent=0 // loop_body
    %s18 = ssub.s32 %s13, 1
    %s19 = ssub.s32 %s13, 2
    %s20 = sadd.s32 %s13, 1
    %s21 = ssub.s32 %s13, %s20
    %p22 = scmp.eq.s32.totalorder %s21, 0
    %s24 = sadd.s32 %s23, 1
    %s25 = scalar_select %p22, %s23, %s24
    %p28 = pneg %p22
    %p29 = scmp.eq.s32.totalorder %s13, 1
    %p30 = por %p28, %p29
    %p31 = scmp.ne.s32.totalorder %s23, %s26
    %p32 = scmp.eq.s32.totalorder %s13, 0
    %p33 = por %p31, %p32
    %p34 = scmp.ne.s32.totalorder %s23, %s26
    %p35 = scmp.eq.s32.totalorder %s18, 1
    %p36 = por %p34, %p35
    %p37 = scmp.ne.s32.totalorder %s26, %s27
    %p38 = scmp.eq.s32.totalorder %s18, 0
    %p39 = por %p37, %p38
    %p40 = scmp.ne.s32.totalorder %s26, %s27
    %p41 = scmp.eq.s32.totalorder %s19, 1
    %p42 = por %p40, %p41
    %p44 = scmp.ne.s32.totalorder %s27, %s43
    %p45 = scmp.eq.s32.totalorder %s19, 0
    %p46 = por %p44, %p45
    %s48 = sadd.s32 %s47, 1
    %p51 = scmp.eq.s32.totalorder %s13, 1
    %p52 = scmp.ne.s32.totalorder %s47, %s49
    %p53 = scmp.eq.s32.totalorder %s13, 0
    %p54 = por %p52, %p53
    %p55 = scmp.ne.s32.totalorder %s47, %s49
    %p56 = scmp.eq.s32.totalorder %s18, 1
    %p57 = por %p55, %p56
    %p58 = scmp.ne.s32.totalorder %s49, %s50
    %p59 = scmp.eq.s32.totalorder %s18, 0
    %p60 = por %p58, %p59
    %p61 = scmp.ne.s32.totalorder %s49, %s50
    %p62 = scmp.eq.s32.totalorder %s19, 1
    %p63 = por %p61, %p62
    %p65 = scmp.ne.s32.totalorder %s50, %s64
    %p66 = scmp.eq.s32.totalorder %s19, 0
    %p67 = por %p65, %p66
    %s69 = sadd.s32 %s68, 1
    %p72 = scmp.eq.s32.totalorder %s13, 1
    %p73 = scmp.ne.s32.totalorder %s68, %s70
    %p74 = scmp.eq.s32.totalorder %s13, 0
    %p75 = por %p73, %p74
    %p76 = scmp.ne.s32.totalorder %s68, %s70
    %p77 = scmp.eq.s32.totalorder %s18, 1
    %p78 = por %p76, %p77
    %p79 = scmp.ne.s32.totalorder %s70, %s71
    %p80 = scmp.eq.s32.totalorder %s18, 0
    %p81 = por %p79, %p80
    %p82 = scmp.ne.s32.totalorder %s70, %s71
    %p83 = scmp.eq.s32.totalorder %s19, 1
    %p84 = por %p82, %p83
    %p86 = scmp.ne.s32.totalorder %s71, %s85
    %p87 = scmp.eq.s32.totalorder %s19, 0
    %p88 = por %p86, %p87
    %s90 = sadd.s32 %s89, 1
    %p93 = scmp.eq.s32.totalorder %s13, 1
    %p94 = scmp.ne.s32.totalorder %s89, %s91
    %p95 = scmp.eq.s32.totalorder %s13, 0
    %p96 = por %p94, %p95
    %p97 = scmp.ne.s32.totalorder %s89, %s91
    %p98 = scmp.eq.s32.totalorder %s18, 1
    %p99 = por %p97, %p98
    %p100 = scmp.ne.s32.totalorder %s91, %s92
    %p101 = scmp.eq.s32.totalorder %s18, 0
    %p102 = por %p100, %p101
    %p103 = scmp.ne.s32.totalorder %s91, %s92
    %p104 = scmp.eq.s32.totalorder %s19, 1
    %p105 = por %p103, %p104
    %p107 = scmp.ne.s32.totalorder %s92, %s106
    %p108 = scmp.eq.s32.totalorder %s19, 0
    %p109 = por %p107, %p108
    %s111 = sadd.s32 %s110, 1
    %p114 = scmp.eq.s32.totalorder %s13, 1
    %p115 = scmp.ne.s32.totalorder %s110, %s112
    %p116 = scmp.eq.s32.totalorder %s13, 0
    %p117 = por %p115, %p116
    %p118 = scmp.ne.s32.totalorder %s110, %s112
    %p119 = scmp.eq.s32.totalorder %s18, 1
    %p120 = por %p118, %p119
    %p121 = scmp.ne.s32.totalorder %s112, %s113
    %p122 = scmp.eq.s32.totalorder %s18, 0
    %p123 = por %p121, %p122
    %p124 = scmp.ne.s32.totalorder %s112, %s113
    %p125 = scmp.eq.s32.totalorder %s19, 1
    %p126 = por %p124, %p125
    %p128 = scmp.ne.s32.totalorder %s113, %s127
    %p129 = scmp.eq.s32.totalorder %s19, 0
    %p130 = por %p128, %p129
    %s132 = sadd.s32 %s131, 1
    %p135 = scmp.eq.s32.totalorder %s13, 1
    %p136 = scmp.ne.s32.totalorder %s131, %s133
    %p137 = scmp.eq.s32.totalorder %s13, 0
    %p138 = por %p136, %p137
    %p139 = scmp.ne.s32.totalorder %s131, %s133
    %p140 = scmp.eq.s32.totalorder %s18, 1
    %p141 = por %p139, %p140
    %p142 = scmp.ne.s32.totalorder %s133, %s134
    %p143 = scmp.eq.s32.totalorder %s18, 0
    %p144 = por %p142, %p143
    %p145 = scmp.ne.s32.totalorder %s133, %s134
    %p146 = scmp.eq.s32.totalorder %s19, 1
    %p147 = por %p145, %p146
    %p149 = scmp.ne.s32.totalorder %s134, %s148
    %p150 = scmp.eq.s32.totalorder %s19, 0
    %p151 = por %p149, %p150
    %s153 = sadd.s32 %s152, 1
    %p156 = scmp.eq.s32.totalorder %s13, 1
    %p157 = scmp.ne.s32.totalorder %s152, %s154
    %p158 = scmp.eq.s32.totalorder %s13, 0
    %p159 = por %p157, %p158
    %p160 = scmp.ne.s32.totalorder %s152, %s154
    %p161 = scmp.eq.s32.totalorder %s18, 1
    %p162 = por %p160, %p161
    %p163 = scmp.ne.s32.totalorder %s154, %s155
    %p164 = scmp.eq.s32.totalorder %s18, 0
    %p165 = por %p163, %p164
    %p166 = scmp.ne.s32.totalorder %s154, %s155
    %p167 = scmp.eq.s32.totalorder %s19, 1
    %p168 = por %p166, %p167
    %p170 = scmp.ne.s32.totalorder %s155, %s169
    %p171 = scmp.eq.s32.totalorder %s19, 0
    %p172 = por %p170, %p171
    %s173 = ssub.s32 %s13, %s20
    %p174 = scmp.eq.s32.totalorder %s173, 0
    %s176 = sadd.s32 %s175, 1
    %s177 = scalar_select %p174, %s175, %s176
    %p180 = pneg %p174
    %p181 = scmp.eq.s32.totalorder %s13, 1
    %p182 = por %p180, %p181
    %p183 = scmp.ne.s32.totalorder %s175, %s178
    %p184 = scmp.eq.s32.totalorder %s13, 0
    %p185 = por %p183, %p184
    %p186 = scmp.ne.s32.totalorder %s175, %s178
    %p187 = scmp.eq.s32.totalorder %s18, 1
    %p188 = por %p186, %p187
    %p189 = scmp.ne.s32.totalorder %s178, %s179
    %p190 = scmp.eq.s32.totalorder %s18, 0
    %p191 = por %p189, %p190
    %p192 = scmp.ne.s32.totalorder %s178, %s179
    %p193 = scmp.eq.s32.totalorder %s19, 1
    %p194 = por %p192, %p193
    %p196 = scmp.ne.s32.totalorder %s179, %s195
    %p197 = scmp.eq.s32.totalorder %s19, 0
    %p198 = por %p196, %p197
    %p199 = scmp.le.s32.totalorder 1, %s13
    %p200 = scmp.lt.s32.totalorder %s13, 3
    %p201 = pnand %p199, %p200
    %p202 = pneg %p201
    // Predicated region
    $region9: #{tpu_custom_call.1} parent=5 // pred_check
      _
    $region10: #{tpu_custom_call.1} parent=5 // pred_check_branch
      %204 = sbr.rel (%p201) target = $region12
    $region11: #{tpu_custom_call.1} parent=5 // pred_region
      %s205 = ssub.s32 %s13, 1
      // Predicated region
      $region13: #{tpu_custom_call.1} parent=11 // pred_check
        %p206 = pneg %p60
      $region14: #{tpu_custom_call.1} parent=11 // pred_check_branch
        %208 = sbr.rel (%p206) target = $region16
      $region15: #{tpu_custom_call.1} parent=11 // pred_region
        _
      $region16: #{tpu_custom_call.1} parent=11 // pred_fallthru
        _
      // Predicated region
      $region17: #{tpu_custom_call.1} parent=11 // pred_check
        %p209 = pneg %p81
      $region18: #{tpu_custom_call.1} parent=11 // pred_check_branch
        %211 = sbr.rel (%p209) target = $region20
      $region19: #{tpu_custom_call.1} parent=11 // pred_region
        _
      $region20: #{tpu_custom_call.1} parent=11 // pred_fallthru
        _
      // Predicated region
      $region21: #{tpu_custom_call.1} parent=11 // pred_check
        %p212 = pneg %p102
      $region22: #{tpu_custom_call.1} parent=11 // pred_check_branch
        %214 = sbr.rel (%p212) target = $region24
      $region23: #{tpu_custom_call.1} parent=11 // pred_region
        _
      $region24: #{tpu_custom_call.1} parent=11 // pred_fallthru
        _
      // Predicated region
      $region25: #{tpu_custom_call.1} parent=11 // pred_check
        %p215 = pneg %p123
      $region26: #{tpu_custom_call.1} parent=11 // pred_check_branch
        %217 = sbr.rel (%p215) target = $region28
      $region27: #{tpu_custom_call.1} parent=11 // pred_region
        _
      $region28: #{tpu_custom_call.1} parent=11 // pred_fallthru
        _
      // Predicated region
      $region29: #{tpu_custom_call.1} parent=11 // pred_check
        %p218 = pneg %p144
      $region30: #{tpu_custom_call.1} parent=11 // pred_check_branch
        %220 = sbr.rel (%p218) target = $region32
      $region31: #{tpu_custom_call.1} parent=11 // pred_region
        _
      $region32: #{tpu_custom_call.1} parent=11 // pred_fallthru
        _
      // Predicated region
      $region33: #{tpu_custom_call.1} parent=11 // pred_check
        %p221 = pneg %p165
      $region34: #{tpu_custom_call.1} parent=11 // pred_check_branch
        %223 = sbr.rel (%p221) target = $region36
      $region35: #{tpu_custom_call.1} parent=11 // pred_region
        _
      $region36: #{tpu_custom_call.1} parent=11 // pred_fallthru
        _
    $region12: #{tpu_custom_call.1} parent=5 // pred_fallthru
      _
    %p224 = scmp.lt.s32.totalorder %s13, 2
    // Predicated region
    $region37: #{tpu_custom_call.1} parent=5 // pred_check
      %p225 = pneg %p224
    $region38: #{tpu_custom_call.1} parent=5 // pred_check_branch
      %227 = sbr.rel (%p225) target = $region40
    $region39: #{tpu_custom_call.1} parent=5 // pred_region
      // Predicated region
      $region41: #{tpu_custom_call.1} parent=39 // pred_check
        %p228 = pneg %p33
      $region42: #{tpu_custom_call.1} parent=39 // pred_check_branch
        %230 = sbr.rel (%p228) target = $region44
      $region43: #{tpu_custom_call.1} parent=39 // pred_region
        %p231 = scmp.lt.s32.totalorder %s13, 1
        %s232 = scalar_select %p231, %s13, 1
        %s233 = smul.addr %s232, 32
        %s234 = smul.addr %s233, 8
        %s235 = scalar_lea.vmem %s0, %s234
      $region44: #{tpu_custom_call.1} parent=39 // pred_fallthru
        _
    $region40: #{tpu_custom_call.1} parent=5 // pred_fallthru
      _
    %p236 = scmp.le.s32.totalorder 1, %s13
    %p237 = scmp.lt.s32.totalorder %s13, 3
    %p238 = pnand %p236, %p237
    %p239 = pneg %p238
    // Predicated region
    $region45: #{tpu_custom_call.1} parent=5 // pred_check
      _
    $region46: #{tpu_custom_call.1} parent=5 // pred_check_branch
      %241 = sbr.rel (%p238) target = $region48
    $region47: #{tpu_custom_call.1} parent=5 // pred_region
      %s242 = ssub.s32 %s13, 1
      %p243 = scmp.lt.s32.totalorder %s18, 1
      %s244 = scalar_select %p243, %s18, 1
      %s245 = smul.addr %s244, 32
      %s246 = smul.addr %s245, 8
      %s247 = scalar_lea.vmem %s0, %s246
      %p248 = pneg %p39
      %p249 = pneg %p36
      %p250 = pneg %p60
      %p251 = pneg %p57
      %p252 = pneg %p81
      %p253 = pneg %p78
      %p254 = pneg %p102
      %p255 = pneg %p99
      %p256 = pneg %p123
      %p257 = pneg %p120
      %p258 = pneg %p144
      %p259 = pneg %p141
      %p260 = pneg %p165
      %p261 = pneg %p162
      %p262 = pneg %p191
      %p263 = pneg %p188
      %p264 = scmp.lt.s32.totalorder %s18, 1
      %s265 = scalar_select %p264, %s18, 1
      %s266 = smul.addr %s265, 32
      %s267 = smul.addr %s266, 8
      %s268 = scalar_lea.vmem %s7, %s267
      %p269 = scmp.lt.s32.totalorder %s18, 1
      %s270 = scalar_select %p269, %s18, 1
      %s271 = smul.addr %s270, 32
      %s272 = smul.addr %s271, 8
      %s273 = scalar_lea.vmem %s0, %s272
      %p274 = scmp.lt.s32.totalorder %s18, 1
      %s275 = scalar_select %p274, %s18, 1
      %s276 = smul.addr %s275, 32
      %s277 = smul.addr %s276, 8
      %s278 = scalar_lea.vmem %s7, %s277
      %v279 = vld [vmem:[%s273] sm:$0xff]
      %v280 = vld [vmem:[%s273 + $0x8] sm:$0xff]
      %v281 = vld [vmem:[%s273 + $0x10] sm:$0xff]
      %v282 = vld [vmem:[%s273 + $0x18] sm:$0xff]
      %v283 = vld [vmem:[%s273 + $0x20] sm:$0xff]
      %v284 = vld [vmem:[%s273 + $0x28] sm:$0xff]
      %v285 = vld [vmem:[%s273 + $0x30] sm:$0xff]
      %v286 = vld [vmem:[%s273 + $0x38] sm:$0xff]
      %v287 = vld [vmem:[%s273 + $0x40] sm:$0xff]
      %v288 = vld [vmem:[%s273 + $0x48] sm:$0xff]
      %v289 = vld [vmem:[%s273 + $0x50] sm:$0xff]
      %v290 = vld [vmem:[%s273 + $0x58] sm:$0xff]
      %v291 = vld [vmem:[%s273 + $0x60] sm:$0xff]
      %v292 = vld [vmem:[%s273 + $0x68] sm:$0xff]
      %v293 = vld [vmem:[%s273 + $0x70] sm:$0xff]
      %v294 = vld [vmem:[%s273 + $0x78] sm:$0xff]
      %v295 = vld [vmem:[%s273 + $0x80] sm:$0xff]
      %v296 = vld [vmem:[%s273 + $0x88] sm:$0xff]
      %v297 = vld [vmem:[%s273 + $0x90] sm:$0xff]
      %v298 = vld [vmem:[%s273 + $0x98] sm:$0xff]
      %v299 = vld [vmem:[%s273 + $0xa0] sm:$0xff]
      %v300 = vld [vmem:[%s273 + $0xa8] sm:$0xff]
      %v301 = vld [vmem:[%s273 + $0xb0] sm:$0xff]
      %v302 = vld [vmem:[%s273 + $0xb8] sm:$0xff]
      %v303 = vld [vmem:[%s273 + $0xc0] sm:$0xff]
      %v304 = vld [vmem:[%s273 + $0xc8] sm:$0xff]
      %v305 = vld [vmem:[%s273 + $0xd0] sm:$0xff]
      %v306 = vld [vmem:[%s273 + $0xd8] sm:$0xff]
      %v307 = vld [vmem:[%s273 + $0xe0] sm:$0xff]
      %v308 = vld [vmem:[%s273 + $0xe8] sm:$0xff]
      %v309 = vld [vmem:[%s273 + $0xf0] sm:$0xff]
      %v310 = vld [vmem:[%s273 + $0xf8] sm:$0xff]
      %vm344 = vcmask 1040384
      %v345 = vrot.slane 0.0, 7
      %v346 = vsel %vm344, %v345, %v345
      %v347 = vrot.slane %v279, 7
      %v348 = vrot.slane %v280, 7
      %v349 = vsel %vm344, %v347, %v348
      %v350 = vrot.slane %v281, 7
      %v351 = vrot.slane %v282, 7
      %v352 = vsel %vm344, %v350, %v351
      %v353 = vrot.slane %v283, 7
      %v354 = vrot.slane %v284, 7
      %v355 = vsel %vm344, %v353, %v354
      %v356 = vrot.slane %v285, 7
      %v357 = vrot.slane %v286, 7
      %v358 = vsel %vm344, %v356, %v357
      %v359 = vrot.slane %v287, 7
      %v360 = vrot.slane %v288, 7
      %v361 = vsel %vm344, %v359, %v360
      %v362 = vrot.slane %v289, 7
      %v363 = vrot.slane %v290, 7
      %v364 = vsel %vm344, %v362, %v363
      %v365 = vrot.slane %v291, 7
      %v366 = vrot.slane %v292, 7
      %v367 = vsel %vm344, %v365, %v366
      %v368 = vrot.slane %v293, 7
      %v369 = vrot.slane %v294, 7
      %v370 = vsel %vm344, %v368, %v369
      %v371 = vrot.slane %v295, 7
      %v372 = vrot.slane %v296, 7
      %v373 = vsel %vm344, %v371, %v372
      %v374 = vrot.slane %v297, 7
      %v375 = vrot.slane %v298, 7
      %v376 = vsel %vm344, %v374, %v375
      %v377 = vrot.slane %v299, 7
      %v378 = vrot.slane %v300, 7
      %v379 = vsel %vm344, %v377, %v378
      %v380 = vrot.slane %v301, 7
      %v381 = vrot.slane %v302, 7
      %v382 = vsel %vm344, %v380, %v381
      %v383 = vrot.slane %v303, 7
      %v384 = vrot.slane %v304, 7
      %v385 = vsel %vm344, %v383, %v384
      %v386 = vrot.slane %v305, 7
      %v387 = vrot.slane %v306, 7
      %v388 = vsel %vm344, %v386, %v387
      %v389 = vrot.slane %v307, 7
      %v390 = vrot.slane %v308, 7
      %v391 = vsel %vm344, %v389, %v390
      %v392 = vrot.slane %v309, 7
      %v393 = vrot.slane %v310, 7
      %v394 = vsel %vm344, %v392, %v393
      %v444 = vsel %vm344, 0.0, %v345
      %v445 = vsel %vm344, 0.0, %v347
      %v446 = vsel %vm344, 0.0, %v350
      %v447 = vsel %vm344, 0.0, %v353
      %v448 = vsel %vm344, 0.0, %v356
      %v449 = vsel %vm344, 0.0, %v359
      %v450 = vsel %vm344, 0.0, %v362
      %v451 = vsel %vm344, 0.0, %v365
      %v452 = vsel %vm344, 0.0, %v368
      %v453 = vsel %vm344, 0.0, %v371
      %v454 = vsel %vm344, 0.0, %v374
      %v455 = vsel %vm344, 0.0, %v377
      %v456 = vsel %vm344, 0.0, %v380
      %v457 = vsel %vm344, 0.0, %v383
      %v458 = vsel %vm344, 0.0, %v386
      %v459 = vsel %vm344, 0.0, %v389
      %v460 = vsel %vm344, 0.0, %v392
      %v461 = vsel %vm344, %v345, 0.0
      %v462 = vsel %vm344, %v348, 0.0
      %v463 = vsel %vm344, %v351, 0.0
      %v464 = vsel %vm344, %v354, 0.0
      %v465 = vsel %vm344, %v357, 0.0
      %v466 = vsel %vm344, %v360, 0.0
      %v467 = vsel %vm344, %v363, 0.0
      %v468 = vsel %vm344, %v366, 0.0
      %v469 = vsel %vm344, %v369, 0.0
      %v470 = vsel %vm344, %v372, 0.0
      %v471 = vsel %vm344, %v375, 0.0
      %v472 = vsel %vm344, %v378, 0.0
      %v473 = vsel %vm344, %v381, 0.0
      %v474 = vsel %vm344, %v384, 0.0
      %v475 = vsel %vm344, %v387, 0.0
      %v476 = vsel %vm344, %v390, 0.0
      %v477 = vsel %vm344, %v393, 0.0
      %vm510 = vcmask 1046528
      %v511 = vrot.slane %v444, 1
      %v512 = vrot.slane %v346, 1
      %v513 = vsel %vm510, %v511, %v512
      %v514 = vrot.slane %v461, 1
      %v515 = vsel %vm510, %v512, %v514
      %v516 = vrot.slane %v445, 1
      %v517 = vrot.slane %v349, 1
      %v518 = vsel %vm510, %v516, %v517
      %v519 = vrot.slane %v462, 1
      %v520 = vsel %vm510, %v517, %v519
      %v521 = vrot.slane %v446, 1
      %v522 = vrot.slane %v352, 1
      %v523 = vsel %vm510, %v521, %v522
      %v524 = vrot.slane %v463, 1
      %v525 = vsel %vm510, %v522, %v524
      %v526 = vrot.slane %v447, 1
      %v527 = vrot.slane %v355, 1
      %v528 = vsel %vm510, %v526, %v527
      %v529 = vrot.slane %v464, 1
      %v530 = vsel %vm510, %v527, %v529
      %v531 = vrot.slane %v448, 1
      %v532 = vrot.slane %v358, 1
      %v533 = vsel %vm510, %v531, %v532
      %v534 = vrot.slane %v465, 1
      %v535 = vsel %vm510, %v532, %v534
      %v536 = vrot.slane %v449, 1
      %v537 = vrot.slane %v361, 1
      %v538 = vsel %vm510, %v536, %v537
      %v539 = vrot.slane %v466, 1
      %v540 = vsel %vm510, %v537, %v539
      %v541 = vrot.slane %v450, 1
      %v542 = vrot.slane %v364, 1
      %v543 = vsel %vm510, %v541, %v542
      %v544 = vrot.slane %v467, 1
      %v545 = vsel %vm510, %v542, %v544
      %v546 = vrot.slane %v451, 1
      %v547 = vrot.slane %v367, 1
      %v548 = vsel %vm510, %v546, %v547
      %v549 = vrot.slane %v468, 1
      %v550 = vsel %vm510, %v547, %v549
      %v551 = vrot.slane %v452, 1
      %v552 = vrot.slane %v370, 1
      %v553 = vsel %vm510, %v551, %v552
      %v554 = vrot.slane %v469, 1
      %v555 = vsel %vm510, %v552, %v554
      %v556 = vrot.slane %v453, 1
      %v557 = vrot.slane %v373, 1
      %v558 = vsel %vm510, %v556, %v557
      %v559 = vrot.slane %v470, 1
      %v560 = vsel %vm510, %v557, %v559
      %v561 = vrot.slane %v454, 1
      %v562 = vrot.slane %v376, 1
      %v563 = vsel %vm510, %v561, %v562
      %v564 = vrot.slane %v471, 1
      %v565 = vsel %vm510, %v562, %v564
      %v566 = vrot.slane %v455, 1
      %v567 = vrot.slane %v379, 1
      %v568 = vsel %vm510, %v566, %v567
      %v569 = vrot.slane %v472, 1
      %v570 = vsel %vm510, %v567, %v569
      %v571 = vrot.slane %v456, 1
      %v572 = vrot.slane %v382, 1
      %v573 = vsel %vm510, %v571, %v572
      %v574 = vrot.slane %v473, 1
      %v575 = vsel %vm510, %v572, %v574
      %v576 = vrot.slane %v457, 1
      %v577 = vrot.slane %v385, 1
      %v578 = vsel %vm510, %v576, %v577
      %v579 = vrot.slane %v474, 1
      %v580 = vsel %vm510, %v577, %v579
      %v581 = vrot.slane %v458, 1
      %v582 = vrot.slane %v388, 1
      %v583 = vsel %vm510, %v581, %v582
      %v584 = vrot.slane %v475, 1
      %v585 = vsel %vm510, %v582, %v584
      %v586 = vrot.slane %v459, 1
      %v587 = vrot.slane %v391, 1
      %v588 = vsel %vm510, %v586, %v587
      %v589 = vrot.slane %v476, 1
      %v590 = vsel %vm510, %v587, %v589
      %591 = vrot.lane.b32.xlu0 %v513, 4
      %v592 = vpop.permute.xlu0 %591
      %593 = vrot.lane.b32.xlu0 %v515, 4
      %v594 = vpop.permute.xlu0 %593
      %595 = vrot.lane.b32.xlu0 %v518, 4
      %v596 = vpop.permute.xlu0 %595
      %597 = vrot.lane.b32.xlu0 %v520, 4
      %v598 = vpop.permute.xlu0 %597
      %599 = vrot.lane.b32.xlu0 %v523, 4
      %v600 = vpop.permute.xlu0 %599
      %601 = vrot.lane.b32.xlu0 %v525, 4
      %v602 = vpop.permute.xlu0 %601
      %603 = vrot.lane.b32.xlu0 %v528, 4
      %v604 = vpop.permute.xlu0 %603
      %605 = vrot.lane.b32.xlu0 %v530, 4
      %v606 = vpop.permute.xlu0 %605
      %607 = vrot.lane.b32.xlu0 %v533, 4
      %v608 = vpop.permute.xlu0 %607
      %609 = vrot.lane.b32.xlu0 %v535, 4
      %v610 = vpop.permute.xlu0 %609
      %611 = vrot.lane.b32.xlu0 %v538, 4
      %v612 = vpop.permute.xlu0 %611
      %613 = vrot.lane.b32.xlu0 %v540, 4
      %v614 = vpop.permute.xlu0 %613
      %615 = vrot.lane.b32.xlu0 %v543, 4
      %v616 = vpop.permute.xlu0 %615
      %617 = vrot.lane.b32.xlu0 %v545, 4
      %v618 = vpop.permute.xlu0 %617
      %619 = vrot.lane.b32.xlu0 %v548, 4
      %v620 = vpop.permute.xlu0 %619
      %621 = vrot.lane.b32.xlu0 %v550, 4
      %v622 = vpop.permute.xlu0 %621
      %623 = vrot.lane.b32.xlu0 %v553, 4
      %v624 = vpop.permute.xlu0 %623
      %625 = vrot.lane.b32.xlu0 %v555, 4
      %v626 = vpop.permute.xlu0 %625
      %627 = vrot.lane.b32.xlu0 %v558, 4
      %v628 = vpop.permute.xlu0 %627
      %629 = vrot.lane.b32.xlu0 %v560, 4
      %v630 = vpop.permute.xlu0 %629
      %631 = vrot.lane.b32.xlu0 %v563, 4
      %v632 = vpop.permute.xlu0 %631
      %633 = vrot.lane.b32.xlu0 %v565, 4
      %v634 = vpop.permute.xlu0 %633
      %635 = vrot.lane.b32.xlu0 %v568, 4
      %v636 = vpop.permute.xlu0 %635
      %637 = vrot.lane.b32.xlu0 %v570, 4
      %v638 = vpop.permute.xlu0 %637
      %639 = vrot.lane.b32.xlu0 %v573, 4
      %v640 = vpop.permute.xlu0 %639
      %641 = vrot.lane.b32.xlu0 %v575, 4
      %v642 = vpop.permute.xlu0 %641
      %643 = vrot.lane.b32.xlu0 %v578, 4
      %v644 = vpop.permute.xlu0 %643
      %645 = vrot.lane.b32.xlu0 %v580, 4
      %v646 = vpop.permute.xlu0 %645
      %647 = vrot.lane.b32.xlu0 %v583, 4
      %v648 = vpop.permute.xlu0 %647
      %649 = vrot.lane.b32.xlu0 %v585, 4
      %v650 = vpop.permute.xlu0 %649
      %651 = vrot.lane.b32.xlu0 %v588, 4
      %v652 = vpop.permute.xlu0 %651
      %653 = vrot.lane.b32.xlu0 %v590, 4
      %v654 = vpop.permute.xlu0 %653
      %vm687 = vcmask 1045504
      %v688 = vrot.slane %v444, 2
      %v689 = vrot.slane %v346, 2
      %v690 = vsel %vm687, %v688, %v689
      %v691 = vrot.slane %v461, 2
      %v692 = vsel %vm687, %v689, %v691
      %v693 = vrot.slane %v445, 2
      %v694 = vrot.slane %v349, 2
      %v695 = vsel %vm687, %v693, %v694
      %v696 = vrot.slane %v462, 2
      %v697 = vsel %vm687, %v694, %v696
      %v698 = vrot.slane %v446, 2
      %v699 = vrot.slane %v352, 2
      %v700 = vsel %vm687, %v698, %v699
      %v701 = vrot.slane %v463, 2
      %v702 = vsel %vm687, %v699, %v701
      %v703 = vrot.slane %v447, 2
      %v704 = vrot.slane %v355, 2
      %v705 = vsel %vm687, %v703, %v704
      %v706 = vrot.slane %v464, 2
      %v707 = vsel %vm687, %v704, %v706
      %v708 = vrot.slane %v448, 2
      %v709 = vrot.slane %v358, 2
      %v710 = vsel %vm687, %v708, %v709
      %v711 = vrot.slane %v465, 2
      %v712 = vsel %vm687, %v709, %v711
      %v713 = vrot.slane %v449, 2
      %v714 = vrot.slane %v361, 2
      %v715 = vsel %vm687, %v713, %v714
      %v716 = vrot.slane %v466, 2
      %v717 = vsel %vm687, %v714, %v716
      %v718 = vrot.slane %v450, 2
      %v719 = vrot.slane %v364, 2
      %v720 = vsel %vm687, %v718, %v719
      %v721 = vrot.slane %v467, 2
      %v722 = vsel %vm687, %v719, %v721
      %v723 = vrot.slane %v451, 2
      %v724 = vrot.slane %v367, 2
      %v725 = vsel %vm687, %v723, %v724
      %v726 = vrot.slane %v468, 2
      %v727 = vsel %vm687, %v724, %v726
      %v728 = vrot.slane %v452, 2
      %v729 = vrot.slane %v370, 2
      %v730 = vsel %vm687, %v728, %v729
      %v731 = vrot.slane %v469, 2
      %v732 = vsel %vm687, %v729, %v731
      %v733 = vrot.slane %v453, 2
      %v734 = vrot.slane %v373, 2
      %v735 = vsel %vm687, %v733, %v734
      %v736 = vrot.slane %v470, 2
      %v737 = vsel %vm687, %v734, %v736
      %v738 = vrot.slane %v454, 2
      %v739 = vrot.slane %v376, 2
      %v740 = vsel %vm687, %v738, %v739
      %v741 = vrot.slane %v471, 2
      %v742 = vsel %vm687, %v739, %v741
      %v743 = vrot.slane %v455, 2
      %v744 = vrot.slane %v379, 2
      %v745 = vsel %vm687, %v743, %v744
      %v746 = vrot.slane %v472, 2
      %v747 = vsel %vm687, %v744, %v746
      %v748 = vrot.slane %v456, 2
      %v749 = vrot.slane %v382, 2
      %v750 = vsel %vm687, %v748, %v749
      %v751 = vrot.slane %v473, 2
      %v752 = vsel %vm687, %v749, %v751
      %v753 = vrot.slane %v457, 2
      %v754 = vrot.slane %v385, 2
      %v755 = vsel %vm687, %v753, %v754
      %v756 = vrot.slane %v474, 2
      %v757 = vsel %vm687, %v754, %v756
      %v758 = vrot.slane %v458, 2
      %v759 = vrot.slane %v388, 2
      %v760 = vsel %vm687, %v758, %v759
      %v761 = vrot.slane %v475, 2
      %v762 = vsel %vm687, %v759, %v761
      %v763 = vrot.slane %v459, 2
      %v764 = vrot.slane %v391, 2
      %v765 = vsel %vm687, %v763, %v764
      %v766 = vrot.slane %v476, 2
      %v767 = vsel %vm687, %v764, %v766
      %768 = vrot.lane.b32.xlu0 %v690, 8
      %v769 = vpop.permute.xlu0 %768
      %770 = vrot.lane.b32.xlu0 %v692, 8
      %v771 = vpop.permute.xlu0 %770
      %772 = vrot.lane.b32.xlu0 %v695, 8
      %v773 = vpop.permute.xlu0 %772
      %774 = vrot.lane.b32.xlu0 %v697, 8
      %v775 = vpop.permute.xlu0 %774
      %776 = vrot.lane.b32.xlu0 %v700, 8
      %v777 = vpop.permute.xlu0 %776
      %778 = vrot.lane.b32.xlu0 %v702, 8
      %v779 = vpop.permute.xlu0 %778
      %780 = vrot.lane.b32.xlu0 %v705, 8
      %v781 = vpop.permute.xlu0 %780
      %782 = vrot.lane.b32.xlu0 %v707, 8
      %v783 = vpop.permute.xlu0 %782
      %784 = vrot.lane.b32.xlu0 %v710, 8
      %v785 = vpop.permute.xlu0 %784
      %786 = vrot.lane.b32.xlu0 %v712, 8
      %v787 = vpop.permute.xlu0 %786
      %788 = vrot.lane.b32.xlu0 %v715, 8
      %v789 = vpop.permute.xlu0 %788
      %790 = vrot.lane.b32.xlu0 %v717, 8
      %v791 = vpop.permute.xlu0 %790
      %792 = vrot.lane.b32.xlu0 %v720, 8
      %v793 = vpop.permute.xlu0 %792
      %794 = vrot.lane.b32.xlu0 %v722, 8
      %v795 = vpop.permute.xlu0 %794
      %796 = vrot.lane.b32.xlu0 %v725, 8
      %v797 = vpop.permute.xlu0 %796
      %798 = vrot.lane.b32.xlu0 %v727, 8
      %v799 = vpop.permute.xlu0 %798
      %800 = vrot.lane.b32.xlu0 %v730, 8
      %v801 = vpop.permute.xlu0 %800
      %802 = vrot.lane.b32.xlu0 %v732, 8
      %v803 = vpop.permute.xlu0 %802
      %804 = vrot.lane.b32.xlu0 %v735, 8
      %v805 = vpop.permute.xlu0 %804
      %806 = vrot.lane.b32.xlu0 %v737, 8
      %v807 = vpop.permute.xlu0 %806
      %808 = vrot.lane.b32.xlu0 %v740, 8
      %v809 = vpop.permute.xlu0 %808
      %810 = vrot.lane.b32.xlu0 %v742, 8
      %v811 = vpop.permute.xlu0 %810
      %812 = vrot.lane.b32.xlu0 %v745, 8
      %v813 = vpop.permute.xlu0 %812
      %814 = vrot.lane.b32.xlu0 %v747, 8
      %v815 = vpop.permute.xlu0 %814
      %816 = vrot.lane.b32.xlu0 %v750, 8
      %v817 = vpop.permute.xlu0 %816
      %818 = vrot.lane.b32.xlu0 %v752, 8
      %v819 = vpop.permute.xlu0 %818
      %820 = vrot.lane.b32.xlu0 %v755, 8
      %v821 = vpop.permute.xlu0 %820
      %822 = vrot.lane.b32.xlu0 %v757, 8
      %v823 = vpop.permute.xlu0 %822
      %824 = vrot.lane.b32.xlu0 %v760, 8
      %v825 = vpop.permute.xlu0 %824
      %826 = vrot.lane.b32.xlu0 %v762, 8
      %v827 = vpop.permute.xlu0 %826
      %828 = vrot.lane.b32.xlu0 %v765, 8
      %v829 = vpop.permute.xlu0 %828
      %830 = vrot.lane.b32.xlu0 %v767, 8
      %v831 = vpop.permute.xlu0 %830
      %865 = vrot.lane.b32.xlu0 %v445, 12
      %v866 = vpop.permute.xlu0 %865
      %867 = vrot.lane.b32.xlu0 %v349, 12
      %v868 = vpop.permute.xlu0 %867
      %869 = vrot.lane.b32.xlu0 %v446, 12
      %v870 = vpop.permute.xlu0 %869
      %871 = vrot.lane.b32.xlu0 %v352, 12
      %v872 = vpop.permute.xlu0 %871
      %873 = vrot.lane.b32.xlu0 %v447, 12
      %v874 = vpop.permute.xlu0 %873
      %875 = vrot.lane.b32.xlu0 %v355, 12
      %v876 = vpop.permute.xlu0 %875
      %877 = vrot.lane.b32.xlu0 %v448, 12
      %v878 = vpop.permute.xlu0 %877
      %879 = vrot.lane.b32.xlu0 %v358, 12
      %v880 = vpop.permute.xlu0 %879
      %881 = vrot.lane.b32.xlu0 %v449, 12
      %v882 = vpop.permute.xlu0 %881
      %883 = vrot.lane.b32.xlu0 %v361, 12
      %v884 = vpop.permute.xlu0 %883
      %885 = vrot.lane.b32.xlu0 %v450, 12
      %v886 = vpop.permute.xlu0 %885
      %887 = vrot.lane.b32.xlu0 %v364, 12
      %v888 = vpop.permute.xlu0 %887
      %889 = vrot.lane.b32.xlu0 %v451, 12
      %v890 = vpop.permute.xlu0 %889
      %891 = vrot.lane.b32.xlu0 %v367, 12
      %v892 = vpop.permute.xlu0 %891
      %893 = vrot.lane.b32.xlu0 %v452, 12
      %v894 = vpop.permute.xlu0 %893
      %895 = vrot.lane.b32.xlu0 %v370, 12
      %v896 = vpop.permute.xlu0 %895
      %897 = vrot.lane.b32.xlu0 %v453, 12
      %v898 = vpop.permute.xlu0 %897
      %899 = vrot.lane.b32.xlu0 %v373, 12
      %v900 = vpop.permute.xlu0 %899
      %901 = vrot.lane.b32.xlu0 %v454, 12
      %v902 = vpop.permute.xlu0 %901
      %903 = vrot.lane.b32.xlu0 %v376, 12
      %v904 = vpop.permute.xlu0 %903
      %905 = vrot.lane.b32.xlu0 %v455, 12
      %v906 = vpop.permute.xlu0 %905
      %907 = vrot.lane.b32.xlu0 %v379, 12
      %v908 = vpop.permute.xlu0 %907
      %909 = vrot.lane.b32.xlu0 %v456, 12
      %v910 = vpop.permute.xlu0 %909
      %911 = vrot.lane.b32.xlu0 %v382, 12
      %v912 = vpop.permute.xlu0 %911
      %913 = vrot.lane.b32.xlu0 %v457, 12
      %v914 = vpop.permute.xlu0 %913
      %915 = vrot.lane.b32.xlu0 %v385, 12
      %v916 = vpop.permute.xlu0 %915
      %917 = vrot.lane.b32.xlu0 %v458, 12
      %v918 = vpop.permute.xlu0 %917
      %919 = vrot.lane.b32.xlu0 %v388, 12
      %v920 = vpop.permute.xlu0 %919
      %921 = vrot.lane.b32.xlu0 %v459, 12
      %v922 = vpop.permute.xlu0 %921
      %923 = vrot.lane.b32.xlu0 %v391, 12
      %v924 = vpop.permute.xlu0 %923
      %925 = vrot.lane.b32.xlu0 %v460, 12
      %v926 = vpop.permute.xlu0 %925
      %927 = vrot.lane.b32.xlu0 %v394, 12
      %v928 = vpop.permute.xlu0 %927
      %v962 = vrot.slane %v460, 1
      %v963 = vrot.slane %v394, 1
      %v964 = vsel %vm510, %v962, %v963
      %v965 = vrot.slane %v477, 1
      %v966 = vsel %vm510, %v963, %v965
      %967 = vrot.lane.b32.xlu0 %v518, 16
      %v968 = vpop.permute.xlu0 %967
      %969 = vrot.lane.b32.xlu0 %v520, 16
      %v970 = vpop.permute.xlu0 %969
      %971 = vrot.lane.b32.xlu0 %v523, 16
      %v972 = vpop.permute.xlu0 %971
      %973 = vrot.lane.b32.xlu0 %v525, 16
      %v974 = vpop.permute.xlu0 %973
      %975 = vrot.lane.b32.xlu0 %v528, 16
      %v976 = vpop.permute.xlu0 %975
      %977 = vrot.lane.b32.xlu0 %v530, 16
      %v978 = vpop.permute.xlu0 %977
      %979 = vrot.lane.b32.xlu0 %v533, 16
      %v980 = vpop.permute.xlu0 %979
      %981 = vrot.lane.b32.xlu0 %v535, 16
      %v982 = vpop.permute.xlu0 %981
      %983 = vrot.lane.b32.xlu0 %v538, 16
      %v984 = vpop.permute.xlu0 %983
      %985 = vrot.lane.b32.xlu0 %v540, 16
      %v986 = vpop.permute.xlu0 %985
      %987 = vrot.lane.b32.xlu0 %v543, 16
      %v988 = vpop.permute.xlu0 %987
      %989 = vrot.lane.b32.xlu0 %v545, 16
      %v990 = vpop.permute.xlu0 %989
      %991 = vrot.lane.b32.xlu0 %v548, 16
      %v992 = vpop.permute.xlu0 %991
      %993 = vrot.lane.b32.xlu0 %v550, 16
      %v994 = vpop.permute.xlu0 %993
      %995 = vrot.lane.b32.xlu0 %v553, 16
      %v996 = vpop.permute.xlu0 %995
      %997 = vrot.lane.b32.xlu0 %v555, 16
      %v998 = vpop.permute.xlu0 %997
      %999 = vrot.lane.b32.xlu0 %v558, 16
      %v1000 = vpop.permute.xlu0 %999
      %1001 = vrot.lane.b32.xlu0 %v560, 16
      %v1002 = vpop.permute.xlu0 %1001
      %1003 = vrot.lane.b32.xlu0 %v563, 16
      %v1004 = vpop.permute.xlu0 %1003
      %1005 = vrot.lane.b32.xlu0 %v565, 16
      %v1006 = vpop.permute.xlu0 %1005
      %1007 = vrot.lane.b32.xlu0 %v568, 16
      %v1008 = vpop.permute.xlu0 %1007
      %1009 = vrot.lane.b32.xlu0 %v570, 16
      %v1010 = vpop.permute.xlu0 %1009
      %1011 = vrot.lane.b32.xlu0 %v573, 16
      %v1012 = vpop.permute.xlu0 %1011
      %1013 = vrot.lane.b32.xlu0 %v575, 16
      %v1014 = vpop.permute.xlu0 %1013
      %1015 = vrot.lane.b32.xlu0 %v578, 16
      %v1016 = vpop.permute.xlu0 %1015
      %1017 = vrot.lane.b32.xlu0 %v580, 16
      %v1018 = vpop.permute.xlu0 %1017
      %1019 = vrot.lane.b32.xlu0 %v583, 16
      %v1020 = vpop.permute.xlu0 %1019
      %1021 = vrot.lane.b32.xlu0 %v585, 16
      %v1022 = vpop.permute.xlu0 %1021
      %1023 = vrot.lane.b32.xlu0 %v588, 16
      %v1024 = vpop.permute.xlu0 %1023
      %1025 = vrot.lane.b32.xlu0 %v590, 16
      %v1026 = vpop.permute.xlu0 %1025
      %1027 = vrot.lane.b32.xlu0 %v964, 16
      %v1028 = vpop.permute.xlu0 %1027
      %1029 = vrot.lane.b32.xlu0 %v966, 16
      %v1030 = vpop.permute.xlu0 %1029
      %v1063 = vrot.slane %v460, 2
      %v1064 = vrot.slane %v394, 2
      %v1065 = vsel %vm687, %v1063, %v1064
      %v1066 = vrot.slane %v477, 2
      %v1067 = vsel %vm687, %v1064, %v1066
      %1068 = vrot.lane.b32.xlu0 %v695, 20
      %v1069 = vpop.permute.xlu0 %1068
      %1070 = vrot.lane.b32.xlu0 %v697, 20
      %v1071 = vpop.permute.xlu0 %1070
      %1072 = vrot.lane.b32.xlu0 %v700, 20
      %v1073 = vpop.permute.xlu0 %1072
      %1074 = vrot.lane.b32.xlu0 %v702, 20
      %v1075 = vpop.permute.xlu0 %1074
      %1076 = vrot.lane.b32.xlu0 %v705, 20
      %v1077 = vpop.permute.xlu0 %1076
      %1078 = vrot.lane.b32.xlu0 %v707, 20
      %v1079 = vpop.permute.xlu0 %1078
      %1080 = vrot.lane.b32.xlu0 %v710, 20
      %v1081 = vpop.permute.xlu0 %1080
      %1082 = vrot.lane.b32.xlu0 %v712, 20
      %v1083 = vpop.permute.xlu0 %1082
      %1084 = vrot.lane.b32.xlu0 %v715, 20
      %v1085 = vpop.permute.xlu0 %1084
      %1086 = vrot.lane.b32.xlu0 %v717, 20
      %v1087 = vpop.permute.xlu0 %1086
      %1088 = vrot.lane.b32.xlu0 %v720, 20
      %v1089 = vpop.permute.xlu0 %1088
      %1090 = vrot.lane.b32.xlu0 %v722, 20
      %v1091 = vpop.permute.xlu0 %1090
      %1092 = vrot.lane.b32.xlu0 %v725, 20
      %v1093 = vpop.permute.xlu0 %1092
      %1094 = vrot.lane.b32.xlu0 %v727, 20
      %v1095 = vpop.permute.xlu0 %1094
      %1096 = vrot.lane.b32.xlu0 %v730, 20
      %v1097 = vpop.permute.xlu0 %1096
      %1098 = vrot.lane.b32.xlu0 %v732, 20
      %v1099 = vpop.permute.xlu0 %1098
      %1100 = vrot.lane.b32.xlu0 %v735, 20
      %v1101 = vpop.permute.xlu0 %1100
      %1102 = vrot.lane.b32.xlu0 %v737, 20
      %v1103 = vpop.permute.xlu0 %1102
      %1104 = vrot.lane.b32.xlu0 %v740, 20
      %v1105 = vpop.permute.xlu0 %1104
      %1106 = vrot.lane.b32.xlu0 %v742, 20
      %v1107 = vpop.permute.xlu0 %1106
      %1108 = vrot.lane.b32.xlu0 %v745, 20
      %v1109 = vpop.permute.xlu0 %1108
      %1110 = vrot.lane.b32.xlu0 %v747, 20
      %v1111 = vpop.permute.xlu0 %1110
      %1112 = vrot.lane.b32.xlu0 %v750, 20
      %v1113 = vpop.permute.xlu0 %1112
      %1114 = vrot.lane.b32.xlu0 %v752, 20
      %v1115 = vpop.permute.xlu0 %1114
      %1116 = vrot.lane.b32.xlu0 %v755, 20
      %v1117 = vpop.permute.xlu0 %1116
      %1118 = vrot.lane.b32.xlu0 %v757, 20
      %v1119 = vpop.permute.xlu0 %1118
      %1120 = vrot.lane.b32.xlu0 %v760, 20
      %v1121 = vpop.permute.xlu0 %1120
      %1122 = vrot.lane.b32.xlu0 %v762, 20
      %v1123 = vpop.permute.xlu0 %1122
      %1124 = vrot.lane.b32.xlu0 %v765, 20
      %v1125 = vpop.permute.xlu0 %1124
      %1126 = vrot.lane.b32.xlu0 %v767, 20
      %v1127 = vpop.permute.xlu0 %1126
      %1128 = vrot.lane.b32.xlu0 %v1065, 20
      %v1129 = vpop.permute.xlu0 %1128
      %1130 = vrot.lane.b32.xlu0 %v1067, 20
      %v1131 = vpop.permute.xlu0 %1130
      %1164 = vrot.lane.b32.xlu0 %v446, 24
      %v1165 = vpop.permute.xlu0 %1164
      %1166 = vrot.lane.b32.xlu0 %v352, 24
      %v1167 = vpop.permute.xlu0 %1166
      %1168 = vrot.lane.b32.xlu0 %v447, 24
      %v1169 = vpop.permute.xlu0 %1168
      %1170 = vrot.lane.b32.xlu0 %v355, 24
      %v1171 = vpop.permute.xlu0 %1170
      %1172 = vrot.lane.b32.xlu0 %v448, 24
      %v1173 = vpop.permute.xlu0 %1172
      %1174 = vrot.lane.b32.xlu0 %v358, 24
      %v1175 = vpop.permute.xlu0 %1174
      %1176 = vrot.lane.b32.xlu0 %v449, 24
      %v1177 = vpop.permute.xlu0 %1176
      %1178 = vrot.lane.b32.xlu0 %v361, 24
      %v1179 = vpop.permute.xlu0 %1178
      %1180 = vrot.lane.b32.xlu0 %v450, 24
      %v1181 = vpop.permute.xlu0 %1180
      %1182 = vrot.lane.b32.xlu0 %v364, 24
      %v1183 = vpop.permute.xlu0 %1182
      %1184 = vrot.lane.b32.xlu0 %v451, 24
      %v1185 = vpop.permute.xlu0 %1184
      %1186 = vrot.lane.b32.xlu0 %v367, 24
      %v1187 = vpop.permute.xlu0 %1186
      %1188 = vrot.lane.b32.xlu0 %v452, 24
      %v1189 = vpop.permute.xlu0 %1188
      %1190 = vrot.lane.b32.xlu0 %v370, 24
      %v1191 = vpop.permute.xlu0 %1190
      %1192 = vrot.lane.b32.xlu0 %v453, 24
      %v1193 = vpop.permute.xlu0 %1192
      %1194 = vrot.lane.b32.xlu0 %v373, 24
      %v1195 = vpop.permute.xlu0 %1194
      %1196 = vrot.lane.b32.xlu0 %v454, 24
      %v1197 = vpop.permute.xlu0 %1196
      %1198 = vrot.lane.b32.xlu0 %v376, 24
      %v1199 = vpop.permute.xlu0 %1198
      %1200 = vrot.lane.b32.xlu0 %v455, 24
      %v1201 = vpop.permute.xlu0 %1200
      %1202 = vrot.lane.b32.xlu0 %v379, 24
      %v1203 = vpop.permute.xlu0 %1202
      %1204 = vrot.lane.b32.xlu0 %v456, 24
      %v1205 = vpop.permute.xlu0 %1204
      %1206 = vrot.lane.b32.xlu0 %v382, 24
      %v1207 = vpop.permute.xlu0 %1206
      %1208 = vrot.lane.b32.xlu0 %v457, 24
      %v1209 = vpop.permute.xlu0 %1208
      %1210 = vrot.lane.b32.xlu0 %v385, 24
      %v1211 = vpop.permute.xlu0 %1210
      %1212 = vrot.lane.b32.xlu0 %v458, 24
      %v1213 = vpop.permute.xlu0 %1212
      %1214 = vrot.lane.b32.xlu0 %v388, 24
      %v1215 = vpop.permute.xlu0 %1214
      %1216 = vrot.lane.b32.xlu0 %v459, 24
      %v1217 = vpop.permute.xlu0 %1216
      %1218 = vrot.lane.b32.xlu0 %v391, 24
      %v1219 = vpop.permute.xlu0 %1218
      %1220 = vrot.lane.b32.xlu0 %v460, 24
      %v1221 = vpop.permute.xlu0 %1220
      %1222 = vrot.lane.b32.xlu0 %v394, 24
      %v1223 = vpop.permute.xlu0 %1222
      %1224 = vrot.lane.b32.xlu0 %v444, 24
      %v1225 = vpop.permute.xlu0 %1224
      %1226 = vrot.lane.b32.xlu0 %v346, 24
      %v1227 = vpop.permute.xlu0 %1226
      %1260 = vrot.lane.b32.xlu0 %v523, 28
      %v1261 = vpop.permute.xlu0 %1260
      %1262 = vrot.lane.b32.xlu0 %v525, 28
      %v1263 = vpop.permute.xlu0 %1262
      %1264 = vrot.lane.b32.xlu0 %v528, 28
      %v1265 = vpop.permute.xlu0 %1264
      %1266 = vrot.lane.b32.xlu0 %v530, 28
      %v1267 = vpop.permute.xlu0 %1266
      %1268 = vrot.lane.b32.xlu0 %v533, 28
      %v1269 = vpop.permute.xlu0 %1268
      %1270 = vrot.lane.b32.xlu0 %v535, 28
      %v1271 = vpop.permute.xlu0 %1270
      %1272 = vrot.lane.b32.xlu0 %v538, 28
      %v1273 = vpop.permute.xlu0 %1272
      %1274 = vrot.lane.b32.xlu0 %v540, 28
      %v1275 = vpop.permute.xlu0 %1274
      %1276 = vrot.lane.b32.xlu0 %v543, 28
      %v1277 = vpop.permute.xlu0 %1276
      %1278 = vrot.lane.b32.xlu0 %v545, 28
      %v1279 = vpop.permute.xlu0 %1278
      %1280 = vrot.lane.b32.xlu0 %v548, 28
      %v1281 = vpop.permute.xlu0 %1280
      %1282 = vrot.lane.b32.xlu0 %v550, 28
      %v1283 = vpop.permute.xlu0 %1282
      %1284 = vrot.lane.b32.xlu0 %v553, 28
      %v1285 = vpop.permute.xlu0 %1284
      %1286 = vrot.lane.b32.xlu0 %v555, 28
      %v1287 = vpop.permute.xlu0 %1286
      %1288 = vrot.lane.b32.xlu0 %v558, 28
      %v1289 = vpop.permute.xlu0 %1288
      %1290 = vrot.lane.b32.xlu0 %v560, 28
      %v1291 = vpop.permute.xlu0 %1290
      %1292 = vrot.lane.b32.xlu0 %v563, 28
      %v1293 = vpop.permute.xlu0 %1292
      %1294 = vrot.lane.b32.xlu0 %v565, 28
      %v1295 = vpop.permute.xlu0 %1294
      %1296 = vrot.lane.b32.xlu0 %v568, 28
      %v1297 = vpop.permute.xlu0 %1296
      %1298 = vrot.lane.b32.xlu0 %v570, 28
      %v1299 = vpop.permute.xlu0 %1298
      %1300 = vrot.lane.b32.xlu0 %v573, 28
      %v1301 = vpop.permute.xlu0 %1300
      %1302 = vrot.lane.b32.xlu0 %v575, 28
      %v1303 = vpop.permute.xlu0 %1302
      %1304 = vrot.lane.b32.xlu0 %v578, 28
      %v1305 = vpop.permute.xlu0 %1304
      %1306 = vrot.lane.b32.xlu0 %v580, 28
      %v1307 = vpop.permute.xlu0 %1306
      %1308 = vrot.lane.b32.xlu0 %v583, 28
      %v1309 = vpop.permute.xlu0 %1308
      %1310 = vrot.lane.b32.xlu0 %v585, 28
      %v1311 = vpop.permute.xlu0 %1310
      %1312 = vrot.lane.b32.xlu0 %v588, 28
      %v1313 = vpop.permute.xlu0 %1312
      %1314 = vrot.lane.b32.xlu0 %v590, 28
      %v1315 = vpop.permute.xlu0 %1314
      %1316 = vrot.lane.b32.xlu0 %v964, 28
      %v1317 = vpop.permute.xlu0 %1316
      %1318 = vrot.lane.b32.xlu0 %v966, 28
      %v1319 = vpop.permute.xlu0 %1318
      %1320 = vrot.lane.b32.xlu0 %v513, 28
      %v1321 = vpop.permute.xlu0 %1320
      %1322 = vrot.lane.b32.xlu0 %v515, 28
      %v1323 = vpop.permute.xlu0 %1322
      %1356 = vrot.lane.b32.xlu0 %v700, 32
      %v1357 = vpop.permute.xlu0 %1356
      %1358 = vrot.lane.b32.xlu0 %v702, 32
      %v1359 = vpop.permute.xlu0 %1358
      %1360 = vrot.lane.b32.xlu0 %v705, 32
      %v1361 = vpop.permute.xlu0 %1360
      %1362 = vrot.lane.b32.xlu0 %v707, 32
      %v1363 = vpop.permute.xlu0 %1362
      %1364 = vrot.lane.b32.xlu0 %v710, 32
      %v1365 = vpop.permute.xlu0 %1364
      %1366 = vrot.lane.b32.xlu0 %v712, 32
      %v1367 = vpop.permute.xlu0 %1366
      %1368 = vrot.lane.b32.xlu0 %v715, 32
      %v1369 = vpop.permute.xlu0 %1368
      %1370 = vrot.lane.b32.xlu0 %v717, 32
      %v1371 = vpop.permute.xlu0 %1370
      %1372 = vrot.lane.b32.xlu0 %v720, 32
      %v1373 = vpop.permute.xlu0 %1372
      %1374 = vrot.lane.b32.xlu0 %v722, 32
      %v1375 = vpop.permute.xlu0 %1374
      %1376 = vrot.lane.b32.xlu0 %v725, 32
      %v1377 = vpop.permute.xlu0 %1376
      %1378 = vrot.lane.b32.xlu0 %v727, 32
      %v1379 = vpop.permute.xlu0 %1378
      %1380 = vrot.lane.b32.xlu0 %v730, 32
      %v1381 = vpop.permute.xlu0 %1380
      %1382 = vrot.lane.b32.xlu0 %v732, 32
      %v1383 = vpop.permute.xlu0 %1382
      %1384 = vrot.lane.b32.xlu0 %v735, 32
      %v1385 = vpop.permute.xlu0 %1384
      %1386 = vrot.lane.b32.xlu0 %v737, 32
      %v1387 = vpop.permute.xlu0 %1386
      %1388 = vrot.lane.b32.xlu0 %v740, 32
      %v1389 = vpop.permute.xlu0 %1388
      %1390 = vrot.lane.b32.xlu0 %v742, 32
      %v1391 = vpop.permute.xlu0 %1390
      %1392 = vrot.lane.b32.xlu0 %v745, 32
      %v1393 = vpop.permute.xlu0 %1392
      %1394 = vrot.lane.b32.xlu0 %v747, 32
      %v1395 = vpop.permute.xlu0 %1394
      %1396 = vrot.lane.b32.xlu0 %v750, 32
      %v1397 = vpop.permute.xlu0 %1396
      %1398 = vrot.lane.b32.xlu0 %v752, 32
      %v1399 = vpop.permute.xlu0 %1398
      %1400 = vrot.lane.b32.xlu0 %v755, 32
      %v1401 = vpop.permute.xlu0 %1400
      %1402 = vrot.lane.b32.xlu0 %v757, 32
      %v1403 = vpop.permute.xlu0 %1402
      %1404 = vrot.lane.b32.xlu0 %v760, 32
      %v1405 = vpop.permute.xlu0 %1404
      %1406 = vrot.lane.b32.xlu0 %v762, 32
      %v1407 = vpop.permute.xlu0 %1406
      %1408 = vrot.lane.b32.xlu0 %v765, 32
      %v1409 = vpop.permute.xlu0 %1408
      %1410 = vrot.lane.b32.xlu0 %v767, 32
      %v1411 = vpop.permute.xlu0 %1410
      %1412 = vrot.lane.b32.xlu0 %v1065, 32
      %v1413 = vpop.permute.xlu0 %1412
      %1414 = vrot.lane.b32.xlu0 %v1067, 32
      %v1415 = vpop.permute.xlu0 %1414
      %1416 = vrot.lane.b32.xlu0 %v690, 32
      %v1417 = vpop.permute.xlu0 %1416
      %1418 = vrot.lane.b32.xlu0 %v692, 32
      %v1419 = vpop.permute.xlu0 %1418
      %vm1452 = vcmask 31744
      %v1453 = vsel %vm1452, %v444, %v592
      %v1454 = vsel %vm1452, %v346, %v594
      %v1455 = vsel %vm1452, %v445, %v596
      %v1456 = vsel %vm1452, %v349, %v598
      %v1457 = vsel %vm1452, %v446, %v600
      %v1458 = vsel %vm1452, %v352, %v602
      %v1459 = vsel %vm1452, %v447, %v604
      %v1460 = vsel %vm1452, %v355, %v606
      %v1461 = vsel %vm1452, %v448, %v608
      %v1462 = vsel %vm1452, %v358, %v610
      %v1463 = vsel %vm1452, %v449, %v612
      %v1464 = vsel %vm1452, %v361, %v614
      %v1465 = vsel %vm1452, %v450, %v616
      %v1466 = vsel %vm1452, %v364, %v618
      %v1467 = vsel %vm1452, %v451, %v620
      %v1468 = vsel %vm1452, %v367, %v622
      %v1469 = vsel %vm1452, %v452, %v624
      %v1470 = vsel %vm1452, %v370, %v626
      %v1471 = vsel %vm1452, %v453, %v628
      %v1472 = vsel %vm1452, %v373, %v630
      %v1473 = vsel %vm1452, %v454, %v632
      %v1474 = vsel %vm1452, %v376, %v634
      %v1475 = vsel %vm1452, %v455, %v636
      %v1476 = vsel %vm1452, %v379, %v638
      %v1477 = vsel %vm1452, %v456, %v640
      %v1478 = vsel %vm1452, %v382, %v642
      %v1479 = vsel %vm1452, %v457, %v644
      %v1480 = vsel %vm1452, %v385, %v646
      %v1481 = vsel %vm1452, %v458, %v648
      %v1482 = vsel %vm1452, %v388, %v650
      %v1483 = vsel %vm1452, %v459, %v652
      %v1484 = vsel %vm1452, %v391, %v654
      %vm1485 = vcmask 64512
      %v1486 = vsel %vm1485, %v1453, %v769
      %v1487 = vsel %vm1485, %v1454, %v771
      %v1488 = vsel %vm1485, %v1455, %v773
      %v1489 = vsel %vm1485, %v1456, %v775
      %v1490 = vsel %vm1485, %v1457, %v777
      %v1491 = vsel %vm1485, %v1458, %v779
      %v1492 = vsel %vm1485, %v1459, %v781
      %v1493 = vsel %vm1485, %v1460, %v783
      %v1494 = vsel %vm1485, %v1461, %v785
      %v1495 = vsel %vm1485, %v1462, %v787
      %v1496 = vsel %vm1485, %v1463, %v789
      %v1497 = vsel %vm1485, %v1464, %v791
      %v1498 = vsel %vm1485, %v1465, %v793
      %v1499 = vsel %vm1485, %v1466, %v795
      %v1500 = vsel %vm1485, %v1467, %v797
      %v1501 = vsel %vm1485, %v1468, %v799
      %v1502 = vsel %vm1485, %v1469, %v801
      %v1503 = vsel %vm1485, %v1470, %v803
      %v1504 = vsel %vm1485, %v1471, %v805
      %v1505 = vsel %vm1485, %v1472, %v807
      %v1506 = vsel %vm1485, %v1473, %v809
      %v1507 = vsel %vm1485, %v1474, %v811
      %v1508 = vsel %vm1485, %v1475, %v813
      %v1509 = vsel %vm1485, %v1476, %v815
      %v1510 = vsel %vm1485, %v1477, %v817
      %v1511 = vsel %vm1485, %v1478, %v819
      %v1512 = vsel %vm1485, %v1479, %v821
      %v1513 = vsel %vm1485, %v1480, %v823
      %v1514 = vsel %vm1485, %v1481, %v825
      %v1515 = vsel %vm1485, %v1482, %v827
      %v1516 = vsel %vm1485, %v1483, %v829
      %v1517 = vsel %vm1485, %v1484, %v831
      %vm1518 = vcmask 97280
      %v1519 = vsel %vm1518, %v1486, %v866
      %v1520 = vsel %vm1518, %v1487, %v868
      %v1521 = vsel %vm1518, %v1488, %v870
      %v1522 = vsel %vm1518, %v1489, %v872
      %v1523 = vsel %vm1518, %v1490, %v874
      %v1524 = vsel %vm1518, %v1491, %v876
      %v1525 = vsel %vm1518, %v1492, %v878
      %v1526 = vsel %vm1518, %v1493, %v880
      %v1527 = vsel %vm1518, %v1494, %v882
      %v1528 = vsel %vm1518, %v1495, %v884
      %v1529 = vsel %vm1518, %v1496, %v886
      %v1530 = vsel %vm1518, %v1497, %v888
      %v1531 = vsel %vm1518, %v1498, %v890
      %v1532 = vsel %vm1518, %v1499, %v892
      %v1533 = vsel %vm1518, %v1500, %v894
      %v1534 = vsel %vm1518, %v1501, %v896
      %v1535 = vsel %vm1518, %v1502, %v898
      %v1536 = vsel %vm1518, %v1503, %v900
      %v1537 = vsel %vm1518, %v1504, %v902
      %v1538 = vsel %vm1518, %v1505, %v904
      %v1539 = vsel %vm1518, %v1506, %v906
      %v1540 = vsel %vm1518, %v1507, %v908
      %v1541 = vsel %vm1518, %v1508, %v910
      %v1542 = vsel %vm1518, %v1509, %v912
      %v1543 = vsel %vm1518, %v1510, %v914
      %v1544 = vsel %vm1518, %v1511, %v916
      %v1545 = vsel %vm1518, %v1512, %v918
      %v1546 = vsel %vm1518, %v1513, %v920
      %v1547 = vsel %vm1518, %v1514, %v922
      %v1548 = vsel %vm1518, %v1515, %v924
      %v1549 = vsel %vm1518, %v1516, %v926
      %v1550 = vsel %vm1518, %v1517, %v928
      %vm1551 = vcmask 130048
      %v1552 = vsel %vm1551, %v1519, %v968
      %v1553 = vsel %vm1551, %v1520, %v970
      %v1554 = vsel %vm1551, %v1521, %v972
      %v1555 = vsel %vm1551, %v1522, %v974
      %v1556 = vsel %vm1551, %v1523, %v976
      %v1557 = vsel %vm1551, %v1524, %v978
      %v1558 = vsel %vm1551, %v1525, %v980
      %v1559 = vsel %vm1551, %v1526, %v982
      %v1560 = vsel %vm1551, %v1527, %v984
      %v1561 = vsel %vm1551, %v1528, %v986
      %v1562 = vsel %vm1551, %v1529, %v988
      %v1563 = vsel %vm1551, %v1530, %v990
      %v1564 = vsel %vm1551, %v1531, %v992
      %v1565 = vsel %vm1551, %v1532, %v994
      %v1566 = vsel %vm1551, %v1533, %v996
      %v1567 = vsel %vm1551, %v1534, %v998
      %v1568 = vsel %vm1551, %v1535, %v1000
      %v1569 = vsel %vm1551, %v1536, %v1002
      %v1570 = vsel %vm1551, %v1537, %v1004
      %v1571 = vsel %vm1551, %v1538, %v1006
      %v1572 = vsel %vm1551, %v1539, %v1008
      %v1573 = vsel %vm1551, %v1540, %v1010
      %v1574 = vsel %vm1551, %v1541, %v1012
      %v1575 = vsel %vm1551, %v1542, %v1014
      %v1576 = vsel %vm1551, %v1543, %v1016
      %v1577 = vsel %vm1551, %v1544, %v1018
      %v1578 = vsel %vm1551, %v1545, %v1020
      %v1579 = vsel %vm1551, %v1546, %v1022
      %v1580 = vsel %vm1551, %v1547, %v1024
      %v1581 = vsel %vm1551, %v1548, %v1026
      %v1582 = vsel %vm1551, %v1549, %v1028
      %v1583 = vsel %vm1551, %v1550, %v1030
      %vm1584 = vcmask 162816
      %v1585 = vsel %vm1584, %v1552, %v1069
      %v1586 = vsel %vm1584, %v1553, %v1071
      %v1587 = vsel %vm1584, %v1554, %v1073
      %v1588 = vsel %vm1584, %v1555, %v1075
      %v1589 = vsel %vm1584, %v1556, %v1077
      %v1590 = vsel %vm1584, %v1557, %v1079
      %v1591 = vsel %vm1584, %v1558, %v1081
      %v1592 = vsel %vm1584, %v1559, %v1083
      %v1593 = vsel %vm1584, %v1560, %v1085
      %v1594 = vsel %vm1584, %v1561, %v1087
      %v1595 = vsel %vm1584, %v1562, %v1089
      %v1596 = vsel %vm1584, %v1563, %v1091
      %v1597 = vsel %vm1584, %v1564, %v1093
      %v1598 = vsel %vm1584, %v1565, %v1095
      %v1599 = vsel %vm1584, %v1566, %v1097
      %v1600 = vsel %vm1584, %v1567, %v1099
      %v1601 = vsel %vm1584, %v1568, %v1101
      %v1602 = vsel %vm1584, %v1569, %v1103
      %v1603 = vsel %vm1584, %v1570, %v1105
      %v1604 = vsel %vm1584, %v1571, %v1107
      %v1605 = vsel %vm1584, %v1572, %v1109
      %v1606 = vsel %vm1584, %v1573, %v1111
      %v1607 = vsel %vm1584, %v1574, %v1113
      %v1608 = vsel %vm1584, %v1575, %v1115
      %v1609 = vsel %vm1584, %v1576, %v1117
      %v1610 = vsel %vm1584, %v1577, %v1119
      %v1611 = vsel %vm1584, %v1578, %v1121
      %v1612 = vsel %vm1584, %v1579, %v1123
      %v1613 = vsel %vm1584, %v1580, %v1125
      %v1614 = vsel %vm1584, %v1581, %v1127
      %v1615 = vsel %vm1584, %v1582, %v1129
      %v1616 = vsel %vm1584, %v1583, %v1131
      %vm1617 = vcmask 195584
      %v1618 = vsel %vm1617, %v1585, %v1165
      %v1619 = vsel %vm1617, %v1586, %v1167
      %v1620 = vsel %vm1617, %v1587, %v1169
      %v1621 = vsel %vm1617, %v1588, %v1171
      %v1622 = vsel %vm1617, %v1589, %v1173
      %v1623 = vsel %vm1617, %v1590, %v1175
      %v1624 = vsel %vm1617, %v1591, %v1177
      %v1625 = vsel %vm1617, %v1592, %v1179
      %v1626 = vsel %vm1617, %v1593, %v1181
      %v1627 = vsel %vm1617, %v1594, %v1183
      %v1628 = vsel %vm1617, %v1595, %v1185
      %v1629 = vsel %vm1617, %v1596, %v1187
      %v1630 = vsel %vm1617, %v1597, %v1189
      %v1631 = vsel %vm1617, %v1598, %v1191
      %v1632 = vsel %vm1617, %v1599, %v1193
      %v1633 = vsel %vm1617, %v1600, %v1195
      %v1634 = vsel %vm1617, %v1601, %v1197
      %v1635 = vsel %vm1617, %v1602, %v1199
      %v1636 = vsel %vm1617, %v1603, %v1201
      %v1637 = vsel %vm1617, %v1604, %v1203
      %v1638 = vsel %vm1617, %v1605, %v1205
      %v1639 = vsel %vm1617, %v1606, %v1207
      %v1640 = vsel %vm1617, %v1607, %v1209
      %v1641 = vsel %vm1617, %v1608, %v1211
      %v1642 = vsel %vm1617, %v1609, %v1213
      %v1643 = vsel %vm1617, %v1610, %v1215
      %v1644 = vsel %vm1617, %v1611, %v1217
      %v1645 = vsel %vm1617, %v1612, %v1219
      %v1646 = vsel %vm1617, %v1613, %v1221
      %v1647 = vsel %vm1617, %v1614, %v1223
      %v1648 = vsel %vm1617, %v1615, %v1225
      %v1649 = vsel %vm1617, %v1616, %v1227
      %vm1650 = vcmask 228352
      %v1651 = vsel %vm1650, %v1618, %v1261
      %v1652 = vsel %vm1650, %v1619, %v1263
      %v1653 = vsel %vm1650, %v1620, %v1265
      %v1654 = vsel %vm1650, %v1621, %v1267
      %v1655 = vsel %vm1650, %v1622, %v1269
      %v1656 = vsel %vm1650, %v1623, %v1271
      %v1657 = vsel %vm1650, %v1624, %v1273
      %v1658 = vsel %vm1650, %v1625, %v1275
      %v1659 = vsel %vm1650, %v1626, %v1277
      %v1660 = vsel %vm1650, %v1627, %v1279
      %v1661 = vsel %vm1650, %v1628, %v1281
      %v1662 = vsel %vm1650, %v1629, %v1283
      %v1663 = vsel %vm1650, %v1630, %v1285
      %v1664 = vsel %vm1650, %v1631, %v1287
      %v1665 = vsel %vm1650, %v1632, %v1289
      %v1666 = vsel %vm1650, %v1633, %v1291
      %v1667 = vsel %vm1650, %v1634, %v1293
      %v1668 = vsel %vm1650, %v1635, %v1295
      %v1669 = vsel %vm1650, %v1636, %v1297
      %v1670 = vsel %vm1650, %v1637, %v1299
      %v1671 = vsel %vm1650, %v1638, %v1301
      %v1672 = vsel %vm1650, %v1639, %v1303
      %v1673 = vsel %vm1650, %v1640, %v1305
      %v1674 = vsel %vm1650, %v1641, %v1307
      %v1675 = vsel %vm1650, %v1642, %v1309
      %v1676 = vsel %vm1650, %v1643, %v1311
      %v1677 = vsel %vm1650, %v1644, %v1313
      %v1678 = vsel %vm1650, %v1645, %v1315
      %v1679 = vsel %vm1650, %v1646, %v1317
      %v1680 = vsel %vm1650, %v1647, %v1319
      %v1681 = vsel %vm1650, %v1648, %v1321
      %v1682 = vsel %vm1650, %v1649, %v1323
      %vm1683 = vcmask 261120
      %v1684 = vsel %vm1683, %v1651, %v1357
      %v1685 = vsel %vm1683, %v1652, %v1359
      %v1686 = vsel %vm1683, %v1653, %v1361
      %v1687 = vsel %vm1683, %v1654, %v1363
      %v1688 = vsel %vm1683, %v1655, %v1365
      %v1689 = vsel %vm1683, %v1656, %v1367
      %v1690 = vsel %vm1683, %v1657, %v1369
      %v1691 = vsel %vm1683, %v1658, %v1371
      %v1692 = vsel %vm1683, %v1659, %v1373
      %v1693 = vsel %vm1683, %v1660, %v1375
      %v1694 = vsel %vm1683, %v1661, %v1377
      %v1695 = vsel %vm1683, %v1662, %v1379
      %v1696 = vsel %vm1683, %v1663, %v1381
      %v1697 = vsel %vm1683, %v1664, %v1383
      %v1698 = vsel %vm1683, %v1665, %v1385
      %v1699 = vsel %vm1683, %v1666, %v1387
      %v1700 = vsel %vm1683, %v1667, %v1389
      %v1701 = vsel %vm1683, %v1668, %v1391
      %v1702 = vsel %vm1683, %v1669, %v1393
      %v1703 = vsel %vm1683, %v1670, %v1395
      %v1704 = vsel %vm1683, %v1671, %v1397
      %v1705 = vsel %vm1683, %v1672, %v1399
      %v1706 = vsel %vm1683, %v1673, %v1401
      %v1707 = vsel %vm1683, %v1674, %v1403
      %v1708 = vsel %vm1683, %v1675, %v1405
      %v1709 = vsel %vm1683, %v1676, %v1407
      %v1710 = vsel %vm1683, %v1677, %v1409
      %v1711 = vsel %vm1683, %v1678, %v1411
      %v1712 = vsel %vm1683, %v1679, %v1413
      %v1713 = vsel %vm1683, %v1680, %v1415
      %v1714 = vsel %vm1683, %v1681, %v1417
      %v1715 = vsel %vm1683, %v1682, %v1419
      %v1716 = vld [vmem:[%s1] sm:$0xff]
      %v1717 = vld [vmem:[%s1 + $0x8] sm:$0xff]
      %v1718 = vld [vmem:[%s1 + $0x10] sm:$0xff]
      %v1719 = vld [vmem:[%s1 + $0x18] sm:$0xff]
      %v1720 = vld [vmem:[%s1 + $0x20] sm:$0xf]
      %vm1721 = vcmask 293888
      %v1723 = vsel %vm1721, %v1684, 0
      %v1726 = vsel %vm1721, %v1685, 0
      %v1729 = vsel %vm1721, %v1686, 0
      %v1732 = vsel %vm1721, %v1687, 0
      %v1735 = vsel %vm1721, %v1688, 0
      %v1738 = vsel %vm1721, %v1689, 0
      %v1741 = vsel %vm1721, %v1690, 0
      %v1744 = vsel %vm1721, %v1691, 0
      %v1747 = vsel %vm1721, %v1692, 0
      %v1750 = vsel %vm1721, %v1693, 0
      %v1753 = vsel %vm1721, %v1694, 0
      %v1756 = vsel %vm1721, %v1695, 0
      %v1759 = vsel %vm1721, %v1696, 0
      %v1762 = vsel %vm1721, %v1697, 0
      %v1765 = vsel %vm1721, %v1698, 0
      %v1768 = vsel %vm1721, %v1699, 0
      %v1771 = vsel %vm1721, %v1700, 0
      %v1774 = vsel %vm1721, %v1701, 0
      %v1777 = vsel %vm1721, %v1702, 0
      %v1780 = vsel %vm1721, %v1703, 0
      %v1783 = vsel %vm1721, %v1704, 0
      %v1786 = vsel %vm1721, %v1705, 0
      %v1789 = vsel %vm1721, %v1706, 0
      %v1792 = vsel %vm1721, %v1707, 0
      %v1795 = vsel %vm1721, %v1708, 0
      %v1798 = vsel %vm1721, %v1709, 0
      %v1801 = vsel %vm1721, %v1710, 0
      %v1804 = vsel %vm1721, %v1711, 0
      %v1807 = vsel %vm1721, %v1712, 0
      %v1810 = vsel %vm1721, %v1713, 0
      %v1813 = vsel %vm1721, %v1714, 0
      %v1816 = vsel %vm1721, %v1715, 0
      %vm1818 = vcmask 1043456
      %v1820 = vsel %vm1818, %v1720, 0
      %1822 = vmatprep.subr.mxu0 0.0
      %1823 = vmatpush1.msra.mxu0 0.0
      %1824 = vmatprep.subr.mxu0 0.0
      %1825 = vmatpush1.msra.mxu0 0.0
      %1826 = vmatprep.subr.mxu0 0.0
      %1827 = vmatpush1.msra.mxu0 0.0
      %1828 = vmatprep.subr.mxu0 0.0
      %1829 = vmatpush1.msra.mxu0 0.0
      %1830 = vmatprep.subr.mxu0 0.0
      %1831 = vmatpush1.msra.mxu0 0.0
      %1832 = vmatprep.subr.mxu0 0.0
      %1833 = vmatpush1.msra.mxu0 0.0
      %1834 = vmatprep.subr.mxu0 0.0
      %1835 = vmatpush1.msra.mxu0 0.0
      %1836 = vmatprep.subr.mxu0 0.0
      %1837 = vmatpush1.msra.mxu0 0.0
      %1838 = vmatprep.subr.mxu0 0.0
      %1839 = vmatpush1.msra.mxu0 0.0
      %1840 = vmatprep.subr.mxu0 0.0
      %1841 = vmatpush1.msra.mxu0 0.0
      %1842 = vmatprep.subr.mxu0 0.0
      %1843 = vmatpush1.msra.mxu0 0.0
      %1844 = vmatprep.subr.mxu0 0.0
      %1845 = vmatpush1.msra.mxu0 %v1820
      %1846 = vmatprep.subr.mxu0 0.0
      %1847 = vmatpush1.msra.mxu0 %v1719
      %1848 = vmatprep.subr.mxu0 0.0
      %1849 = vmatpush1.msra.mxu0 %v1718
      %1850 = vmatprep.subr.mxu0 0.0
      %1851 = vmatpush1.msra.mxu0 %v1717
      %1852 = vmatprep.subr.mxu0 0.0
      %1853 = vmatpush1.msra.mxu0 %v1716
      %1854 = vmatprep.subr.mxu0 0.0
      %1855 = vmatpush2.msra.mxu0 0.0
      %1856 = vmatprep.subr.mxu0 0.0
      %1857 = vmatpush2.msra.mxu0 0.0
      %1858 = vmatprep.subr.mxu0 0.0
      %1859 = vmatpush2.msra.mxu0 0.0
      %1860 = vmatprep.subr.mxu0 0.0
      %1861 = vmatpush2.msra.mxu0 0.0
      %1862 = vmatprep.subr.mxu0 0.0
      %1863 = vmatpush2.msra.mxu0 0.0
      %1864 = vmatprep.subr.mxu0 0.0
      %1865 = vmatpush2.msra.mxu0 0.0
      %1866 = vmatprep.subr.mxu0 0.0
      %1867 = vmatpush2.msra.mxu0 0.0
      %1868 = vmatprep.subr.mxu0 0.0
      %1869 = vmatpush2.msra.mxu0 0.0
      %1870 = vmatprep.subr.mxu0 0.0
      %1871 = vmatpush2.msra.mxu0 0.0
      %1872 = vmatprep.subr.mxu0 0.0
      %1873 = vmatpush2.msra.mxu0 0.0
      %1874 = vmatprep.subr.mxu0 0.0
      %1875 = vmatpush2.msra.mxu0 0.0
      %1876 = vmatprep.subr.mxu0 0.0
      %1877 = vmatpush2.msra.mxu0 0.0
      %1878 = vmatprep.subr.mxu0 0.0
      %1879 = vmatpush2.msra.mxu0 0.0
      %1880 = vmatprep.subr.mxu0 0.0
      %1881 = vmatpush2.msra.mxu0 0.0
      %1882 = vmatprep.subr.mxu0 0.0
      %1883 = vmatpush2.msra.mxu0 0.0
      %1884 = vmatprep.subr.mxu0 0.0
      %1885 = vmatpush2.msra.mxu0 0.0
      %1886 = vmatprep.mubr.f32.mxu0 0.0
      %1887 = vmatmul.mubr.f32.gmra.mxu0 %v1723
      %v1888 = vpop.f32.mrf.mxu0
      %v1889 = vadd.f32 0.0, %v1888
      %v1890 = vpop.f32.mrf.mxu0
      %1891 = vmatprep.mubr.f32.mxu0 0.0
      %1892 = vmatmul.mubr.f32.gmra.mxu0 %v1726
      %v1893 = vpop.f32.mrf.mxu0
      %v1894 = vadd.f32 0.0, %v1893
      %v1895 = vpop.f32.mrf.mxu0
      %1896 = vmatprep.mubr.f32.mxu0 0.0
      %1897 = vmatmul.mubr.f32.gmra.mxu0 %v1729
      %v1898 = vpop.f32.mrf.mxu0
      %v1899 = vadd.f32 0.0, %v1898
      %v1900 = vpop.f32.mrf.mxu0
      %1901 = vmatprep.mubr.f32.mxu0 0.0
      %1902 = vmatmul.mubr.f32.gmra.mxu0 %v1732
      %v1903 = vpop.f32.mrf.mxu0
      %v1904 = vadd.f32 0.0, %v1903
      %v1905 = vpop.f32.mrf.mxu0
      %1906 = vmatprep.mubr.f32.mxu0 0.0
      %1907 = vmatmul.mubr.f32.gmra.mxu0 %v1735
      %v1908 = vpop.f32.mrf.mxu0
      %v1909 = vadd.f32 0.0, %v1908
      %v1910 = vpop.f32.mrf.mxu0
      %1911 = vmatprep.mubr.f32.mxu0 0.0
      %1912 = vmatmul.mubr.f32.gmra.mxu0 %v1738
      %v1913 = vpop.f32.mrf.mxu0
      %v1914 = vadd.f32 0.0, %v1913
      %v1915 = vpop.f32.mrf.mxu0
      %1916 = vmatprep.mubr.f32.mxu0 0.0
      %1917 = vmatmul.mubr.f32.gmra.mxu0 %v1741
      %v1918 = vpop.f32.mrf.mxu0
      %v1919 = vadd.f32 0.0, %v1918
      %v1920 = vpop.f32.mrf.mxu0
      %1921 = vmatprep.mubr.f32.mxu0 0.0
      %1922 = vmatmul.mubr.f32.gmra.mxu0 %v1744
      %v1923 = vpop.f32.mrf.mxu0
      %v1924 = vadd.f32 0.0, %v1923
      %v1925 = vpop.f32.mrf.mxu0
      %1926 = vmatprep.mubr.f32.mxu0 0.0
      %1927 = vmatmul.mubr.f32.gmra.mxu0 %v1747
      %v1928 = vpop.f32.mrf.mxu0
      %v1929 = vadd.f32 0.0, %v1928
      %v1930 = vpop.f32.mrf.mxu0
      %1931 = vmatprep.mubr.f32.mxu0 0.0
      %1932 = vmatmul.mubr.f32.gmra.mxu0 %v1750
      %v1933 = vpop.f32.mrf.mxu0
      %v1934 = vadd.f32 0.0, %v1933
      %v1935 = vpop.f32.mrf.mxu0
      %1936 = vmatprep.mubr.f32.mxu0 0.0
      %1937 = vmatmul.mubr.f32.gmra.mxu0 %v1753
      %v1938 = vpop.f32.mrf.mxu0
      %v1939 = vadd.f32 0.0, %v1938
      %v1940 = vpop.f32.mrf.mxu0
      %1941 = vmatprep.mubr.f32.mxu0 0.0
      %1942 = vmatmul.mubr.f32.gmra.mxu0 %v1756
      %v1943 = vpop.f32.mrf.mxu0
      %v1944 = vadd.f32 0.0, %v1943
      %v1945 = vpop.f32.mrf.mxu0
      %1946 = vmatprep.mubr.f32.mxu0 0.0
      %1947 = vmatmul.mubr.f32.gmra.mxu0 %v1759
      %v1948 = vpop.f32.mrf.mxu0
      %v1949 = vadd.f32 0.0, %v1948
      %v1950 = vpop.f32.mrf.mxu0
      %1951 = vmatprep.mubr.f32.mxu0 0.0
      %1952 = vmatmul.mubr.f32.gmra.mxu0 %v1762
      %v1953 = vpop.f32.mrf.mxu0
      %v1954 = vadd.f32 0.0, %v1953
      %v1955 = vpop.f32.mrf.mxu0
      %1956 = vmatprep.mubr.f32.mxu0 0.0
      %1957 = vmatmul.mubr.f32.gmra.mxu0 %v1765
      %v1958 = vpop.f32.mrf.mxu0
      %v1959 = vadd.f32 0.0, %v1958
      %v1960 = vpop.f32.mrf.mxu0
      %1961 = vmatprep.mubr.f32.mxu0 0.0
      %1962 = vmatmul.mubr.f32.gmra.mxu0 %v1768
      %v1963 = vpop.f32.mrf.mxu0
      %v1964 = vadd.f32 0.0, %v1963
      %v1965 = vpop.f32.mrf.mxu0
      %1966 = vmatprep.mubr.f32.mxu0 0.0
      %1967 = vmatmul.mubr.f32.gmra.mxu0 %v1771
      %v1968 = vpop.f32.mrf.mxu0
      %v1969 = vadd.f32 0.0, %v1968
      %v1970 = vpop.f32.mrf.mxu0
      %1971 = vmatprep.mubr.f32.mxu0 0.0
      %1972 = vmatmul.mubr.f32.gmra.mxu0 %v1774
      %v1973 = vpop.f32.mrf.mxu0
      %v1974 = vadd.f32 0.0, %v1973
      %v1975 = vpop.f32.mrf.mxu0
      %1976 = vmatprep.mubr.f32.mxu0 0.0
      %1977 = vmatmul.mubr.f32.gmra.mxu0 %v1777
      %v1978 = vpop.f32.mrf.mxu0
      %v1979 = vadd.f32 0.0, %v1978
      %v1980 = vpop.f32.mrf.mxu0
      %1981 = vmatprep.mubr.f32.mxu0 0.0
      %1982 = vmatmul.mubr.f32.gmra.mxu0 %v1780
      %v1983 = vpop.f32.mrf.mxu0
      %v1984 = vadd.f32 0.0, %v1983
      %v1985 = vpop.f32.mrf.mxu0
      %1986 = vmatprep.mubr.f32.mxu0 0.0
      %1987 = vmatmul.mubr.f32.gmra.mxu0 %v1783
      %v1988 = vpop.f32.mrf.mxu0
      %v1989 = vadd.f32 0.0, %v1988
      %v1990 = vpop.f32.mrf.mxu0
      %1991 = vmatprep.mubr.f32.mxu0 0.0
      %1992 = vmatmul.mubr.f32.gmra.mxu0 %v1786
      %v1993 = vpop.f32.mrf.mxu0
      %v1994 = vadd.f32 0.0, %v1993
      %v1995 = vpop.f32.mrf.mxu0
      %1996 = vmatprep.mubr.f32.mxu0 0.0
      %1997 = vmatmul.mubr.f32.gmra.mxu0 %v1789
      %v1998 = vpop.f32.mrf.mxu0
      %v1999 = vadd.f32 0.0, %v1998
      %v2000 = vpop.f32.mrf.mxu0
      %2001 = vmatprep.mubr.f32.mxu0 0.0
      %2002 = vmatmul.mubr.f32.gmra.mxu0 %v1792
      %v2003 = vpop.f32.mrf.mxu0
      %v2004 = vadd.f32 0.0, %v2003
      %v2005 = vpop.f32.mrf.mxu0
      %2006 = vmatprep.mubr.f32.mxu0 0.0
      %2007 = vmatmul.mubr.f32.gmra.mxu0 %v1795
      %v2008 = vpop.f32.mrf.mxu0
      %v2009 = vadd.f32 0.0, %v2008
      %v2010 = vpop.f32.mrf.mxu0
      %2011 = vmatprep.mubr.f32.mxu0 0.0
      %2012 = vmatmul.mubr.f32.gmra.mxu0 %v1798
      %v2013 = vpop.f32.mrf.mxu0
      %v2014 = vadd.f32 0.0, %v2013
      %v2015 = vpop.f32.mrf.mxu0
      %2016 = vmatprep.mubr.f32.mxu0 0.0
      %2017 = vmatmul.mubr.f32.gmra.mxu0 %v1801
      %v2018 = vpop.f32.mrf.mxu0
      %v2019 = vadd.f32 0.0, %v2018
      %v2020 = vpop.f32.mrf.mxu0
      %2021 = vmatprep.mubr.f32.mxu0 0.0
      %2022 = vmatmul.mubr.f32.gmra.mxu0 %v1804
      %v2023 = vpop.f32.mrf.mxu0
      %v2024 = vadd.f32 0.0, %v2023
      %v2025 = vpop.f32.mrf.mxu0
      %2026 = vmatprep.mubr.f32.mxu0 0.0
      %2027 = vmatmul.mubr.f32.gmra.mxu0 %v1807
      %v2028 = vpop.f32.mrf.mxu0
      %v2029 = vadd.f32 0.0, %v2028
      %v2030 = vpop.f32.mrf.mxu0
      %2031 = vmatprep.mubr.f32.mxu0 0.0
      %2032 = vmatmul.mubr.f32.gmra.mxu0 %v1810
      %v2033 = vpop.f32.mrf.mxu0
      %v2034 = vadd.f32 0.0, %v2033
      %v2035 = vpop.f32.mrf.mxu0
      %2036 = vmatprep.mubr.f32.mxu0 0.0
      %2037 = vmatmul.mubr.f32.gmra.mxu0 %v1813
      %v2038 = vpop.f32.mrf.mxu0
      %v2039 = vadd.f32 0.0, %v2038
      %v2040 = vpop.f32.mrf.mxu0
      %2041 = vmatprep.mubr.f32.mxu0 0.0
      %2042 = vmatmul.mubr.f32.gmra.mxu0 %v1816
      %v2043 = vpop.f32.mrf.mxu0
      %v2044 = vadd.f32 0.0, %v2043
      %v2045 = vpop.f32.mrf.mxu0
      %2046 = vdwg.mxu0
      %v2047 = vld [vmem:[%s3] sm:$0x1]
      %v2049 = vlaneseq
      %v2050 = vshrl.u32 %v2049, 7
      %v2051 = vsub.s32 0, %v2050
      %v2052 = vrot.slane %v2047, %v2051
      %v2054 = vmul.f32 %v1889, %v2052
      %v2055 = vmul.f32 %v1894, %v2052
      %v2056 = vmul.f32 %v1899, %v2052
      %v2057 = vmul.f32 %v1904, %v2052
      %v2058 = vmul.f32 %v1909, %v2052
      %v2059 = vmul.f32 %v1914, %v2052
      %v2060 = vmul.f32 %v1919, %v2052
      %v2061 = vmul.f32 %v1924, %v2052
      %v2062 = vmul.f32 %v1929, %v2052
      %v2063 = vmul.f32 %v1934, %v2052
      %v2064 = vmul.f32 %v1939, %v2052
      %v2065 = vmul.f32 %v1944, %v2052
      %v2066 = vmul.f32 %v1949, %v2052
      %v2067 = vmul.f32 %v1954, %v2052
      %v2068 = vmul.f32 %v1959, %v2052
      %v2069 = vmul.f32 %v1964, %v2052
      %v2070 = vmul.f32 %v1969, %v2052
      %v2071 = vmul.f32 %v1974, %v2052
      %v2072 = vmul.f32 %v1979, %v2052
      %v2073 = vmul.f32 %v1984, %v2052
      %v2074 = vmul.f32 %v1989, %v2052
      %v2075 = vmul.f32 %v1994, %v2052
      %v2076 = vmul.f32 %v1999, %v2052
      %v2077 = vmul.f32 %v2004, %v2052
      %v2078 = vmul.f32 %v2009, %v2052
      %v2079 = vmul.f32 %v2014, %v2052
      %v2080 = vmul.f32 %v2019, %v2052
      %v2081 = vmul.f32 %v2024, %v2052
      %v2082 = vmul.f32 %v2029, %v2052
      %v2083 = vmul.f32 %v2034, %v2052
      %v2084 = vmul.f32 %v2039, %v2052
      %v2085 = vmul.f32 %v2044, %v2052
      %v2086 = vld [vmem:[%s4] sm:$0x1]
      %v2088 = vlaneseq
      %v2089 = vshrl.u32 %v2088, 7
      %v2090 = vsub.s32 0, %v2089
      %v2091 = vrot.slane %v2086, %v2090
      %v2093 = vadd.f32 %v2054, %v2091
      %v2094 = vadd.f32 %v2055, %v2091
      %v2095 = vadd.f32 %v2056, %v2091
      %v2096 = vadd.f32 %v2057, %v2091
      %v2097 = vadd.f32 %v2058, %v2091
      %v2098 = vadd.f32 %v2059, %v2091
      %v2099 = vadd.f32 %v2060, %v2091
      %v2100 = vadd.f32 %v2061, %v2091
      %v2101 = vadd.f32 %v2062, %v2091
      %v2102 = vadd.f32 %v2063, %v2091
      %v2103 = vadd.f32 %v2064, %v2091
      %v2104 = vadd.f32 %v2065, %v2091
      %v2105 = vadd.f32 %v2066, %v2091
      %v2106 = vadd.f32 %v2067, %v2091
      %v2107 = vadd.f32 %v2068, %v2091
      %v2108 = vadd.f32 %v2069, %v2091
      %v2109 = vadd.f32 %v2070, %v2091
      %v2110 = vadd.f32 %v2071, %v2091
      %v2111 = vadd.f32 %v2072, %v2091
      %v2112 = vadd.f32 %v2073, %v2091
      %v2113 = vadd.f32 %v2074, %v2091
      %v2114 = vadd.f32 %v2075, %v2091
      %v2115 = vadd.f32 %v2076, %v2091
      %v2116 = vadd.f32 %v2077, %v2091
      %v2117 = vadd.f32 %v2078, %v2091
      %v2118 = vadd.f32 %v2079, %v2091
      %v2119 = vadd.f32 %v2080, %v2091
      %v2120 = vadd.f32 %v2081, %v2091
      %v2121 = vadd.f32 %v2082, %v2091
      %v2122 = vadd.f32 %v2083, %v2091
      %v2123 = vadd.f32 %v2084, %v2091
      %v2124 = vadd.f32 %v2085, %v2091
      %v2125 = vmax.f32 %v2093, 0.0
      %v2126 = vmax.f32 %v2094, 0.0
      %v2127 = vmax.f32 %v2095, 0.0
      %v2128 = vmax.f32 %v2096, 0.0
      %v2129 = vmax.f32 %v2097, 0.0
      %v2130 = vmax.f32 %v2098, 0.0
      %v2131 = vmax.f32 %v2099, 0.0
      %v2132 = vmax.f32 %v2100, 0.0
      %v2133 = vmax.f32 %v2101, 0.0
      %v2134 = vmax.f32 %v2102, 0.0
      %v2135 = vmax.f32 %v2103, 0.0
      %v2136 = vmax.f32 %v2104, 0.0
      %v2137 = vmax.f32 %v2105, 0.0
      %v2138 = vmax.f32 %v2106, 0.0
      %v2139 = vmax.f32 %v2107, 0.0
      %v2140 = vmax.f32 %v2108, 0.0
      %v2141 = vmax.f32 %v2109, 0.0
      %v2142 = vmax.f32 %v2110, 0.0
      %v2143 = vmax.f32 %v2111, 0.0
      %v2144 = vmax.f32 %v2112, 0.0
      %v2145 = vmax.f32 %v2113, 0.0
      %v2146 = vmax.f32 %v2114, 0.0
      %v2147 = vmax.f32 %v2115, 0.0
      %v2148 = vmax.f32 %v2116, 0.0
      %v2149 = vmax.f32 %v2117, 0.0
      %v2150 = vmax.f32 %v2118, 0.0
      %v2151 = vmax.f32 %v2119, 0.0
      %v2152 = vmax.f32 %v2120, 0.0
      %v2153 = vmax.f32 %v2121, 0.0
      %v2154 = vmax.f32 %v2122, 0.0
      %v2155 = vmax.f32 %v2123, 0.0
      %v2156 = vmax.f32 %v2124, 0.0
      %v2189 = vrot.slane %v2125, 7
      %v2190 = vrot.slane %v2126, 7
      %v2191 = vsel %vm344, %v2189, %v2190
      %v2192 = vrot.slane %v2127, 7
      %v2193 = vrot.slane %v2128, 7
      %v2194 = vsel %vm344, %v2192, %v2193
      %v2195 = vrot.slane %v2129, 7
      %v2196 = vrot.slane %v2130, 7
      %v2197 = vsel %vm344, %v2195, %v2196
      %v2198 = vrot.slane %v2131, 7
      %v2199 = vrot.slane %v2132, 7
      %v2200 = vsel %vm344, %v2198, %v2199
      %v2201 = vrot.slane %v2133, 7
      %v2202 = vrot.slane %v2134, 7
      %v2203 = vsel %vm344, %v2201, %v2202
      %v2204 = vrot.slane %v2135, 7
      %v2205 = vrot.slane %v2136, 7
      %v2206 = vsel %vm344, %v2204, %v2205
      %v2207 = vrot.slane %v2137, 7
      %v2208 = vrot.slane %v2138, 7
      %v2209 = vsel %vm344, %v2207, %v2208
      %v2210 = vrot.slane %v2139, 7
      %v2211 = vrot.slane %v2140, 7
      %v2212 = vsel %vm344, %v2210, %v2211
      %v2213 = vrot.slane %v2141, 7
      %v2214 = vrot.slane %v2142, 7
      %v2215 = vsel %vm344, %v2213, %v2214
      %v2216 = vrot.slane %v2143, 7
      %v2217 = vrot.slane %v2144, 7
      %v2218 = vsel %vm344, %v2216, %v2217
      %v2219 = vrot.slane %v2145, 7
      %v2220 = vrot.slane %v2146, 7
      %v2221 = vsel %vm344, %v2219, %v2220
      %v2222 = vrot.slane %v2147, 7
      %v2223 = vrot.slane %v2148, 7
      %v2224 = vsel %vm344, %v2222, %v2223
      %v2225 = vrot.slane %v2149, 7
      %v2226 = vrot.slane %v2150, 7
      %v2227 = vsel %vm344, %v2225, %v2226
      %v2228 = vrot.slane %v2151, 7
      %v2229 = vrot.slane %v2152, 7
      %v2230 = vsel %vm344, %v2228, %v2229
      %v2231 = vrot.slane %v2153, 7
      %v2232 = vrot.slane %v2154, 7
      %v2233 = vsel %vm344, %v2231, %v2232
      %v2234 = vrot.slane %v2155, 7
      %v2235 = vrot.slane %v2156, 7
      %v2236 = vsel %vm344, %v2234, %v2235
      %v2284 = vsel %vm344, 0.0, %v2189
      %v2285 = vsel %vm344, 0.0, %v2192
      %v2286 = vsel %vm344, 0.0, %v2195
      %v2287 = vsel %vm344, 0.0, %v2198
      %v2288 = vsel %vm344, 0.0, %v2201
      %v2289 = vsel %vm344, 0.0, %v2204
      %v2290 = vsel %vm344, 0.0, %v2207
      %v2291 = vsel %vm344, 0.0, %v2210
      %v2292 = vsel %vm344, 0.0, %v2213
      %v2293 = vsel %vm344, 0.0, %v2216
      %v2294 = vsel %vm344, 0.0, %v2219
      %v2295 = vsel %vm344, 0.0, %v2222
      %v2296 = vsel %vm344, 0.0, %v2225
      %v2297 = vsel %vm344, 0.0, %v2228
      %v2298 = vsel %vm344, 0.0, %v2231
      %v2299 = vsel %vm344, 0.0, %v2234
      %v2300 = vsel %vm344, %v2190, 0.0
      %v2301 = vsel %vm344, %v2193, 0.0
      %v2302 = vsel %vm344, %v2196, 0.0
      %v2303 = vsel %vm344, %v2199, 0.0
      %v2304 = vsel %vm344, %v2202, 0.0
      %v2305 = vsel %vm344, %v2205, 0.0
      %v2306 = vsel %vm344, %v2208, 0.0
      %v2307 = vsel %vm344, %v2211, 0.0
      %v2308 = vsel %vm344, %v2214, 0.0
      %v2309 = vsel %vm344, %v2217, 0.0
      %v2310 = vsel %vm344, %v2220, 0.0
      %v2311 = vsel %vm344, %v2223, 0.0
      %v2312 = vsel %vm344, %v2226, 0.0
      %v2313 = vsel %vm344, %v2229, 0.0
      %v2314 = vsel %vm344, %v2232, 0.0
      %v2315 = vsel %vm344, %v2235, 0.0
      %v2346 = vrot.slane %v2284, 1
      %v2347 = vrot.slane %v2191, 1
      %v2348 = vsel %vm510, %v2346, %v2347
      %v2349 = vrot.slane %v2300, 1
      %v2350 = vsel %vm510, %v2347, %v2349
      %v2351 = vrot.slane %v2285, 1
      %v2352 = vrot.slane %v2194, 1
      %v2353 = vsel %vm510, %v2351, %v2352
      %v2354 = vrot.slane %v2301, 1
      %v2355 = vsel %vm510, %v2352, %v2354
      %v2356 = vrot.slane %v2286, 1
      %v2357 = vrot.slane %v2197, 1
      %v2358 = vsel %vm510, %v2356, %v2357
      %v2359 = vrot.slane %v2302, 1
      %v2360 = vsel %vm510, %v2357, %v2359
      %v2361 = vrot.slane %v2287, 1
      %v2362 = vrot.slane %v2200, 1
      %v2363 = vsel %vm510, %v2361, %v2362
      %v2364 = vrot.slane %v2303, 1
      %v2365 = vsel %vm510, %v2362, %v2364
      %v2366 = vrot.slane %v2288, 1
      %v2367 = vrot.slane %v2203, 1
      %v2368 = vsel %vm510, %v2366, %v2367
      %v2369 = vrot.slane %v2304, 1
      %v2370 = vsel %vm510, %v2367, %v2369
      %v2371 = vrot.slane %v2289, 1
      %v2372 = vrot.slane %v2206, 1
      %v2373 = vsel %vm510, %v2371, %v2372
      %v2374 = vrot.slane %v2305, 1
      %v2375 = vsel %vm510, %v2372, %v2374
      %v2376 = vrot.slane %v2290, 1
      %v2377 = vrot.slane %v2209, 1
      %v2378 = vsel %vm510, %v2376, %v2377
      %v2379 = vrot.slane %v2306, 1
      %v2380 = vsel %vm510, %v2377, %v2379
      %v2381 = vrot.slane %v2291, 1
      %v2382 = vrot.slane %v2212, 1
      %v2383 = vsel %vm510, %v2381, %v2382
      %v2384 = vrot.slane %v2307, 1
      %v2385 = vsel %vm510, %v2382, %v2384
      %v2386 = vrot.slane %v2292, 1
      %v2387 = vrot.slane %v2215, 1
      %v2388 = vsel %vm510, %v2386, %v2387
      %v2389 = vrot.slane %v2308, 1
      %v2390 = vsel %vm510, %v2387, %v2389
      %v2391 = vrot.slane %v2293, 1
      %v2392 = vrot.slane %v2218, 1
      %v2393 = vsel %vm510, %v2391, %v2392
      %v2394 = vrot.slane %v2309, 1
      %v2395 = vsel %vm510, %v2392, %v2394
      %v2396 = vrot.slane %v2294, 1
      %v2397 = vrot.slane %v2221, 1
      %v2398 = vsel %vm510, %v2396, %v2397
      %v2399 = vrot.slane %v2310, 1
      %v2400 = vsel %vm510, %v2397, %v2399
      %v2401 = vrot.slane %v2295, 1
      %v2402 = vrot.slane %v2224, 1
      %v2403 = vsel %vm510, %v2401, %v2402
      %v2404 = vrot.slane %v2311, 1
      %v2405 = vsel %vm510, %v2402, %v2404
      %v2406 = vrot.slane %v2296, 1
      %v2407 = vrot.slane %v2227, 1
      %v2408 = vsel %vm510, %v2406, %v2407
      %v2409 = vrot.slane %v2312, 1
      %v2410 = vsel %vm510, %v2407, %v2409
      %v2411 = vrot.slane %v2297, 1
      %v2412 = vrot.slane %v2230, 1
      %v2413 = vsel %vm510, %v2411, %v2412
      %v2414 = vrot.slane %v2313, 1
      %v2415 = vsel %vm510, %v2412, %v2414
      %v2416 = vrot.slane %v2298, 1
      %v2417 = vrot.slane %v2233, 1
      %v2418 = vsel %vm510, %v2416, %v2417
      %v2419 = vrot.slane %v2314, 1
      %v2420 = vsel %vm510, %v2417, %v2419
      %2421 = vrot.lane.b32.xlu0 %v2348, 4
      %v2422 = vpop.permute.xlu0 %2421
      %2423 = vrot.lane.b32.xlu0 %v2350, 4
      %v2424 = vpop.permute.xlu0 %2423
      %2425 = vrot.lane.b32.xlu0 %v2353, 4
      %v2426 = vpop.permute.xlu0 %2425
      %2427 = vrot.lane.b32.xlu0 %v2355, 4
      %v2428 = vpop.permute.xlu0 %2427
      %2429 = vrot.lane.b32.xlu0 %v2358, 4
      %v2430 = vpop.permute.xlu0 %2429
      %2431 = vrot.lane.b32.xlu0 %v2360, 4
      %v2432 = vpop.permute.xlu0 %2431
      %2433 = vrot.lane.b32.xlu0 %v2363, 4
      %v2434 = vpop.permute.xlu0 %2433
      %2435 = vrot.lane.b32.xlu0 %v2365, 4
      %v2436 = vpop.permute.xlu0 %2435
      %2437 = vrot.lane.b32.xlu0 %v2368, 4
      %v2438 = vpop.permute.xlu0 %2437
      %2439 = vrot.lane.b32.xlu0 %v2370, 4
      %v2440 = vpop.permute.xlu0 %2439
      %2441 = vrot.lane.b32.xlu0 %v2373, 4
      %v2442 = vpop.permute.xlu0 %2441
      %2443 = vrot.lane.b32.xlu0 %v2375, 4
      %v2444 = vpop.permute.xlu0 %2443
      %2445 = vrot.lane.b32.xlu0 %v2378, 4
      %v2446 = vpop.permute.xlu0 %2445
      %2447 = vrot.lane.b32.xlu0 %v2380, 4
      %v2448 = vpop.permute.xlu0 %2447
      %2449 = vrot.lane.b32.xlu0 %v2383, 4
      %v2450 = vpop.permute.xlu0 %2449
      %2451 = vrot.lane.b32.xlu0 %v2385, 4
      %v2452 = vpop.permute.xlu0 %2451
      %2453 = vrot.lane.b32.xlu0 %v2388, 4
      %v2454 = vpop.permute.xlu0 %2453
      %2455 = vrot.lane.b32.xlu0 %v2390, 4
      %v2456 = vpop.permute.xlu0 %2455
      %2457 = vrot.lane.b32.xlu0 %v2393, 4
      %v2458 = vpop.permute.xlu0 %2457
      %2459 = vrot.lane.b32.xlu0 %v2395, 4
      %v2460 = vpop.permute.xlu0 %2459
      %2461 = vrot.lane.b32.xlu0 %v2398, 4
      %v2462 = vpop.permute.xlu0 %2461
      %2463 = vrot.lane.b32.xlu0 %v2400, 4
      %v2464 = vpop.permute.xlu0 %2463
      %2465 = vrot.lane.b32.xlu0 %v2403, 4
      %v2466 = vpop.permute.xlu0 %2465
      %2467 = vrot.lane.b32.xlu0 %v2405, 4
      %v2468 = vpop.permute.xlu0 %2467
      %2469 = vrot.lane.b32.xlu0 %v2408, 4
      %v2470 = vpop.permute.xlu0 %2469
      %2471 = vrot.lane.b32.xlu0 %v2410, 4
      %v2472 = vpop.permute.xlu0 %2471
      %2473 = vrot.lane.b32.xlu0 %v2413, 4
      %v2474 = vpop.permute.xlu0 %2473
      %2475 = vrot.lane.b32.xlu0 %v2415, 4
      %v2476 = vpop.permute.xlu0 %2475
      %2477 = vrot.lane.b32.xlu0 %v2418, 4
      %v2478 = vpop.permute.xlu0 %2477
      %2479 = vrot.lane.b32.xlu0 %v2420, 4
      %v2480 = vpop.permute.xlu0 %2479
      %v2511 = vrot.slane %v2284, 2
      %v2512 = vrot.slane %v2191, 2
      %v2513 = vsel %vm687, %v2511, %v2512
      %v2514 = vrot.slane %v2300, 2
      %v2515 = vsel %vm687, %v2512, %v2514
      %v2516 = vrot.slane %v2285, 2
      %v2517 = vrot.slane %v2194, 2
      %v2518 = vsel %vm687, %v2516, %v2517
      %v2519 = vrot.slane %v2301, 2
      %v2520 = vsel %vm687, %v2517, %v2519
      %v2521 = vrot.slane %v2286, 2
      %v2522 = vrot.slane %v2197, 2
      %v2523 = vsel %vm687, %v2521, %v2522
      %v2524 = vrot.slane %v2302, 2
      %v2525 = vsel %vm687, %v2522, %v2524
      %v2526 = vrot.slane %v2287, 2
      %v2527 = vrot.slane %v2200, 2
      %v2528 = vsel %vm687, %v2526, %v2527
      %v2529 = vrot.slane %v2303, 2
      %v2530 = vsel %vm687, %v2527, %v2529
      %v2531 = vrot.slane %v2288, 2
      %v2532 = vrot.slane %v2203, 2
      %v2533 = vsel %vm687, %v2531, %v2532
      %v2534 = vrot.slane %v2304, 2
      %v2535 = vsel %vm687, %v2532, %v2534
      %v2536 = vrot.slane %v2289, 2
      %v2537 = vrot.slane %v2206, 2
      %v2538 = vsel %vm687, %v2536, %v2537
      %v2539 = vrot.slane %v2305, 2
      %v2540 = vsel %vm687, %v2537, %v2539
      %v2541 = vrot.slane %v2290, 2
      %v2542 = vrot.slane %v2209, 2
      %v2543 = vsel %vm687, %v2541, %v2542
      %v2544 = vrot.slane %v2306, 2
      %v2545 = vsel %vm687, %v2542, %v2544
      %v2546 = vrot.slane %v2291, 2
      %v2547 = vrot.slane %v2212, 2
      %v2548 = vsel %vm687, %v2546, %v2547
      %v2549 = vrot.slane %v2307, 2
      %v2550 = vsel %vm687, %v2547, %v2549
      %v2551 = vrot.slane %v2292, 2
      %v2552 = vrot.slane %v2215, 2
      %v2553 = vsel %vm687, %v2551, %v2552
      %v2554 = vrot.slane %v2308, 2
      %v2555 = vsel %vm687, %v2552, %v2554
      %v2556 = vrot.slane %v2293, 2
      %v2557 = vrot.slane %v2218, 2
      %v2558 = vsel %vm687, %v2556, %v2557
      %v2559 = vrot.slane %v2309, 2
      %v2560 = vsel %vm687, %v2557, %v2559
      %v2561 = vrot.slane %v2294, 2
      %v2562 = vrot.slane %v2221, 2
      %v2563 = vsel %vm687, %v2561, %v2562
      %v2564 = vrot.slane %v2310, 2
      %v2565 = vsel %vm687, %v2562, %v2564
      %v2566 = vrot.slane %v2295, 2
      %v2567 = vrot.slane %v2224, 2
      %v2568 = vsel %vm687, %v2566, %v2567
      %v2569 = vrot.slane %v2311, 2
      %v2570 = vsel %vm687, %v2567, %v2569
      %v2571 = vrot.slane %v2296, 2
      %v2572 = vrot.slane %v2227, 2
      %v2573 = vsel %vm687, %v2571, %v2572
      %v2574 = vrot.slane %v2312, 2
      %v2575 = vsel %vm687, %v2572, %v2574
      %v2576 = vrot.slane %v2297, 2
      %v2577 = vrot.slane %v2230, 2
      %v2578 = vsel %vm687, %v2576, %v2577
      %v2579 = vrot.slane %v2313, 2
      %v2580 = vsel %vm687, %v2577, %v2579
      %v2581 = vrot.slane %v2298, 2
      %v2582 = vrot.slane %v2233, 2
      %v2583 = vsel %vm687, %v2581, %v2582
      %v2584 = vrot.slane %v2314, 2
      %v2585 = vsel %vm687, %v2582, %v2584
      %2586 = vrot.lane.b32.xlu0 %v2513, 8
      %v2587 = vpop.permute.xlu0 %2586
      %2588 = vrot.lane.b32.xlu0 %v2515, 8
      %v2589 = vpop.permute.xlu0 %2588
      %2590 = vrot.lane.b32.xlu0 %v2518, 8
      %v2591 = vpop.permute.xlu0 %2590
      %2592 = vrot.lane.b32.xlu0 %v2520, 8
      %v2593 = vpop.permute.xlu0 %2592
      %2594 = vrot.lane.b32.xlu0 %v2523, 8
      %v2595 = vpop.permute.xlu0 %2594
      %2596 = vrot.lane.b32.xlu0 %v2525, 8
      %v2597 = vpop.permute.xlu0 %2596
      %2598 = vrot.lane.b32.xlu0 %v2528, 8
      %v2599 = vpop.permute.xlu0 %2598
      %2600 = vrot.lane.b32.xlu0 %v2530, 8
      %v2601 = vpop.permute.xlu0 %2600
      %2602 = vrot.lane.b32.xlu0 %v2533, 8
      %v2603 = vpop.permute.xlu0 %2602
      %2604 = vrot.lane.b32.xlu0 %v2535, 8
      %v2605 = vpop.permute.xlu0 %2604
      %2606 = vrot.lane.b32.xlu0 %v2538, 8
      %v2607 = vpop.permute.xlu0 %2606
      %2608 = vrot.lane.b32.xlu0 %v2540, 8
      %v2609 = vpop.permute.xlu0 %2608
      %2610 = vrot.lane.b32.xlu0 %v2543, 8
      %v2611 = vpop.permute.xlu0 %2610
      %2612 = vrot.lane.b32.xlu0 %v2545, 8
      %v2613 = vpop.permute.xlu0 %2612
      %2614 = vrot.lane.b32.xlu0 %v2548, 8
      %v2615 = vpop.permute.xlu0 %2614
      %2616 = vrot.lane.b32.xlu0 %v2550, 8
      %v2617 = vpop.permute.xlu0 %2616
      %2618 = vrot.lane.b32.xlu0 %v2553, 8
      %v2619 = vpop.permute.xlu0 %2618
      %2620 = vrot.lane.b32.xlu0 %v2555, 8
      %v2621 = vpop.permute.xlu0 %2620
      %2622 = vrot.lane.b32.xlu0 %v2558, 8
      %v2623 = vpop.permute.xlu0 %2622
      %2624 = vrot.lane.b32.xlu0 %v2560, 8
      %v2625 = vpop.permute.xlu0 %2624
      %2626 = vrot.lane.b32.xlu0 %v2563, 8
      %v2627 = vpop.permute.xlu0 %2626
      %2628 = vrot.lane.b32.xlu0 %v2565, 8
      %v2629 = vpop.permute.xlu0 %2628
      %2630 = vrot.lane.b32.xlu0 %v2568, 8
      %v2631 = vpop.permute.xlu0 %2630
      %2632 = vrot.lane.b32.xlu0 %v2570, 8
      %v2633 = vpop.permute.xlu0 %2632
      %2634 = vrot.lane.b32.xlu0 %v2573, 8
      %v2635 = vpop.permute.xlu0 %2634
      %2636 = vrot.lane.b32.xlu0 %v2575, 8
      %v2637 = vpop.permute.xlu0 %2636
      %2638 = vrot.lane.b32.xlu0 %v2578, 8
      %v2639 = vpop.permute.xlu0 %2638
      %2640 = vrot.lane.b32.xlu0 %v2580, 8
      %v2641 = vpop.permute.xlu0 %2640
      %2642 = vrot.lane.b32.xlu0 %v2583, 8
      %v2643 = vpop.permute.xlu0 %2642
      %2644 = vrot.lane.b32.xlu0 %v2585, 8
      %v2645 = vpop.permute.xlu0 %2644
      %2677 = vrot.lane.b32.xlu0 %v2284, 12
      %v2678 = vpop.permute.xlu0 %2677
      %2679 = vrot.lane.b32.xlu0 %v2191, 12
      %v2680 = vpop.permute.xlu0 %2679
      %2681 = vrot.lane.b32.xlu0 %v2285, 12
      %v2682 = vpop.permute.xlu0 %2681
      %2683 = vrot.lane.b32.xlu0 %v2194, 12
      %v2684 = vpop.permute.xlu0 %2683
      %2685 = vrot.lane.b32.xlu0 %v2286, 12
      %v2686 = vpop.permute.xlu0 %2685
      %2687 = vrot.lane.b32.xlu0 %v2197, 12
      %v2688 = vpop.permute.xlu0 %2687
      %2689 = vrot.lane.b32.xlu0 %v2287, 12
      %v2690 = vpop.permute.xlu0 %2689
      %2691 = vrot.lane.b32.xlu0 %v2200, 12
      %v2692 = vpop.permute.xlu0 %2691
      %2693 = vrot.lane.b32.xlu0 %v2288, 12
      %v2694 = vpop.permute.xlu0 %2693
      %2695 = vrot.lane.b32.xlu0 %v2203, 12
      %v2696 = vpop.permute.xlu0 %2695
      %2697 = vrot.lane.b32.xlu0 %v2289, 12
      %v2698 = vpop.permute.xlu0 %2697
      %2699 = vrot.lane.b32.xlu0 %v2206, 12
      %v2700 = vpop.permute.xlu0 %2699
      %2701 = vrot.lane.b32.xlu0 %v2290, 12
      %v2702 = vpop.permute.xlu0 %2701
      %2703 = vrot.lane.b32.xlu0 %v2209, 12
      %v2704 = vpop.permute.xlu0 %2703
      %2705 = vrot.lane.b32.xlu0 %v2291, 12
      %v2706 = vpop.permute.xlu0 %2705
      %2707 = vrot.lane.b32.xlu0 %v2212, 12
      %v2708 = vpop.permute.xlu0 %2707
      %2709 = vrot.lane.b32.xlu0 %v2292, 12
      %v2710 = vpop.permute.xlu0 %2709
      %2711 = vrot.lane.b32.xlu0 %v2215, 12
      %v2712 = vpop.permute.xlu0 %2711
      %2713 = vrot.lane.b32.xlu0 %v2293, 12
      %v2714 = vpop.permute.xlu0 %2713
      %2715 = vrot.lane.b32.xlu0 %v2218, 12
      %v2716 = vpop.permute.xlu0 %2715
      %2717 = vrot.lane.b32.xlu0 %v2294, 12
      %v2718 = vpop.permute.xlu0 %2717
      %2719 = vrot.lane.b32.xlu0 %v2221, 12
      %v2720 = vpop.permute.xlu0 %2719
      %2721 = vrot.lane.b32.xlu0 %v2295, 12
      %v2722 = vpop.permute.xlu0 %2721
      %2723 = vrot.lane.b32.xlu0 %v2224, 12
      %v2724 = vpop.permute.xlu0 %2723
      %2725 = vrot.lane.b32.xlu0 %v2296, 12
      %v2726 = vpop.permute.xlu0 %2725
      %2727 = vrot.lane.b32.xlu0 %v2227, 12
      %v2728 = vpop.permute.xlu0 %2727
      %2729 = vrot.lane.b32.xlu0 %v2297, 12
      %v2730 = vpop.permute.xlu0 %2729
      %2731 = vrot.lane.b32.xlu0 %v2230, 12
      %v2732 = vpop.permute.xlu0 %2731
      %2733 = vrot.lane.b32.xlu0 %v2298, 12
      %v2734 = vpop.permute.xlu0 %2733
      %2735 = vrot.lane.b32.xlu0 %v2233, 12
      %v2736 = vpop.permute.xlu0 %2735
      %2737 = vrot.lane.b32.xlu0 %v2299, 12
      %v2738 = vpop.permute.xlu0 %2737
      %2739 = vrot.lane.b32.xlu0 %v2236, 12
      %v2740 = vpop.permute.xlu0 %2739
      %v2774 = vrot.slane %v2299, 1
      %v2775 = vrot.slane %v2236, 1
      %v2776 = vsel %vm510, %v2774, %v2775
      %v2777 = vrot.slane %v2315, 1
      %v2778 = vsel %vm510, %v2775, %v2777
      %2779 = vrot.lane.b32.xlu0 %v2348, 16
      %v2780 = vpop.permute.xlu0 %2779
      %2781 = vrot.lane.b32.xlu0 %v2350, 16
      %v2782 = vpop.permute.xlu0 %2781
      %2783 = vrot.lane.b32.xlu0 %v2353, 16
      %v2784 = vpop.permute.xlu0 %2783
      %2785 = vrot.lane.b32.xlu0 %v2355, 16
      %v2786 = vpop.permute.xlu0 %2785
      %2787 = vrot.lane.b32.xlu0 %v2358, 16
      %v2788 = vpop.permute.xlu0 %2787
      %2789 = vrot.lane.b32.xlu0 %v2360, 16
      %v2790 = vpop.permute.xlu0 %2789
      %2791 = vrot.lane.b32.xlu0 %v2363, 16
      %v2792 = vpop.permute.xlu0 %2791
      %2793 = vrot.lane.b32.xlu0 %v2365, 16
      %v2794 = vpop.permute.xlu0 %2793
      %2795 = vrot.lane.b32.xlu0 %v2368, 16
      %v2796 = vpop.permute.xlu0 %2795
      %2797 = vrot.lane.b32.xlu0 %v2370, 16
      %v2798 = vpop.permute.xlu0 %2797
      %2799 = vrot.lane.b32.xlu0 %v2373, 16
      %v2800 = vpop.permute.xlu0 %2799
      %2801 = vrot.lane.b32.xlu0 %v2375, 16
      %v2802 = vpop.permute.xlu0 %2801
      %2803 = vrot.lane.b32.xlu0 %v2378, 16
      %v2804 = vpop.permute.xlu0 %2803
      %2805 = vrot.lane.b32.xlu0 %v2380, 16
      %v2806 = vpop.permute.xlu0 %2805
      %2807 = vrot.lane.b32.xlu0 %v2383, 16
      %v2808 = vpop.permute.xlu0 %2807
      %2809 = vrot.lane.b32.xlu0 %v2385, 16
      %v2810 = vpop.permute.xlu0 %2809
      %2811 = vrot.lane.b32.xlu0 %v2388, 16
      %v2812 = vpop.permute.xlu0 %2811
      %2813 = vrot.lane.b32.xlu0 %v2390, 16
      %v2814 = vpop.permute.xlu0 %2813
      %2815 = vrot.lane.b32.xlu0 %v2393, 16
      %v2816 = vpop.permute.xlu0 %2815
      %2817 = vrot.lane.b32.xlu0 %v2395, 16
      %v2818 = vpop.permute.xlu0 %2817
      %2819 = vrot.lane.b32.xlu0 %v2398, 16
      %v2820 = vpop.permute.xlu0 %2819
      %2821 = vrot.lane.b32.xlu0 %v2400, 16
      %v2822 = vpop.permute.xlu0 %2821
      %2823 = vrot.lane.b32.xlu0 %v2403, 16
      %v2824 = vpop.permute.xlu0 %2823
      %2825 = vrot.lane.b32.xlu0 %v2405, 16
      %v2826 = vpop.permute.xlu0 %2825
      %2827 = vrot.lane.b32.xlu0 %v2408, 16
      %v2828 = vpop.permute.xlu0 %2827
      %2829 = vrot.lane.b32.xlu0 %v2410, 16
      %v2830 = vpop.permute.xlu0 %2829
      %2831 = vrot.lane.b32.xlu0 %v2413, 16
      %v2832 = vpop.permute.xlu0 %2831
      %2833 = vrot.lane.b32.xlu0 %v2415, 16
      %v2834 = vpop.permute.xlu0 %2833
      %2835 = vrot.lane.b32.xlu0 %v2418, 16
      %v2836 = vpop.permute.xlu0 %2835
      %2837 = vrot.lane.b32.xlu0 %v2420, 16
      %v2838 = vpop.permute.xlu0 %2837
      %2839 = vrot.lane.b32.xlu0 %v2776, 16
      %v2840 = vpop.permute.xlu0 %2839
      %2841 = vrot.lane.b32.xlu0 %v2778, 16
      %v2842 = vpop.permute.xlu0 %2841
      %v2875 = vrot.slane %v2299, 2
      %v2876 = vrot.slane %v2236, 2
      %v2877 = vsel %vm687, %v2875, %v2876
      %v2878 = vrot.slane %v2315, 2
      %v2879 = vsel %vm687, %v2876, %v2878
      %2880 = vrot.lane.b32.xlu0 %v2513, 20
      %v2881 = vpop.permute.xlu0 %2880
      %2882 = vrot.lane.b32.xlu0 %v2515, 20
      %v2883 = vpop.permute.xlu0 %2882
      %2884 = vrot.lane.b32.xlu0 %v2518, 20
      %v2885 = vpop.permute.xlu0 %2884
      %2886 = vrot.lane.b32.xlu0 %v2520, 20
      %v2887 = vpop.permute.xlu0 %2886
      %2888 = vrot.lane.b32.xlu0 %v2523, 20
      %v2889 = vpop.permute.xlu0 %2888
      %2890 = vrot.lane.b32.xlu0 %v2525, 20
      %v2891 = vpop.permute.xlu0 %2890
      %2892 = vrot.lane.b32.xlu0 %v2528, 20
      %v2893 = vpop.permute.xlu0 %2892
      %2894 = vrot.lane.b32.xlu0 %v2530, 20
      %v2895 = vpop.permute.xlu0 %2894
      %2896 = vrot.lane.b32.xlu0 %v2533, 20
      %v2897 = vpop.permute.xlu0 %2896
      %2898 = vrot.lane.b32.xlu0 %v2535, 20
      %v2899 = vpop.permute.xlu0 %2898
      %2900 = vrot.lane.b32.xlu0 %v2538, 20
      %v2901 = vpop.permute.xlu0 %2900
      %2902 = vrot.lane.b32.xlu0 %v2540, 20
      %v2903 = vpop.permute.xlu0 %2902
      %2904 = vrot.lane.b32.xlu0 %v2543, 20
      %v2905 = vpop.permute.xlu0 %2904
      %2906 = vrot.lane.b32.xlu0 %v2545, 20
      %v2907 = vpop.permute.xlu0 %2906
      %2908 = vrot.lane.b32.xlu0 %v2548, 20
      %v2909 = vpop.permute.xlu0 %2908
      %2910 = vrot.lane.b32.xlu0 %v2550, 20
      %v2911 = vpop.permute.xlu0 %2910
      %2912 = vrot.lane.b32.xlu0 %v2553, 20
      %v2913 = vpop.permute.xlu0 %2912
      %2914 = vrot.lane.b32.xlu0 %v2555, 20
      %v2915 = vpop.permute.xlu0 %2914
      %2916 = vrot.lane.b32.xlu0 %v2558, 20
      %v2917 = vpop.permute.xlu0 %2916
      %2918 = vrot.lane.b32.xlu0 %v2560, 20
      %v2919 = vpop.permute.xlu0 %2918
      %2920 = vrot.lane.b32.xlu0 %v2563, 20
      %v2921 = vpop.permute.xlu0 %2920
      %2922 = vrot.lane.b32.xlu0 %v2565, 20
      %v2923 = vpop.permute.xlu0 %2922
      %2924 = vrot.lane.b32.xlu0 %v2568, 20
      %v2925 = vpop.permute.xlu0 %2924
      %2926 = vrot.lane.b32.xlu0 %v2570, 20
      %v2927 = vpop.permute.xlu0 %2926
      %2928 = vrot.lane.b32.xlu0 %v2573, 20
      %v2929 = vpop.permute.xlu0 %2928
      %2930 = vrot.lane.b32.xlu0 %v2575, 20
      %v2931 = vpop.permute.xlu0 %2930
      %2932 = vrot.lane.b32.xlu0 %v2578, 20
      %v2933 = vpop.permute.xlu0 %2932
      %2934 = vrot.lane.b32.xlu0 %v2580, 20
      %v2935 = vpop.permute.xlu0 %2934
      %2936 = vrot.lane.b32.xlu0 %v2583, 20
      %v2937 = vpop.permute.xlu0 %2936
      %2938 = vrot.lane.b32.xlu0 %v2585, 20
      %v2939 = vpop.permute.xlu0 %2938
      %2940 = vrot.lane.b32.xlu0 %v2877, 20
      %v2941 = vpop.permute.xlu0 %2940
      %2942 = vrot.lane.b32.xlu0 %v2879, 20
      %v2943 = vpop.permute.xlu0 %2942
      %2976 = vrot.lane.b32.xlu0 %v2285, 24
      %v2977 = vpop.permute.xlu0 %2976
      %2978 = vrot.lane.b32.xlu0 %v2194, 24
      %v2979 = vpop.permute.xlu0 %2978
      %2980 = vrot.lane.b32.xlu0 %v2286, 24
      %v2981 = vpop.permute.xlu0 %2980
      %2982 = vrot.lane.b32.xlu0 %v2197, 24
      %v2983 = vpop.permute.xlu0 %2982
      %2984 = vrot.lane.b32.xlu0 %v2287, 24
      %v2985 = vpop.permute.xlu0 %2984
      %2986 = vrot.lane.b32.xlu0 %v2200, 24
      %v2987 = vpop.permute.xlu0 %2986
      %2988 = vrot.lane.b32.xlu0 %v2288, 24
      %v2989 = vpop.permute.xlu0 %2988
      %2990 = vrot.lane.b32.xlu0 %v2203, 24
      %v2991 = vpop.permute.xlu0 %2990
      %2992 = vrot.lane.b32.xlu0 %v2289, 24
      %v2993 = vpop.permute.xlu0 %2992
      %2994 = vrot.lane.b32.xlu0 %v2206, 24
      %v2995 = vpop.permute.xlu0 %2994
      %2996 = vrot.lane.b32.xlu0 %v2290, 24
      %v2997 = vpop.permute.xlu0 %2996
      %2998 = vrot.lane.b32.xlu0 %v2209, 24
      %v2999 = vpop.permute.xlu0 %2998
      %3000 = vrot.lane.b32.xlu0 %v2291, 24
      %v3001 = vpop.permute.xlu0 %3000
      %3002 = vrot.lane.b32.xlu0 %v2212, 24
      %v3003 = vpop.permute.xlu0 %3002
      %3004 = vrot.lane.b32.xlu0 %v2292, 24
      %v3005 = vpop.permute.xlu0 %3004
      %3006 = vrot.lane.b32.xlu0 %v2215, 24
      %v3007 = vpop.permute.xlu0 %3006
      %3008 = vrot.lane.b32.xlu0 %v2293, 24
      %v3009 = vpop.permute.xlu0 %3008
      %3010 = vrot.lane.b32.xlu0 %v2218, 24
      %v3011 = vpop.permute.xlu0 %3010
      %3012 = vrot.lane.b32.xlu0 %v2294, 24
      %v3013 = vpop.permute.xlu0 %3012
      %3014 = vrot.lane.b32.xlu0 %v2221, 24
      %v3015 = vpop.permute.xlu0 %3014
      %3016 = vrot.lane.b32.xlu0 %v2295, 24
      %v3017 = vpop.permute.xlu0 %3016
      %3018 = vrot.lane.b32.xlu0 %v2224, 24
      %v3019 = vpop.permute.xlu0 %3018
      %3020 = vrot.lane.b32.xlu0 %v2296, 24
      %v3021 = vpop.permute.xlu0 %3020
      %3022 = vrot.lane.b32.xlu0 %v2227, 24
      %v3023 = vpop.permute.xlu0 %3022
      %3024 = vrot.lane.b32.xlu0 %v2297, 24
      %v3025 = vpop.permute.xlu0 %3024
      %3026 = vrot.lane.b32.xlu0 %v2230, 24
      %v3027 = vpop.permute.xlu0 %3026
      %3028 = vrot.lane.b32.xlu0 %v2298, 24
      %v3029 = vpop.permute.xlu0 %3028
      %3030 = vrot.lane.b32.xlu0 %v2233, 24
      %v3031 = vpop.permute.xlu0 %3030
      %3032 = vrot.lane.b32.xlu0 %v2299, 24
      %v3033 = vpop.permute.xlu0 %3032
      %3034 = vrot.lane.b32.xlu0 %v2236, 24
      %v3035 = vpop.permute.xlu0 %3034
      %3066 = vrot.lane.b32.xlu0 %v2353, 28
      %v3067 = vpop.permute.xlu0 %3066
      %3068 = vrot.lane.b32.xlu0 %v2355, 28
      %v3069 = vpop.permute.xlu0 %3068
      %3070 = vrot.lane.b32.xlu0 %v2358, 28
      %v3071 = vpop.permute.xlu0 %3070
      %3072 = vrot.lane.b32.xlu0 %v2360, 28
      %v3073 = vpop.permute.xlu0 %3072
      %3074 = vrot.lane.b32.xlu0 %v2363, 28
      %v3075 = vpop.permute.xlu0 %3074
      %3076 = vrot.lane.b32.xlu0 %v2365, 28
      %v3077 = vpop.permute.xlu0 %3076
      %3078 = vrot.lane.b32.xlu0 %v2368, 28
      %v3079 = vpop.permute.xlu0 %3078
      %3080 = vrot.lane.b32.xlu0 %v2370, 28
      %v3081 = vpop.permute.xlu0 %3080
      %3082 = vrot.lane.b32.xlu0 %v2373, 28
      %v3083 = vpop.permute.xlu0 %3082
      %3084 = vrot.lane.b32.xlu0 %v2375, 28
      %v3085 = vpop.permute.xlu0 %3084
      %3086 = vrot.lane.b32.xlu0 %v2378, 28
      %v3087 = vpop.permute.xlu0 %3086
      %3088 = vrot.lane.b32.xlu0 %v2380, 28
      %v3089 = vpop.permute.xlu0 %3088
      %3090 = vrot.lane.b32.xlu0 %v2383, 28
      %v3091 = vpop.permute.xlu0 %3090
      %3092 = vrot.lane.b32.xlu0 %v2385, 28
      %v3093 = vpop.permute.xlu0 %3092
      %3094 = vrot.lane.b32.xlu0 %v2388, 28
      %v3095 = vpop.permute.xlu0 %3094
      %3096 = vrot.lane.b32.xlu0 %v2390, 28
      %v3097 = vpop.permute.xlu0 %3096
      %3098 = vrot.lane.b32.xlu0 %v2393, 28
      %v3099 = vpop.permute.xlu0 %3098
      %3100 = vrot.lane.b32.xlu0 %v2395, 28
      %v3101 = vpop.permute.xlu0 %3100
      %3102 = vrot.lane.b32.xlu0 %v2398, 28
      %v3103 = vpop.permute.xlu0 %3102
      %3104 = vrot.lane.b32.xlu0 %v2400, 28
      %v3105 = vpop.permute.xlu0 %3104
      %3106 = vrot.lane.b32.xlu0 %v2403, 28
      %v3107 = vpop.permute.xlu0 %3106
      %3108 = vrot.lane.b32.xlu0 %v2405, 28
      %v3109 = vpop.permute.xlu0 %3108
      %3110 = vrot.lane.b32.xlu0 %v2408, 28
      %v3111 = vpop.permute.xlu0 %3110
      %3112 = vrot.lane.b32.xlu0 %v2410, 28
      %v3113 = vpop.permute.xlu0 %3112
      %3114 = vrot.lane.b32.xlu0 %v2413, 28
      %v3115 = vpop.permute.xlu0 %3114
      %3116 = vrot.lane.b32.xlu0 %v2415, 28
      %v3117 = vpop.permute.xlu0 %3116
      %3118 = vrot.lane.b32.xlu0 %v2418, 28
      %v3119 = vpop.permute.xlu0 %3118
      %3120 = vrot.lane.b32.xlu0 %v2420, 28
      %v3121 = vpop.permute.xlu0 %3120
      %3122 = vrot.lane.b32.xlu0 %v2776, 28
      %v3123 = vpop.permute.xlu0 %3122
      %3124 = vrot.lane.b32.xlu0 %v2778, 28
      %v3125 = vpop.permute.xlu0 %3124
      %3156 = vrot.lane.b32.xlu0 %v2518, 32
      %v3157 = vpop.permute.xlu0 %3156
      %3158 = vrot.lane.b32.xlu0 %v2520, 32
      %v3159 = vpop.permute.xlu0 %3158
      %3160 = vrot.lane.b32.xlu0 %v2523, 32
      %v3161 = vpop.permute.xlu0 %3160
      %3162 = vrot.lane.b32.xlu0 %v2525, 32
      %v3163 = vpop.permute.xlu0 %3162
      %3164 = vrot.lane.b32.xlu0 %v2528, 32
      %v3165 = vpop.permute.xlu0 %3164
      %3166 = vrot.lane.b32.xlu0 %v2530, 32
      %v3167 = vpop.permute.xlu0 %3166
      %3168 = vrot.lane.b32.xlu0 %v2533, 32
      %v3169 = vpop.permute.xlu0 %3168
      %3170 = vrot.lane.b32.xlu0 %v2535, 32
      %v3171 = vpop.permute.xlu0 %3170
      %3172 = vrot.lane.b32.xlu0 %v2538, 32
      %v3173 = vpop.permute.xlu0 %3172
      %3174 = vrot.lane.b32.xlu0 %v2540, 32
      %v3175 = vpop.permute.xlu0 %3174
      %3176 = vrot.lane.b32.xlu0 %v2543, 32
      %v3177 = vpop.permute.xlu0 %3176
      %3178 = vrot.lane.b32.xlu0 %v2545, 32
      %v3179 = vpop.permute.xlu0 %3178
      %3180 = vrot.lane.b32.xlu0 %v2548, 32
      %v3181 = vpop.permute.xlu0 %3180
      %3182 = vrot.lane.b32.xlu0 %v2550, 32
      %v3183 = vpop.permute.xlu0 %3182
      %3184 = vrot.lane.b32.xlu0 %v2553, 32
      %v3185 = vpop.permute.xlu0 %3184
      %3186 = vrot.lane.b32.xlu0 %v2555, 32
      %v3187 = vpop.permute.xlu0 %3186
      %3188 = vrot.lane.b32.xlu0 %v2558, 32
      %v3189 = vpop.permute.xlu0 %3188
      %3190 = vrot.lane.b32.xlu0 %v2560, 32
      %v3191 = vpop.permute.xlu0 %3190
      %3192 = vrot.lane.b32.xlu0 %v2563, 32
      %v3193 = vpop.permute.xlu0 %3192
      %3194 = vrot.lane.b32.xlu0 %v2565, 32
      %v3195 = vpop.permute.xlu0 %3194
      %3196 = vrot.lane.b32.xlu0 %v2568, 32
      %v3197 = vpop.permute.xlu0 %3196
      %3198 = vrot.lane.b32.xlu0 %v2570, 32
      %v3199 = vpop.permute.xlu0 %3198
      %3200 = vrot.lane.b32.xlu0 %v2573, 32
      %v3201 = vpop.permute.xlu0 %3200
      %3202 = vrot.lane.b32.xlu0 %v2575, 32
      %v3203 = vpop.permute.xlu0 %3202
      %3204 = vrot.lane.b32.xlu0 %v2578, 32
      %v3205 = vpop.permute.xlu0 %3204
      %3206 = vrot.lane.b32.xlu0 %v2580, 32
      %v3207 = vpop.permute.xlu0 %3206
      %3208 = vrot.lane.b32.xlu0 %v2583, 32
      %v3209 = vpop.permute.xlu0 %3208
      %3210 = vrot.lane.b32.xlu0 %v2585, 32
      %v3211 = vpop.permute.xlu0 %3210
      %3212 = vrot.lane.b32.xlu0 %v2877, 32
      %v3213 = vpop.permute.xlu0 %3212
      %3214 = vrot.lane.b32.xlu0 %v2879, 32
      %v3215 = vpop.permute.xlu0 %3214
      %v3246 = vsel %vm1452, %v2284, %v2422
      %v3247 = vsel %vm1452, %v2191, %v2424
      %v3248 = vsel %vm1452, %v2285, %v2426
      %v3249 = vsel %vm1452, %v2194, %v2428
      %v3250 = vsel %vm1452, %v2286, %v2430
      %v3251 = vsel %vm1452, %v2197, %v2432
      %v3252 = vsel %vm1452, %v2287, %v2434
      %v3253 = vsel %vm1452, %v2200, %v2436
      %v3254 = vsel %vm1452, %v2288, %v2438
      %v3255 = vsel %vm1452, %v2203, %v2440
      %v3256 = vsel %vm1452, %v2289, %v2442
      %v3257 = vsel %vm1452, %v2206, %v2444
      %v3258 = vsel %vm1452, %v2290, %v2446
      %v3259 = vsel %vm1452, %v2209, %v2448
      %v3260 = vsel %vm1452, %v2291, %v2450
      %v3261 = vsel %vm1452, %v2212, %v2452
      %v3262 = vsel %vm1452, %v2292, %v2454
      %v3263 = vsel %vm1452, %v2215, %v2456
      %v3264 = vsel %vm1452, %v2293, %v2458
      %v3265 = vsel %vm1452, %v2218, %v2460
      %v3266 = vsel %vm1452, %v2294, %v2462
      %v3267 = vsel %vm1452, %v2221, %v2464
      %v3268 = vsel %vm1452, %v2295, %v2466
      %v3269 = vsel %vm1452, %v2224, %v2468
      %v3270 = vsel %vm1452, %v2296, %v2470
      %v3271 = vsel %vm1452, %v2227, %v2472
      %v3272 = vsel %vm1452, %v2297, %v2474
      %v3273 = vsel %vm1452, %v2230, %v2476
      %v3274 = vsel %vm1452, %v2298, %v2478
      %v3275 = vsel %vm1452, %v2233, %v2480
      %v3276 = vsel %vm1485, %v3246, %v2587
      %v3277 = vsel %vm1485, %v3247, %v2589
      %v3278 = vsel %vm1485, %v3248, %v2591
      %v3279 = vsel %vm1485, %v3249, %v2593
      %v3280 = vsel %vm1485, %v3250, %v2595
      %v3281 = vsel %vm1485, %v3251, %v2597
      %v3282 = vsel %vm1485, %v3252, %v2599
      %v3283 = vsel %vm1485, %v3253, %v2601
      %v3284 = vsel %vm1485, %v3254, %v2603
      %v3285 = vsel %vm1485, %v3255, %v2605
      %v3286 = vsel %vm1485, %v3256, %v2607
      %v3287 = vsel %vm1485, %v3257, %v2609
      %v3288 = vsel %vm1485, %v3258, %v2611
      %v3289 = vsel %vm1485, %v3259, %v2613
      %v3290 = vsel %vm1485, %v3260, %v2615
      %v3291 = vsel %vm1485, %v3261, %v2617
      %v3292 = vsel %vm1485, %v3262, %v2619
      %v3293 = vsel %vm1485, %v3263, %v2621
      %v3294 = vsel %vm1485, %v3264, %v2623
      %v3295 = vsel %vm1485, %v3265, %v2625
      %v3296 = vsel %vm1485, %v3266, %v2627
      %v3297 = vsel %vm1485, %v3267, %v2629
      %v3298 = vsel %vm1485, %v3268, %v2631
      %v3299 = vsel %vm1485, %v3269, %v2633
      %v3300 = vsel %vm1485, %v3270, %v2635
      %v3301 = vsel %vm1485, %v3271, %v2637
      %v3302 = vsel %vm1485, %v3272, %v2639
      %v3303 = vsel %vm1485, %v3273, %v2641
      %v3304 = vsel %vm1485, %v3274, %v2643
      %v3305 = vsel %vm1485, %v3275, %v2645
      %v3306 = vsel %vm1518, %v1486, %v2678
      %v3307 = vsel %vm1518, %v1487, %v2680
      %v3308 = vsel %vm1518, %v3276, %v2682
      %v3309 = vsel %vm1518, %v3277, %v2684
      %v3310 = vsel %vm1518, %v3278, %v2686
      %v3311 = vsel %vm1518, %v3279, %v2688
      %v3312 = vsel %vm1518, %v3280, %v2690
      %v3313 = vsel %vm1518, %v3281, %v2692
      %v3314 = vsel %vm1518, %v3282, %v2694
      %v3315 = vsel %vm1518, %v3283, %v2696
      %v3316 = vsel %vm1518, %v3284, %v2698
      %v3317 = vsel %vm1518, %v3285, %v2700
      %v3318 = vsel %vm1518, %v3286, %v2702
      %v3319 = vsel %vm1518, %v3287, %v2704
      %v3320 = vsel %vm1518, %v3288, %v2706
      %v3321 = vsel %vm1518, %v3289, %v2708
      %v3322 = vsel %vm1518, %v3290, %v2710
      %v3323 = vsel %vm1518, %v3291, %v2712
      %v3324 = vsel %vm1518, %v3292, %v2714
      %v3325 = vsel %vm1518, %v3293, %v2716
      %v3326 = vsel %vm1518, %v3294, %v2718
      %v3327 = vsel %vm1518, %v3295, %v2720
      %v3328 = vsel %vm1518, %v3296, %v2722
      %v3329 = vsel %vm1518, %v3297, %v2724
      %v3330 = vsel %vm1518, %v3298, %v2726
      %v3331 = vsel %vm1518, %v3299, %v2728
      %v3332 = vsel %vm1518, %v3300, %v2730
      %v3333 = vsel %vm1518, %v3301, %v2732
      %v3334 = vsel %vm1518, %v3302, %v2734
      %v3335 = vsel %vm1518, %v3303, %v2736
      %v3336 = vsel %vm1518, %v3304, %v2738
      %v3337 = vsel %vm1518, %v3305, %v2740
      %v3338 = vsel %vm1551, %v3306, %v2780
      %v3339 = vsel %vm1551, %v3307, %v2782
      %v3340 = vsel %vm1551, %v3308, %v2784
      %v3341 = vsel %vm1551, %v3309, %v2786
      %v3342 = vsel %vm1551, %v3310, %v2788
      %v3343 = vsel %vm1551, %v3311, %v2790
      %v3344 = vsel %vm1551, %v3312, %v2792
      %v3345 = vsel %vm1551, %v3313, %v2794
      %v3346 = vsel %vm1551, %v3314, %v2796
      %v3347 = vsel %vm1551, %v3315, %v2798
      %v3348 = vsel %vm1551, %v3316, %v2800
      %v3349 = vsel %vm1551, %v3317, %v2802
      %v3350 = vsel %vm1551, %v3318, %v2804
      %v3351 = vsel %vm1551, %v3319, %v2806
      %v3352 = vsel %vm1551, %v3320, %v2808
      %v3353 = vsel %vm1551, %v3321, %v2810
      %v3354 = vsel %vm1551, %v3322, %v2812
      %v3355 = vsel %vm1551, %v3323, %v2814
      %v3356 = vsel %vm1551, %v3324, %v2816
      %v3357 = vsel %vm1551, %v3325, %v2818
      %v3358 = vsel %vm1551, %v3326, %v2820
      %v3359 = vsel %vm1551, %v3327, %v2822
      %v3360 = vsel %vm1551, %v3328, %v2824
      %v3361 = vsel %vm1551, %v3329, %v2826
      %v3362 = vsel %vm1551, %v3330, %v2828
      %v3363 = vsel %vm1551, %v3331, %v2830
      %v3364 = vsel %vm1551, %v3332, %v2832
      %v3365 = vsel %vm1551, %v3333, %v2834
      %v3366 = vsel %vm1551, %v3334, %v2836
      %v3367 = vsel %vm1551, %v3335, %v2838
      %v3368 = vsel %vm1551, %v3336, %v2840
      %v3369 = vsel %vm1551, %v3337, %v2842
      %v3370 = vsel %vm1584, %v3338, %v2881
      %v3371 = vsel %vm1584, %v3339, %v2883
      %v3372 = vsel %vm1584, %v3340, %v2885
      %v3373 = vsel %vm1584, %v3341, %v2887
      %v3374 = vsel %vm1584, %v3342, %v2889
      %v3375 = vsel %vm1584, %v3343, %v2891
      %v3376 = vsel %vm1584, %v3344, %v2893
      %v3377 = vsel %vm1584, %v3345, %v2895
      %v3378 = vsel %vm1584, %v3346, %v2897
      %v3379 = vsel %vm1584, %v3347, %v2899
      %v3380 = vsel %vm1584, %v3348, %v2901
      %v3381 = vsel %vm1584, %v3349, %v2903
      %v3382 = vsel %vm1584, %v3350, %v2905
      %v3383 = vsel %vm1584, %v3351, %v2907
      %v3384 = vsel %vm1584, %v3352, %v2909
      %v3385 = vsel %vm1584, %v3353, %v2911
      %v3386 = vsel %vm1584, %v3354, %v2913
      %v3387 = vsel %vm1584, %v3355, %v2915
      %v3388 = vsel %vm1584, %v3356, %v2917
      %v3389 = vsel %vm1584, %v3357, %v2919
      %v3390 = vsel %vm1584, %v3358, %v2921
      %v3391 = vsel %vm1584, %v3359, %v2923
      %v3392 = vsel %vm1584, %v3360, %v2925
      %v3393 = vsel %vm1584, %v3361, %v2927
      %v3394 = vsel %vm1584, %v3362, %v2929
      %v3395 = vsel %vm1584, %v3363, %v2931
      %v3396 = vsel %vm1584, %v3364, %v2933
      %v3397 = vsel %vm1584, %v3365, %v2935
      %v3398 = vsel %vm1584, %v3366, %v2937
      %v3399 = vsel %vm1584, %v3367, %v2939
      %v3400 = vsel %vm1584, %v3368, %v2941
      %v3401 = vsel %vm1584, %v3369, %v2943
      %v3402 = vsel %vm1617, %v3370, %v2977
      %v3403 = vsel %vm1617, %v3371, %v2979
      %v3404 = vsel %vm1617, %v3372, %v2981
      %v3405 = vsel %vm1617, %v3373, %v2983
      %v3406 = vsel %vm1617, %v3374, %v2985
      %v3407 = vsel %vm1617, %v3375, %v2987
      %v3408 = vsel %vm1617, %v3376, %v2989
      %v3409 = vsel %vm1617, %v3377, %v2991
      %v3410 = vsel %vm1617, %v3378, %v2993
      %v3411 = vsel %vm1617, %v3379, %v2995
      %v3412 = vsel %vm1617, %v3380, %v2997
      %v3413 = vsel %vm1617, %v3381, %v2999
      %v3414 = vsel %vm1617, %v3382, %v3001
      %v3415 = vsel %vm1617, %v3383, %v3003
      %v3416 = vsel %vm1617, %v3384, %v3005
      %v3417 = vsel %vm1617, %v3385, %v3007
      %v3418 = vsel %vm1617, %v3386, %v3009
      %v3419 = vsel %vm1617, %v3387, %v3011
      %v3420 = vsel %vm1617, %v3388, %v3013
      %v3421 = vsel %vm1617, %v3389, %v3015
      %v3422 = vsel %vm1617, %v3390, %v3017
      %v3423 = vsel %vm1617, %v3391, %v3019
      %v3424 = vsel %vm1617, %v3392, %v3021
      %v3425 = vsel %vm1617, %v3393, %v3023
      %v3426 = vsel %vm1617, %v3394, %v3025
      %v3427 = vsel %vm1617, %v3395, %v3027
      %v3428 = vsel %vm1617, %v3396, %v3029
      %v3429 = vsel %vm1617, %v3397, %v3031
      %v3430 = vsel %vm1617, %v3398, %v3033
      %v3431 = vsel %vm1617, %v3399, %v3035
      %v3432 = vsel %vm1617, %v3400, %v1225
      %v3433 = vsel %vm1617, %v3401, %v1227
      %v3434 = vsel %vm1650, %v3402, %v3067
      %v3435 = vsel %vm1650, %v3403, %v3069
      %v3436 = vsel %vm1650, %v3404, %v3071
      %v3437 = vsel %vm1650, %v3405, %v3073
      %v3438 = vsel %vm1650, %v3406, %v3075
      %v3439 = vsel %vm1650, %v3407, %v3077
      %v3440 = vsel %vm1650, %v3408, %v3079
      %v3441 = vsel %vm1650, %v3409, %v3081
      %v3442 = vsel %vm1650, %v3410, %v3083
      %v3443 = vsel %vm1650, %v3411, %v3085
      %v3444 = vsel %vm1650, %v3412, %v3087
      %v3445 = vsel %vm1650, %v3413, %v3089
      %v3446 = vsel %vm1650, %v3414, %v3091
      %v3447 = vsel %vm1650, %v3415, %v3093
      %v3448 = vsel %vm1650, %v3416, %v3095
      %v3449 = vsel %vm1650, %v3417, %v3097
      %v3450 = vsel %vm1650, %v3418, %v3099
      %v3451 = vsel %vm1650, %v3419, %v3101
      %v3452 = vsel %vm1650, %v3420, %v3103
      %v3453 = vsel %vm1650, %v3421, %v3105
      %v3454 = vsel %vm1650, %v3422, %v3107
      %v3455 = vsel %vm1650, %v3423, %v3109
      %v3456 = vsel %vm1650, %v3424, %v3111
      %v3457 = vsel %vm1650, %v3425, %v3113
      %v3458 = vsel %vm1650, %v3426, %v3115
      %v3459 = vsel %vm1650, %v3427, %v3117
      %v3460 = vsel %vm1650, %v3428, %v3119
      %v3461 = vsel %vm1650, %v3429, %v3121
      %v3462 = vsel %vm1650, %v3430, %v3123
      %v3463 = vsel %vm1650, %v3431, %v3125
      %v3464 = vsel %vm1650, %v3432, %v1321
      %v3465 = vsel %vm1650, %v3433, %v1323
      %v3466 = vsel %vm1683, %v3434, %v3157
      %v3467 = vsel %vm1683, %v3435, %v3159
      %v3468 = vsel %vm1683, %v3436, %v3161
      %v3469 = vsel %vm1683, %v3437, %v3163
      %v3470 = vsel %vm1683, %v3438, %v3165
      %v3471 = vsel %vm1683, %v3439, %v3167
      %v3472 = vsel %vm1683, %v3440, %v3169
      %v3473 = vsel %vm1683, %v3441, %v3171
      %v3474 = vsel %vm1683, %v3442, %v3173
      %v3475 = vsel %vm1683, %v3443, %v3175
      %v3476 = vsel %vm1683, %v3444, %v3177
      %v3477 = vsel %vm1683, %v3445, %v3179
      %v3478 = vsel %vm1683, %v3446, %v3181
      %v3479 = vsel %vm1683, %v3447, %v3183
      %v3480 = vsel %vm1683, %v3448, %v3185
      %v3481 = vsel %vm1683, %v3449, %v3187
      %v3482 = vsel %vm1683, %v3450, %v3189
      %v3483 = vsel %vm1683, %v3451, %v3191
      %v3484 = vsel %vm1683, %v3452, %v3193
      %v3485 = vsel %vm1683, %v3453, %v3195
      %v3486 = vsel %vm1683, %v3454, %v3197
      %v3487 = vsel %vm1683, %v3455, %v3199
      %v3488 = vsel %vm1683, %v3456, %v3201
      %v3489 = vsel %vm1683, %v3457, %v3203
      %v3490 = vsel %vm1683, %v3458, %v3205
      %v3491 = vsel %vm1683, %v3459, %v3207
      %v3492 = vsel %vm1683, %v3460, %v3209
      %v3493 = vsel %vm1683, %v3461, %v3211
      %v3494 = vsel %vm1683, %v3462, %v3213
      %v3495 = vsel %vm1683, %v3463, %v3215
      %v3496 = vsel %vm1683, %v3464, %v1417
      %v3497 = vsel %vm1683, %v3465, %v1419
      %v3498 = vld [vmem:[%s2] sm:$0xff]
      %v3499 = vld [vmem:[%s2 + $0x8] sm:$0xff]
      %v3500 = vld [vmem:[%s2 + $0x10] sm:$0xff]
      %v3501 = vld [vmem:[%s2 + $0x18] sm:$0xff]
      %v3502 = vld [vmem:[%s2 + $0x20] sm:$0xf]
      %v3504 = vsel %vm1721, %v3466, 0
      %v3507 = vsel %vm1721, %v3467, 0
      %v3510 = vsel %vm1721, %v3468, 0
      %v3513 = vsel %vm1721, %v3469, 0
      %v3516 = vsel %vm1721, %v3470, 0
      %v3519 = vsel %vm1721, %v3471, 0
      %v3522 = vsel %vm1721, %v3472, 0
      %v3525 = vsel %vm1721, %v3473, 0
      %v3528 = vsel %vm1721, %v3474, 0
      %v3531 = vsel %vm1721, %v3475, 0
      %v3534 = vsel %vm1721, %v3476, 0
      %v3537 = vsel %vm1721, %v3477, 0
      %v3540 = vsel %vm1721, %v3478, 0
      %v3543 = vsel %vm1721, %v3479, 0
      %v3546 = vsel %vm1721, %v3480, 0
      %v3549 = vsel %vm1721, %v3481, 0
      %v3552 = vsel %vm1721, %v3482, 0
      %v3555 = vsel %vm1721, %v3483, 0
      %v3558 = vsel %vm1721, %v3484, 0
      %v3561 = vsel %vm1721, %v3485, 0
      %v3564 = vsel %vm1721, %v3486, 0
      %v3567 = vsel %vm1721, %v3487, 0
      %v3570 = vsel %vm1721, %v3488, 0
      %v3573 = vsel %vm1721, %v3489, 0
      %v3576 = vsel %vm1721, %v3490, 0
      %v3579 = vsel %vm1721, %v3491, 0
      %v3582 = vsel %vm1721, %v3492, 0
      %v3585 = vsel %vm1721, %v3493, 0
      %v3588 = vsel %vm1721, %v3494, 0
      %v3591 = vsel %vm1721, %v3495, 0
      %v3594 = vsel %vm1721, %v3496, 0
      %v3597 = vsel %vm1721, %v3497, 0
      %v3600 = vsel %vm1818, %v3502, 0
      %3602 = vmatprep.subr.mxu0 0.0
      %3603 = vmatpush1.msra.mxu0 0.0
      %3604 = vmatprep.subr.mxu0 0.0
      %3605 = vmatpush1.msra.mxu0 0.0
      %3606 = vmatprep.subr.mxu0 0.0
      %3607 = vmatpush1.msra.mxu0 0.0
      %3608 = vmatprep.subr.mxu0 0.0
      %3609 = vmatpush1.msra.mxu0 0.0
      %3610 = vmatprep.subr.mxu0 0.0
      %3611 = vmatpush1.msra.mxu0 0.0
      %3612 = vmatprep.subr.mxu0 0.0
      %3613 = vmatpush1.msra.mxu0 0.0
      %3614 = vmatprep.subr.mxu0 0.0
      %3615 = vmatpush1.msra.mxu0 0.0
      %3616 = vmatprep.subr.mxu0 0.0
      %3617 = vmatpush1.msra.mxu0 0.0
      %3618 = vmatprep.subr.mxu0 0.0
      %3619 = vmatpush1.msra.mxu0 0.0
      %3620 = vmatprep.subr.mxu0 0.0
      %3621 = vmatpush1.msra.mxu0 0.0
      %3622 = vmatprep.subr.mxu0 0.0
      %3623 = vmatpush1.msra.mxu0 0.0
      %3624 = vmatprep.subr.mxu0 0.0
      %3625 = vmatpush1.msra.mxu0 %v3600
      %3626 = vmatprep.subr.mxu0 0.0
      %3627 = vmatpush1.msra.mxu0 %v3501
      %3628 = vmatprep.subr.mxu0 0.0
      %3629 = vmatpush1.msra.mxu0 %v3500
      %3630 = vmatprep.subr.mxu0 0.0
      %3631 = vmatpush1.msra.mxu0 %v3499
      %3632 = vmatprep.subr.mxu0 0.0
      %3633 = vmatpush1.msra.mxu0 %v3498
      %3634 = vmatprep.subr.mxu0 0.0
      %3635 = vmatpush2.msra.mxu0 0.0
      %3636 = vmatprep.subr.mxu0 0.0
      %3637 = vmatpush2.msra.mxu0 0.0
      %3638 = vmatprep.subr.mxu0 0.0
      %3639 = vmatpush2.msra.mxu0 0.0
      %3640 = vmatprep.subr.mxu0 0.0
      %3641 = vmatpush2.msra.mxu0 0.0
      %3642 = vmatprep.subr.mxu0 0.0
      %3643 = vmatpush2.msra.mxu0 0.0
      %3644 = vmatprep.subr.mxu0 0.0
      %3645 = vmatpush2.msra.mxu0 0.0
      %3646 = vmatprep.subr.mxu0 0.0
      %3647 = vmatpush2.msra.mxu0 0.0
      %3648 = vmatprep.subr.mxu0 0.0
      %3649 = vmatpush2.msra.mxu0 0.0
      %3650 = vmatprep.subr.mxu0 0.0
      %3651 = vmatpush2.msra.mxu0 0.0
      %3652 = vmatprep.subr.mxu0 0.0
      %3653 = vmatpush2.msra.mxu0 0.0
      %3654 = vmatprep.subr.mxu0 0.0
      %3655 = vmatpush2.msra.mxu0 0.0
      %3656 = vmatprep.subr.mxu0 0.0
      %3657 = vmatpush2.msra.mxu0 0.0
      %3658 = vmatprep.subr.mxu0 0.0
      %3659 = vmatpush2.msra.mxu0 0.0
      %3660 = vmatprep.subr.mxu0 0.0
      %3661 = vmatpush2.msra.mxu0 0.0
      %3662 = vmatprep.subr.mxu0 0.0
      %3663 = vmatpush2.msra.mxu0 0.0
      %3664 = vmatprep.subr.mxu0 0.0
      %3665 = vmatpush2.msra.mxu0 0.0
      %3666 = vmatprep.mubr.f32.mxu0 0.0
      %3667 = vmatmul.mubr.f32.gmra.mxu0 %v3504
      %v3668 = vpop.f32.mrf.mxu0
      %v3669 = vadd.f32 0.0, %v3668
      %v3670 = vpop.f32.mrf.mxu0
      %3671 = vmatprep.mubr.f32.mxu0 0.0
      %3672 = vmatmul.mubr.f32.gmra.mxu0 %v3507
      %v3673 = vpop.f32.mrf.mxu0
      %v3674 = vadd.f32 0.0, %v3673
      %v3675 = vpop.f32.mrf.mxu0
      %3676 = vmatprep.mubr.f32.mxu0 0.0
      %3677 = vmatmul.mubr.f32.gmra.mxu0 %v3510
      %v3678 = vpop.f32.mrf.mxu0
      %v3679 = vadd.f32 0.0, %v3678
      %v3680 = vpop.f32.mrf.mxu0
      %3681 = vmatprep.mubr.f32.mxu0 0.0
      %3682 = vmatmul.mubr.f32.gmra.mxu0 %v3513
      %v3683 = vpop.f32.mrf.mxu0
      %v3684 = vadd.f32 0.0, %v3683
      %v3685 = vpop.f32.mrf.mxu0
      %3686 = vmatprep.mubr.f32.mxu0 0.0
      %3687 = vmatmul.mubr.f32.gmra.mxu0 %v3516
      %v3688 = vpop.f32.mrf.mxu0
      %v3689 = vadd.f32 0.0, %v3688
      %v3690 = vpop.f32.mrf.mxu0
      %3691 = vmatprep.mubr.f32.mxu0 0.0
      %3692 = vmatmul.mubr.f32.gmra.mxu0 %v3519
      %v3693 = vpop.f32.mrf.mxu0
      %v3694 = vadd.f32 0.0, %v3693
      %v3695 = vpop.f32.mrf.mxu0
      %3696 = vmatprep.mubr.f32.mxu0 0.0
      %3697 = vmatmul.mubr.f32.gmra.mxu0 %v3522
      %v3698 = vpop.f32.mrf.mxu0
      %v3699 = vadd.f32 0.0, %v3698
      %v3700 = vpop.f32.mrf.mxu0
      %3701 = vmatprep.mubr.f32.mxu0 0.0
      %3702 = vmatmul.mubr.f32.gmra.mxu0 %v3525
      %v3703 = vpop.f32.mrf.mxu0
      %v3704 = vadd.f32 0.0, %v3703
      %v3705 = vpop.f32.mrf.mxu0
      %3706 = vmatprep.mubr.f32.mxu0 0.0
      %3707 = vmatmul.mubr.f32.gmra.mxu0 %v3528
      %v3708 = vpop.f32.mrf.mxu0
      %v3709 = vadd.f32 0.0, %v3708
      %v3710 = vpop.f32.mrf.mxu0
      %3711 = vmatprep.mubr.f32.mxu0 0.0
      %3712 = vmatmul.mubr.f32.gmra.mxu0 %v3531
      %v3713 = vpop.f32.mrf.mxu0
      %v3714 = vadd.f32 0.0, %v3713
      %v3715 = vpop.f32.mrf.mxu0
      %3716 = vmatprep.mubr.f32.mxu0 0.0
      %3717 = vmatmul.mubr.f32.gmra.mxu0 %v3534
      %v3718 = vpop.f32.mrf.mxu0
      %v3719 = vadd.f32 0.0, %v3718
      %v3720 = vpop.f32.mrf.mxu0
      %3721 = vmatprep.mubr.f32.mxu0 0.0
      %3722 = vmatmul.mubr.f32.gmra.mxu0 %v3537
      %v3723 = vpop.f32.mrf.mxu0
      %v3724 = vadd.f32 0.0, %v3723
      %v3725 = vpop.f32.mrf.mxu0
      %3726 = vmatprep.mubr.f32.mxu0 0.0
      %3727 = vmatmul.mubr.f32.gmra.mxu0 %v3540
      %v3728 = vpop.f32.mrf.mxu0
      %v3729 = vadd.f32 0.0, %v3728
      %v3730 = vpop.f32.mrf.mxu0
      %3731 = vmatprep.mubr.f32.mxu0 0.0
      %3732 = vmatmul.mubr.f32.gmra.mxu0 %v3543
      %v3733 = vpop.f32.mrf.mxu0
      %v3734 = vadd.f32 0.0, %v3733
      %v3735 = vpop.f32.mrf.mxu0
      %3736 = vmatprep.mubr.f32.mxu0 0.0
      %3737 = vmatmul.mubr.f32.gmra.mxu0 %v3546
      %v3738 = vpop.f32.mrf.mxu0
      %v3739 = vadd.f32 0.0, %v3738
      %v3740 = vpop.f32.mrf.mxu0
      %3741 = vmatprep.mubr.f32.mxu0 0.0
      %3742 = vmatmul.mubr.f32.gmra.mxu0 %v3549
      %v3743 = vpop.f32.mrf.mxu0
      %v3744 = vadd.f32 0.0, %v3743
      %v3745 = vpop.f32.mrf.mxu0
      %3746 = vmatprep.mubr.f32.mxu0 0.0
      %3747 = vmatmul.mubr.f32.gmra.mxu0 %v3552
      %v3748 = vpop.f32.mrf.mxu0
      %v3749 = vadd.f32 0.0, %v3748
      %v3750 = vpop.f32.mrf.mxu0
      %3751 = vmatprep.mubr.f32.mxu0 0.0
      %3752 = vmatmul.mubr.f32.gmra.mxu0 %v3555
      %v3753 = vpop.f32.mrf.mxu0
      %v3754 = vadd.f32 0.0, %v3753
      %v3755 = vpop.f32.mrf.mxu0
      %3756 = vmatprep.mubr.f32.mxu0 0.0
      %3757 = vmatmul.mubr.f32.gmra.mxu0 %v3558
      %v3758 = vpop.f32.mrf.mxu0
      %v3759 = vadd.f32 0.0, %v3758
      %v3760 = vpop.f32.mrf.mxu0
      %3761 = vmatprep.mubr.f32.mxu0 0.0
      %3762 = vmatmul.mubr.f32.gmra.mxu0 %v3561
      %v3763 = vpop.f32.mrf.mxu0
      %v3764 = vadd.f32 0.0, %v3763
      %v3765 = vpop.f32.mrf.mxu0
      %3766 = vmatprep.mubr.f32.mxu0 0.0
      %3767 = vmatmul.mubr.f32.gmra.mxu0 %v3564
      %v3768 = vpop.f32.mrf.mxu0
      %v3769 = vadd.f32 0.0, %v3768
      %v3770 = vpop.f32.mrf.mxu0
      %3771 = vmatprep.mubr.f32.mxu0 0.0
      %3772 = vmatmul.mubr.f32.gmra.mxu0 %v3567
      %v3773 = vpop.f32.mrf.mxu0
      %v3774 = vadd.f32 0.0, %v3773
      %v3775 = vpop.f32.mrf.mxu0
      %3776 = vmatprep.mubr.f32.mxu0 0.0
      %3777 = vmatmul.mubr.f32.gmra.mxu0 %v3570
      %v3778 = vpop.f32.mrf.mxu0
      %v3779 = vadd.f32 0.0, %v3778
      %v3780 = vpop.f32.mrf.mxu0
      %3781 = vmatprep.mubr.f32.mxu0 0.0
      %3782 = vmatmul.mubr.f32.gmra.mxu0 %v3573
      %v3783 = vpop.f32.mrf.mxu0
      %v3784 = vadd.f32 0.0, %v3783
      %v3785 = vpop.f32.mrf.mxu0
      %3786 = vmatprep.mubr.f32.mxu0 0.0
      %3787 = vmatmul.mubr.f32.gmra.mxu0 %v3576
      %v3788 = vpop.f32.mrf.mxu0
      %v3789 = vadd.f32 0.0, %v3788
      %v3790 = vpop.f32.mrf.mxu0
      %3791 = vmatprep.mubr.f32.mxu0 0.0
      %3792 = vmatmul.mubr.f32.gmra.mxu0 %v3579
      %v3793 = vpop.f32.mrf.mxu0
      %v3794 = vadd.f32 0.0, %v3793
      %v3795 = vpop.f32.mrf.mxu0
      %3796 = vmatprep.mubr.f32.mxu0 0.0
      %3797 = vmatmul.mubr.f32.gmra.mxu0 %v3582
      %v3798 = vpop.f32.mrf.mxu0
      %v3799 = vadd.f32 0.0, %v3798
      %v3800 = vpop.f32.mrf.mxu0
      %3801 = vmatprep.mubr.f32.mxu0 0.0
      %3802 = vmatmul.mubr.f32.gmra.mxu0 %v3585
      %v3803 = vpop.f32.mrf.mxu0
      %v3804 = vadd.f32 0.0, %v3803
      %v3805 = vpop.f32.mrf.mxu0
      %3806 = vmatprep.mubr.f32.mxu0 0.0
      %3807 = vmatmul.mubr.f32.gmra.mxu0 %v3588
      %v3808 = vpop.f32.mrf.mxu0
      %v3809 = vadd.f32 0.0, %v3808
      %v3810 = vpop.f32.mrf.mxu0
      %3811 = vmatprep.mubr.f32.mxu0 0.0
      %3812 = vmatmul.mubr.f32.gmra.mxu0 %v3591
      %v3813 = vpop.f32.mrf.mxu0
      %v3814 = vadd.f32 0.0, %v3813
      %v3815 = vpop.f32.mrf.mxu0
      %3816 = vmatprep.mubr.f32.mxu0 0.0
      %3817 = vmatmul.mubr.f32.gmra.mxu0 %v3594
      %v3818 = vpop.f32.mrf.mxu0
      %v3819 = vadd.f32 0.0, %v3818
      %v3820 = vpop.f32.mrf.mxu0
      %3821 = vmatprep.mubr.f32.mxu0 0.0
      %3822 = vmatmul.mubr.f32.gmra.mxu0 %v3597
      %v3823 = vpop.f32.mrf.mxu0
      %v3824 = vadd.f32 0.0, %v3823
      %v3825 = vpop.f32.mrf.mxu0
      %3826 = vdwg.mxu0
      %v3827 = vld [vmem:[%s5] sm:$0x1]
      %v3829 = vlaneseq
      %v3830 = vshrl.u32 %v3829, 7
      %v3831 = vsub.s32 0, %v3830
      %v3832 = vrot.slane %v3827, %v3831
      %v3834 = vmul.f32 %v3669, %v3832
      %v3835 = vmul.f32 %v3674, %v3832
      %v3836 = vmul.f32 %v3679, %v3832
      %v3837 = vmul.f32 %v3684, %v3832
      %v3838 = vmul.f32 %v3689, %v3832
      %v3839 = vmul.f32 %v3694, %v3832
      %v3840 = vmul.f32 %v3699, %v3832
      %v3841 = vmul.f32 %v3704, %v3832
      %v3842 = vmul.f32 %v3709, %v3832
      %v3843 = vmul.f32 %v3714, %v3832
      %v3844 = vmul.f32 %v3719, %v3832
      %v3845 = vmul.f32 %v3724, %v3832
      %v3846 = vmul.f32 %v3729, %v3832
      %v3847 = vmul.f32 %v3734, %v3832
      %v3848 = vmul.f32 %v3739, %v3832
      %v3849 = vmul.f32 %v3744, %v3832
      %v3850 = vmul.f32 %v3749, %v3832
      %v3851 = vmul.f32 %v3754, %v3832
      %v3852 = vmul.f32 %v3759, %v3832
      %v3853 = vmul.f32 %v3764, %v3832
      %v3854 = vmul.f32 %v3769, %v3832
      %v3855 = vmul.f32 %v3774, %v3832
      %v3856 = vmul.f32 %v3779, %v3832
      %v3857 = vmul.f32 %v3784, %v3832
      %v3858 = vmul.f32 %v3789, %v3832
      %v3859 = vmul.f32 %v3794, %v3832
      %v3860 = vmul.f32 %v3799, %v3832
      %v3861 = vmul.f32 %v3804, %v3832
      %v3862 = vmul.f32 %v3809, %v3832
      %v3863 = vmul.f32 %v3814, %v3832
      %v3864 = vmul.f32 %v3819, %v3832
      %v3865 = vmul.f32 %v3824, %v3832
      %v3866 = vld [vmem:[%s6] sm:$0x1]
      %v3868 = vlaneseq
      %v3869 = vshrl.u32 %v3868, 7
      %v3870 = vsub.s32 0, %v3869
      %v3871 = vrot.slane %v3866, %v3870
      %v3873 = vadd.f32 %v3834, %v3871
      %v3874 = vadd.f32 %v3835, %v3871
      %v3875 = vadd.f32 %v3836, %v3871
      %v3876 = vadd.f32 %v3837, %v3871
      %v3877 = vadd.f32 %v3838, %v3871
      %v3878 = vadd.f32 %v3839, %v3871
      %v3879 = vadd.f32 %v3840, %v3871
      %v3880 = vadd.f32 %v3841, %v3871
      %v3881 = vadd.f32 %v3842, %v3871
      %v3882 = vadd.f32 %v3843, %v3871
      %v3883 = vadd.f32 %v3844, %v3871
      %v3884 = vadd.f32 %v3845, %v3871
      %v3885 = vadd.f32 %v3846, %v3871
      %v3886 = vadd.f32 %v3847, %v3871
      %v3887 = vadd.f32 %v3848, %v3871
      %v3888 = vadd.f32 %v3849, %v3871
      %v3889 = vadd.f32 %v3850, %v3871
      %v3890 = vadd.f32 %v3851, %v3871
      %v3891 = vadd.f32 %v3852, %v3871
      %v3892 = vadd.f32 %v3853, %v3871
      %v3893 = vadd.f32 %v3854, %v3871
      %v3894 = vadd.f32 %v3855, %v3871
      %v3895 = vadd.f32 %v3856, %v3871
      %v3896 = vadd.f32 %v3857, %v3871
      %v3897 = vadd.f32 %v3858, %v3871
      %v3898 = vadd.f32 %v3859, %v3871
      %v3899 = vadd.f32 %v3860, %v3871
      %v3900 = vadd.f32 %v3861, %v3871
      %v3901 = vadd.f32 %v3862, %v3871
      %v3902 = vadd.f32 %v3863, %v3871
      %v3903 = vadd.f32 %v3864, %v3871
      %v3904 = vadd.f32 %v3865, %v3871
      %v3905 = vadd.f32 %v3873, %v279
      %v3906 = vadd.f32 %v3874, %v280
      %v3907 = vadd.f32 %v3875, %v281
      %v3908 = vadd.f32 %v3876, %v282
      %v3909 = vadd.f32 %v3877, %v283
      %v3910 = vadd.f32 %v3878, %v284
      %v3911 = vadd.f32 %v3879, %v285
      %v3912 = vadd.f32 %v3880, %v286
      %v3913 = vadd.f32 %v3881, %v287
      %v3914 = vadd.f32 %v3882, %v288
      %v3915 = vadd.f32 %v3883, %v289
      %v3916 = vadd.f32 %v3884, %v290
      %v3917 = vadd.f32 %v3885, %v291
      %v3918 = vadd.f32 %v3886, %v292
      %v3919 = vadd.f32 %v3887, %v293
      %v3920 = vadd.f32 %v3888, %v294
      %v3921 = vadd.f32 %v3889, %v295
      %v3922 = vadd.f32 %v3890, %v296
      %v3923 = vadd.f32 %v3891, %v297
      %v3924 = vadd.f32 %v3892, %v298
      %v3925 = vadd.f32 %v3893, %v299
      %v3926 = vadd.f32 %v3894, %v300
      %v3927 = vadd.f32 %v3895, %v301
      %v3928 = vadd.f32 %v3896, %v302
      %v3929 = vadd.f32 %v3897, %v303
      %v3930 = vadd.f32 %v3898, %v304
      %v3931 = vadd.f32 %v3899, %v305
      %v3932 = vadd.f32 %v3900, %v306
      %v3933 = vadd.f32 %v3901, %v307
      %v3934 = vadd.f32 %v3902, %v308
      %v3935 = vadd.f32 %v3903, %v309
      %v3936 = vadd.f32 %v3904, %v310
      %v3937 = vmax.f32 %v3905, 0.0
      %v3938 = vmax.f32 %v3906, 0.0
      %v3939 = vmax.f32 %v3907, 0.0
      %v3940 = vmax.f32 %v3908, 0.0
      %v3941 = vmax.f32 %v3909, 0.0
      %v3942 = vmax.f32 %v3910, 0.0
      %v3943 = vmax.f32 %v3911, 0.0
      %v3944 = vmax.f32 %v3912, 0.0
      %v3945 = vmax.f32 %v3913, 0.0
      %v3946 = vmax.f32 %v3914, 0.0
      %v3947 = vmax.f32 %v3915, 0.0
      %v3948 = vmax.f32 %v3916, 0.0
      %v3949 = vmax.f32 %v3917, 0.0
      %v3950 = vmax.f32 %v3918, 0.0
      %v3951 = vmax.f32 %v3919, 0.0
      %v3952 = vmax.f32 %v3920, 0.0
      %v3953 = vmax.f32 %v3921, 0.0
      %v3954 = vmax.f32 %v3922, 0.0
      %v3955 = vmax.f32 %v3923, 0.0
      %v3956 = vmax.f32 %v3924, 0.0
      %v3957 = vmax.f32 %v3925, 0.0
      %v3958 = vmax.f32 %v3926, 0.0
      %v3959 = vmax.f32 %v3927, 0.0
      %v3960 = vmax.f32 %v3928, 0.0
      %v3961 = vmax.f32 %v3929, 0.0
      %v3962 = vmax.f32 %v3930, 0.0
      %v3963 = vmax.f32 %v3931, 0.0
      %v3964 = vmax.f32 %v3932, 0.0
      %v3965 = vmax.f32 %v3933, 0.0
      %v3966 = vmax.f32 %v3934, 0.0
      %v3967 = vmax.f32 %v3935, 0.0
      %v3968 = vmax.f32 %v3936, 0.0
      %3969 = vst.msk [vmem:[%s278] sm:$0xff] %vm1452, %v3937
      %3970 = vst.msk [vmem:[%s278 + $0x8] sm:$0xff] %vm1452, %v3938
      %3971 = vst.msk [vmem:[%s278 + $0x10] sm:$0xff] %vm1452, %v3939
      %3972 = vst.msk [vmem:[%s278 + $0x18] sm:$0xff] %vm1452, %v3940
      %3973 = vst.msk [vmem:[%s278 + $0x20] sm:$0xff] %vm1452, %v3941
      %3974 = vst.msk [vmem:[%s278 + $0x28] sm:$0xff] %vm1452, %v3942
      %3975 = vst.msk [vmem:[%s278 + $0x30] sm:$0xff] %vm1452, %v3943
      %3976 = vst.msk [vmem:[%s278 + $0x38] sm:$0xff] %vm1452, %v3944
      %3977 = vst.msk [vmem:[%s278 + $0x40] sm:$0xff] %vm1452, %v3945
      %3978 = vst.msk [vmem:[%s278 + $0x48] sm:$0xff] %vm1452, %v3946
      %3979 = vst.msk [vmem:[%s278 + $0x50] sm:$0xff] %vm1452, %v3947
      %3980 = vst.msk [vmem:[%s278 + $0x58] sm:$0xff] %vm1452, %v3948
      %3981 = vst.msk [vmem:[%s278 + $0x60] sm:$0xff] %vm1452, %v3949
      %3982 = vst.msk [vmem:[%s278 + $0x68] sm:$0xff] %vm1452, %v3950
      %3983 = vst.msk [vmem:[%s278 + $0x70] sm:$0xff] %vm1452, %v3951
      %3984 = vst.msk [vmem:[%s278 + $0x78] sm:$0xff] %vm1452, %v3952
      %3985 = vst.msk [vmem:[%s278 + $0x80] sm:$0xff] %vm1452, %v3953
      %3986 = vst.msk [vmem:[%s278 + $0x88] sm:$0xff] %vm1452, %v3954
      %3987 = vst.msk [vmem:[%s278 + $0x90] sm:$0xff] %vm1452, %v3955
      %3988 = vst.msk [vmem:[%s278 + $0x98] sm:$0xff] %vm1452, %v3956
      %3989 = vst.msk [vmem:[%s278 + $0xa0] sm:$0xff] %vm1452, %v3957
      %3990 = vst.msk [vmem:[%s278 + $0xa8] sm:$0xff] %vm1452, %v3958
      %3991 = vst.msk [vmem:[%s278 + $0xb0] sm:$0xff] %vm1452, %v3959
      %3992 = vst.msk [vmem:[%s278 + $0xb8] sm:$0xff] %vm1452, %v3960
      %3993 = vst.msk [vmem:[%s278 + $0xc0] sm:$0xff] %vm1452, %v3961
      %3994 = vst.msk [vmem:[%s278 + $0xc8] sm:$0xff] %vm1452, %v3962
      %3995 = vst.msk [vmem:[%s278 + $0xd0] sm:$0xff] %vm1452, %v3963
      %3996 = vst.msk [vmem:[%s278 + $0xd8] sm:$0xff] %vm1452, %v3964
      %3997 = vst.msk [vmem:[%s278 + $0xe0] sm:$0xff] %vm1452, %v3965
      %3998 = vst.msk [vmem:[%s278 + $0xe8] sm:$0xff] %vm1452, %v3966
      %3999 = vst.msk [vmem:[%s278 + $0xf0] sm:$0xff] %vm1452, %v3967
      %4000 = vst.msk [vmem:[%s278 + $0xf8] sm:$0xff] %vm1452, %v3968
      %p4001 = scmp.lt.s32.totalorder %s18, 1
      %s4002 = scalar_select %p4001, %s18, 1
      %s4003 = smul.addr %s4002, 32
      %s4004 = smul.addr %s4003, 8
      %s4005 = scalar_lea.vmem %s7, %s4004
      // Predicated region
      $region49: #{tpu_custom_call.1} parent=47 // pred_check
        %p4006 = pneg %p188
      $region50: #{tpu_custom_call.1} parent=47 // pred_check_branch
        %4008 = sbr.rel (%p4006) target = $region52
      $region51: #{tpu_custom_call.1} parent=47 // pred_region
        _
      $region52: #{tpu_custom_call.1} parent=47 // pred_fallthru
        _
    $region48: #{tpu_custom_call.1} parent=5 // pred_fallthru
      _
    %p4009 = scmp.le.s32.totalorder 2, %s13
    // Predicated region
    $region53: #{tpu_custom_call.1} parent=5 // pred_check
      %p4010 = pneg %p4009
    $region54: #{tpu_custom_call.1} parent=5 // pred_check_branch
      %4012 = sbr.rel (%p4010) target = $region56
    $region55: #{tpu_custom_call.1} parent=5 // pred_region
      %s4013 = ssub.s32 %s13, 2
      // Predicated region
      $region57: #{tpu_custom_call.1} parent=55 // pred_check
        %p4014 = pneg %p194
      $region58: #{tpu_custom_call.1} parent=55 // pred_check_branch
        %4016 = sbr.rel (%p4014) target = $region60
      $region59: #{tpu_custom_call.1} parent=55 // pred_region
        %p4017 = scmp.lt.s32.totalorder %s19, 1
        %s4018 = scalar_select %p4017, %s19, 1
        %s4019 = smul.addr %s4018, 32
        %s4020 = smul.addr %s4019, 8
        %s4021 = scalar_lea.vmem %s7, %s4020
      $region60: #{tpu_custom_call.1} parent=55 // pred_fallthru
        _
    $region56: #{tpu_custom_call.1} parent=5 // pred_fallthru
      _
  $region6: #{tpu_custom_call.1} parent=0 // loop_footer
    %s17 = sadd.s32 1, %s13
  $region7: #{tpu_custom_call.1} parent=0 // loop_footer_branch
    %12 = sbr.rel target = $region3
  $region8: #{tpu_custom_call.1} parent=0 // loop_exit
    _

</llo_original>
